<compile_context>
chip_gen: v5e
topology: v5e:2x2
jax: 0.10.0
libtpu: 0.0.40
codegen_flags: <defaults>
</compile_context>

<pallas_src>
import collections
import functools
import math

import jax
import jax.numpy as jnp
import numpy as np
from jax import lax
from jax.experimental import pallas as pl
from jax.experimental.pallas import tpu as pltpu


LayerPlan = collections.namedtuple("LayerPlan", ["Hi", "Wi", "Cin", "Cout", "Ho", "Wo"])


def _round_up(x, m):
    return ((x + m - 1) // m) * m


def _conv_plan(observation_shape, channels=(32, 32, 128)):
    H, W, C = observation_shape
    plan = []
    h, w, cin = H, W, C
    for cout in channels:
        ho, wo = (h + 1) // 2, (w + 1) // 2   # k=3, stride=2, pad=1
        plan.append(LayerPlan(Hi=h, Wi=w, Cin=cin, Cout=cout, Ho=ho, Wo=wo))
        h, w, cin = ho, wo, cout
    return tuple(plan)


def init_state_embedding_params(key, observation_shape):
    """Orthogonal(gain=sqrt(2)) weights / zero biases, PyTorch (Cout, Cin, 3, 3) layout."""
    plan = _conv_plan(observation_shape)
    init_fn = jax.nn.initializers.orthogonal(math.sqrt(2.0))
    raw = []
    for lp, k in zip(plan, jax.random.split(key, len(plan))):
        w_pt = init_fn(k, (lp.Cout, lp.Cin * 9), jnp.float32).reshape(lp.Cout, lp.Cin, 3, 3)
        b = jnp.zeros((lp.Cout,), jnp.float32)
        raw.append((w_pt, b))
    return raw


def prepare_kernel_params(raw_params, observation_shape):
    """Fold the stride-2/pad-1 column taps, PyTorch's x.transpose(1, 3), the /255 input
    normalisation (layer 0) and the final flatten permutation (layer 2) into
    pre-expanded GEMM weights:
        w0: (2*P0, Wo0*C0)          P0 = 2*Wi0*Cin0 packed-input-row width
        w1: (3*R1, Wo1*C1)          R1 = Wi1*Cin1   (three stacked row taps)
        w2: (Hi2*Wi2*Cin2, feat)    dense map, columns in PyTorch (co, wo, ho) order
    Biases are pre-tiled to match each output layout."""
    plan = _conv_plan(observation_shape)
    lp0, lp1, lp2 = plan
    assert lp0.Hi % 2 == 0, "layer-0 row packing assumes an even input height"

    def swapped(w_pt):
        # ws[kh, kw, ci, co] = w_pt[co, ci, kw, kh]   (folds torch's x.transpose(1, 3))
        return np.transpose(np.asarray(w_pt, np.float32), (3, 2, 1, 0))

    def row_tap_banded(ws, lp):
        # M[kh]: (Wi*Cin, Wo*Cout) with column taps + stride-2 selection folded in.
        M = np.zeros((3, lp.Wi * lp.Cin, lp.Wo * lp.Cout), np.float32)
        for kh in range(3):
            for wo in range(lp.Wo):
                for kw in range(3):
                    wi = 2 * wo + kw - 1
                    if 0 <= wi < lp.Wi:
                        M[kh, wi * lp.Cin:(wi + 1) * lp.Cin,
                          wo * lp.Cout:(wo + 1) * lp.Cout] = ws[kh, kw]
        return M

    (w0_pt, b0_), (w1_pt, b1_), (w2_pt, b2_) = raw_params

    # Layer 0 (/255 folded): packed two-input-rows-per-lane-row layout.
    r0_in = lp0.Wi * lp0.Cin
    M0 = row_tap_banded(swapped(w0_pt) / 255.0, lp0)
    w0 = np.zeros((4 * r0_in, lp0.Wo * lp0.Cout), np.float32)
    # rows [0 : r0_in]        input row 2ho-2 -> never a tap -> zero
    w0[1 * r0_in:2 * r0_in] = M0[0]     # input row 2ho-1  (tap kh=0)
    w0[2 * r0_in:3 * r0_in] = M0[1]     # input row 2ho    (tap kh=1)
    w0[3 * r0_in:4 * r0_in] = M0[2]     # input row 2ho+1  (tap kh=2)
    b0e = np.tile(np.asarray(b0_, np.float32), lp0.Wo)[None, :]

    # Layer 1: the three row taps stacked -> one GEMM over a contiguous 3-row slice.
    M1 = row_tap_banded(swapped(w1_pt), lp1)
    w1 = np.concatenate([M1[0], M1[1], M1[2]], axis=0)
    b1e = np.tile(np.asarray(b1_, np.float32), lp1.Wo)[None, :]

    # Layer 2: the whole conv as a single dense matrix whose output columns are already
    # in PyTorch's flatten order (co, wo, ho) -> no post-transpose needed.
    ws2 = swapped(w2_pt)
    K2 = lp2.Hi * lp2.Wi * lp2.Cin
    F2 = lp2.Ho * lp2.Wo * lp2.Cout
    w2 = np.zeros((K2, F2), np.float32)
    for ho in range(lp2.Ho):
        for wo in range(lp2.Wo):
            for kh in range(3):
                hi = 2 * ho + kh - 1
                if not 0 <= hi < lp2.Hi:
                    continue
                for kw in range(3):
                    wi = 2 * wo + kw - 1
                    if not 0 <= wi < lp2.Wi:
                        continue
                    krow = hi * lp2.Wi * lp2.Cin + wi * lp2.Cin
                    col0 = wo * lp2.Ho + ho
                    w2[krow:krow + lp2.Cin, col0::lp2.Wo * lp2.Ho] = ws2[kh, kw]
    b2e = np.repeat(np.asarray(b2_, np.float32), lp2.Wo * lp2.Ho)[None, :]

    kparams = tuple(jnp.asarray(a) for a in (w0, b0e, w1, b1e, w2, b2e))
    return plan, kparams


def _fused_kernel(x_ref, w0_ref, b0_ref, w1_ref, b1_ref, w2_ref, b2_ref,
                  o_ref, act0_ref, act1_ref, *, NB, plan):
    """x_ref : (NB, H*W*C) int8 view of uint8 bytes
       w*/b* : pre-expanded GEMM weights / tiled biases (constant across the grid)
       o_ref : (NB, feat) f32, already in PyTorch flatten order
       act*  : VMEM scratch for inter-layer activations (flat, lane-dense)"""
    lp0, lp1, lp2 = plan
    r0_in = lp0.Wi * lp0.Cin            # 64   original input row width
    p0 = 2 * r0_in                      # 128  packed (2-row) input width
    r0 = lp0.Wo * lp0.Cout              # 256  layer-0 output row width
    r1_in = r0
    r1 = lp1.Wo * lp1.Cout              # 128  layer-1 output row width
    feat = lp2.Ho * lp2.Wo * lp2.Cout   # 512

    def elu(v):                         # ELU(alpha=1)
        return jnp.where(v > 0.0, v, jnp.exp(jnp.minimum(v, 0.0)) - 1.0)

    def load_rows(lo, hi):
        # int8 view of uint8 bytes -> f32 in [0, 255]; the /255 is folded into w0.
        v = x_ref[:, lo:hi].astype(jnp.float32)
        return jnp.where(v < 0.0, v + 256.0, v)

    # ---- layer 0: Conv3x3 s2 p1 + ELU, one GEMM per output row ---------------------
    b0b = jnp.broadcast_to(b0_ref[...], (NB, r0))
    for ho in range(lp0.Ho):
        if ho == 0:   # top zero-pad row: only taps kh=1,2 live in packed row 0
            acc = jnp.dot(load_rows(0, p0), w0_ref[p0:2 * p0, :],
                          preferred_element_type=jnp.float32)
        else:         # packed rows ho-1, ho -> taps kh=0,1,2
            acc = jnp.dot(load_rows((ho - 1) * p0, (ho + 1) * p0), w0_ref[...],
                          preferred_element_type=jnp.float32)
        act0_ref[:, ho * r0:(ho + 1) * r0] = elu(acc + b0b)

    # ---- layer 1: one GEMM per output row over a contiguous 3-row slice -------------
    b1b = jnp.broadcast_to(b1_ref[...], (NB, r1))
    for ho in range(lp1.Ho):
        if ho == 0:
            acc = jnp.dot(act0_ref[:, 0:2 * r1_in], w1_ref[r1_in:3 * r1_in, :],
                          preferred_element_type=jnp.float32)
        else:
            acc = jnp.dot(act0_ref[:, (2 * ho - 1) * r1_in:(2 * ho + 2) * r1_in],
                          w1_ref[...], preferred_element_type=jnp.float32)
        act1_ref[:, ho * r1:(ho + 1) * r1] = elu(acc + b1b)

    # ---- layer 2: whole conv as ONE dense GEMM; columns pre-permuted to torch order --
    b2b = jnp.broadcast_to(b2_ref[...], (NB, feat))
    o_ref[...] = elu(jnp.dot(act1_ref[...], w2_ref[...],
                             preferred_element_type=jnp.float32) + b2b)


def _pick_block_n(n, cap=256):
    """NB must be a multiple of 32 (8-bit sublane tile); cap defaults to 256 images/step
    (use ~128 on v5e if desired).  N is padded up to a multiple of NB by the wrapper."""
    cap = max(32, _round_up(cap, 32))
    return min(cap, _round_up(max(n, 1), 32))


def state_embedding_forward(inputs, plan, kparams, block_n=256):
    """inputs: (T, B, H, W, C) uint8 -> (T, B, feat) f32, PyTorch-flatten order."""
    T, B = inputs.shape[:2]
    H, W, C = inputs.shape[2:]
    N = T * B
    lp2 = plan[-1]
    feat = lp2.Ho * lp2.Wo * lp2.Cout
    w0, b0, w1, b1, w2, b2 = kparams

    x = inputs.reshape(N, H * W * C)                      # uint8: 1 B/elem into the kernel
    NB = _pick_block_n(N, block_n)
    Npad = _round_up(N, NB)
    if Npad != N:
        x = jnp.pad(x, ((0, Npad - N), (0, 0)))
    x = lax.bitcast_convert_type(x, jnp.int8)             # free reinterpret; fixed in-kernel

    kern = functools.partial(_fused_kernel, NB=NB, plan=plan)
    out = pl.pallas_call(
        kern,
        out_shape=jax.ShapeDtypeStruct((Npad, feat), jnp.float32),
        grid=(Npad // NB,),
        in_specs=[
            pl.BlockSpec((NB, H * W * C), lambda i: (i, 0)),
            pl.BlockSpec(w0.shape, lambda i: (0, 0)),
            pl.BlockSpec(b0.shape, lambda i: (0, 0)),
            pl.BlockSpec(w1.shape, lambda i: (0, 0)),
            pl.BlockSpec(b1.shape, lambda i: (0, 0)),
            pl.BlockSpec(w2.shape, lambda i: (0, 0)),
            pl.BlockSpec(b2.shape, lambda i: (0, 0)),
        ],
        out_specs=pl.BlockSpec((NB, feat), lambda i: (i, 0)),
        scratch_shapes=[
            pltpu.VMEM((NB, plan[0].Ho * plan[0].Wo * plan[0].Cout), jnp.float32),
            pltpu.VMEM((NB, plan[1].Ho * plan[1].Wo * plan[1].Cout), jnp.float32),
        ],
        compiler_params=pltpu.CompilerParams(dimension_semantics=("parallel",)),
    )(x, w0, b0, w1, b1, w2, b2)

    return out[:N].reshape(T, B, feat)


def _reference_forward(inputs, raw_params):
    """Pure-JAX reference (lax.conv) with the original PyTorch module's semantics."""
    T, B = inputs.shape[:2]
    x = inputs.reshape((T * B,) + inputs.shape[2:]).astype(jnp.float32) / 255.0
    x = jnp.transpose(x, (0, 2, 1, 3))              # torch x.transpose(1, 3), channels-last
    for w_pt, b in raw_params:
        w_hwio = jnp.transpose(w_pt, (2, 3, 1, 0))
        x = lax.conv_general_dilated(
            x, w_hwio, window_strides=(2, 2), padding=((1, 1), (1, 1)),
            dimension_numbers=("NHWC", "HWIO", "NHWC"),
            precision=lax.Precision.HIGHEST)
        x = x + b
        x = jnp.where(x > 0.0, x, jnp.exp(jnp.minimum(x, 0.0)) - 1.0)
    return jnp.transpose(x, (0, 3, 1, 2)).reshape(T, B, -1)


if __name__ == "__main__":
    env = "MiniGrid-MultiRoom-N4-S5-v0"
    assert "MiniGrid" in env
    T, B = 2, 2
    observation_shape = (16, 16, 4)     # (H, W, C); in_channels = observation_shape[2]

    key = jax.random.PRNGKey(0)
    k_obs, k_par = jax.random.split(key)
    inputs = jax.random.randint(
        k_obs, (T, B) + observation_shape, 0, 256, dtype=jnp.int32).astype(jnp.uint8)

    raw_params = init_state_embedding_params(k_par, observation_shape)
    plan, kparams = prepare_kernel_params(raw_params, observation_shape)

    fwd = jax.jit(functools.partial(state_embedding_forward, plan=plan, kparams=kparams))
    out = jax.block_until_ready(fwd(inputs))
    assert out.shape == (T, B, 128 * 2 * 2), out.shape

    ref = jax.block_until_ready(_reference_forward(inputs, raw_params))
    # Margin covers TPU DEFAULT (bf16-input) f32 matmul precision; with full-f32 MXU
    # passes the observed difference is ~1e-5.  Structural errors would be O(1).
    np.testing.assert_allclose(np.asarray(out), np.asarray(ref), rtol=2e-2, atol=2e-2)
    print("KERNEL_OK")
</pallas_src>

<mosaic_0001>
module attributes {stable_mosaic.version = 11 : i64} {
  func.func @_fused_kernel(%arg0: i32, %arg1: memref<32x1024xi8, #tpu.memory_space<vmem>>, %arg2: memref<256x256xf32, #tpu.memory_space<vmem>>, %arg3: memref<1x256xf32, #tpu.memory_space<vmem>>, %arg4: memref<768x128xf32, #tpu.memory_space<vmem>>, %arg5: memref<1x128xf32, #tpu.memory_space<vmem>>, %arg6: memref<512x512xf32, #tpu.memory_space<vmem>>, %arg7: memref<1x512xf32, #tpu.memory_space<vmem>>, %arg8: memref<32x512xf32, #tpu.memory_space<vmem>>, %arg9: memref<32x2048xf32, #tpu.memory_space<vmem>>, %arg10: memref<32x512xf32, #tpu.memory_space<vmem>>) attributes {dimension_semantics = [#tpu.dimension_semantics<parallel>], iteration_bounds = array<i64: 1>, scalar_prefetch = 0 : i64, scratch_operands = 2 : i64, tpu.core_type = #tpu.core_type<tc>, window_params = [{transform_indices = @transform_0, window_bounds = array<i64: 32, 1024>}, {pipeline_mode = #tpu.pipeline_mode<synchronous>, transform_indices = @transform_1, window_bounds = array<i64: 256, 256>}, {pipeline_mode = #tpu.pipeline_mode<synchronous>, transform_indices = @transform_2, window_bounds = array<i64: 1, 256>}, {pipeline_mode = #tpu.pipeline_mode<synchronous>, transform_indices = @transform_3, window_bounds = array<i64: 768, 128>}, {pipeline_mode = #tpu.pipeline_mode<synchronous>, transform_indices = @transform_4, window_bounds = array<i64: 1, 128>}, {pipeline_mode = #tpu.pipeline_mode<synchronous>, transform_indices = @transform_5, window_bounds = array<i64: 512, 512>}, {pipeline_mode = #tpu.pipeline_mode<synchronous>, transform_indices = @transform_6, window_bounds = array<i64: 1, 512>}, {transform_indices = @transform_7, window_bounds = array<i64: 32, 512>}]} {
    %c0 = arith.constant 0 : index
    %c0_0 = arith.constant 0 : index
    %0 = vector.load %arg3[%c0, %c0_0] : memref<1x256xf32, #tpu.memory_space<vmem>>, vector<1x256xf32>
    %1 = vector.shape_cast %0 : vector<1x256xf32> to vector<1x256xf32>
    %2 = vector.broadcast %1 : vector<1x256xf32> to vector<32x256xf32>
    %c0_1 = arith.constant 0 : index
    %c0_2 = arith.constant 0 : index
    %3 = vector.load %arg1[%c0_1, %c0_2] : memref<32x1024xi8, #tpu.memory_space<vmem>>, vector<32x128xi8>
    %4 = arith.sitofp %3 : vector<32x128xi8> to vector<32x128xf32>
    %cst = arith.constant 0.000000e+00 : f32
    %5 = vector.broadcast %cst : f32 to vector<32x128xf32>
    %6 = arith.cmpf olt, %4, %5 : vector<32x128xf32>
    %cst_3 = arith.constant 2.560000e+02 : f32
    %7 = vector.broadcast %cst_3 : f32 to vector<32x128xf32>
    %8 = arith.addf %4, %7 : vector<32x128xf32>
    %9 = arith.select %6, %8, %4 : vector<32x128xi1>, vector<32x128xf32>
    %c128 = arith.constant 128 : index
    %c0_4 = arith.constant 0 : index
    %10 = vector.load %arg2[%c128, %c0_4] : memref<256x256xf32, #tpu.memory_space<vmem>>, vector<128x256xf32>
    %cst_5 = arith.constant dense<0.000000e+00> : vector<32x256xf32>
    %11 = tpu.matmul %9, %10, %cst_5 {dimension_numbers = #tpu.dot_dimension_numbers<[1], [0], [0], [1], [0, 0, 1, 1], [], []>} : vector<32x128xf32>, vector<128x256xf32>, vector<32x256xf32> -> vector<32x256xf32>
    %12 = arith.addf %11, %2 : vector<32x256xf32>
    %cst_6 = arith.constant 0.000000e+00 : f32
    %13 = vector.broadcast %cst_6 : f32 to vector<32x256xf32>
    %14 = arith.cmpf ogt, %12, %13 : vector<32x256xf32>
    %cst_7 = arith.constant 0.000000e+00 : f32
    %15 = vector.broadcast %cst_7 : f32 to vector<32x256xf32>
    %16 = arith.minimumf %12, %15 : vector<32x256xf32>
    %17 = math.exp %16 : vector<32x256xf32>
    %cst_8 = arith.constant 1.000000e+00 : f32
    %18 = vector.broadcast %cst_8 : f32 to vector<32x256xf32>
    %19 = arith.subf %17, %18 : vector<32x256xf32>
    %20 = arith.select %14, %12, %19 : vector<32x256xi1>, vector<32x256xf32>
    %c0_9 = arith.constant 0 : index
    %c0_10 = arith.constant 0 : index
    %21 = vector.load %arg9[%c0_9, %c0_10] : memref<32x2048xf32, #tpu.memory_space<vmem>>, vector<32x256xf32>
    tpu.vector_store %arg9[%c0_9, %c0_10], %20 {strides = array<i32>} : memref<32x2048xf32, #tpu.memory_space<vmem>>, vector<32x256xf32>,
    %c0_11 = arith.constant 0 : index
    %c0_12 = arith.constant 0 : index
    %22 = vector.load %arg1[%c0_11, %c0_12] : memref<32x1024xi8, #tpu.memory_space<vmem>>, vector<32x256xi8>
    %23 = arith.sitofp %22 : vector<32x256xi8> to vector<32x256xf32>
    %cst_13 = arith.constant 0.000000e+00 : f32
    %24 = vector.broadcast %cst_13 : f32 to vector<32x256xf32>
    %25 = arith.cmpf olt, %23, %24 : vector<32x256xf32>
    %cst_14 = arith.constant 2.560000e+02 : f32
    %26 = vector.broadcast %cst_14 : f32 to vector<32x256xf32>
    %27 = arith.addf %23, %26 : vector<32x256xf32>
    %28 = arith.select %25, %27, %23 : vector<32x256xi1>, vector<32x256xf32>
    %c0_15 = arith.constant 0 : index
    %c0_16 = arith.constant 0 : index
    %29 = vector.load %arg2[%c0_15, %c0_16] : memref<256x256xf32, #tpu.memory_space<vmem>>, vector<256x256xf32>
    %cst_17 = arith.constant dense<0.000000e+00> : vector<32x256xf32>
    %30 = tpu.matmul %28, %29, %cst_17 {dimension_numbers = #tpu.dot_dimension_numbers<[1], [0], [0], [1], [0, 0, 1, 1], [], []>} : vector<32x256xf32>, vector<256x256xf32>, vector<32x256xf32> -> vector<32x256xf32>
    %31 = arith.addf %30, %2 : vector<32x256xf32>
    %cst_18 = arith.constant 0.000000e+00 : f32
    %32 = vector.broadcast %cst_18 : f32 to vector<32x256xf32>
    %33 = arith.cmpf ogt, %31, %32 : vector<32x256xf32>
    %cst_19 = arith.constant 0.000000e+00 : f32
    %34 = vector.broadcast %cst_19 : f32 to vector<32x256xf32>
    %35 = arith.minimumf %31, %34 : vector<32x256xf32>
    %36 = math.exp %35 : vector<32x256xf32>
    %cst_20 = arith.constant 1.000000e+00 : f32
    %37 = vector.broadcast %cst_20 : f32 to vector<32x256xf32>
    %38 = arith.subf %36, %37 : vector<32x256xf32>
    %39 = arith.select %33, %31, %38 : vector<32x256xi1>, vector<32x256xf32>
    %c0_21 = arith.constant 0 : index
    %c256 = arith.constant 256 : index
    %40 = vector.load %arg9[%c0_21, %c256] : memref<32x2048xf32, #tpu.memory_space<vmem>>, vector<32x256xf32>
    tpu.vector_store %arg9[%c0_21, %c256], %39 {strides = array<i32>} : memref<32x2048xf32, #tpu.memory_space<vmem>>, vector<32x256xf32>,
    %c0_22 = arith.constant 0 : index
    %c128_23 = arith.constant 128 : index
    %41 = vector.load %arg1[%c0_22, %c128_23] : memref<32x1024xi8, #tpu.memory_space<vmem>>, vector<32x256xi8>
    %42 = arith.sitofp %41 : vector<32x256xi8> to vector<32x256xf32>
    %cst_24 = arith.constant 0.000000e+00 : f32
    %43 = vector.broadcast %cst_24 : f32 to vector<32x256xf32>
    %44 = arith.cmpf olt, %42, %43 : vector<32x256xf32>
    %cst_25 = arith.constant 2.560000e+02 : f32
    %45 = vector.broadcast %cst_25 : f32 to vector<32x256xf32>
    %46 = arith.addf %42, %45 : vector<32x256xf32>
    %47 = arith.select %44, %46, %42 : vector<32x256xi1>, vector<32x256xf32>
    %c0_26 = arith.constant 0 : index
    %c0_27 = arith.constant 0 : index
    %48 = vector.load %arg2[%c0_26, %c0_27] : memref<256x256xf32, #tpu.memory_space<vmem>>, vector<256x256xf32>
    %cst_28 = arith.constant dense<0.000000e+00> : vector<32x256xf32>
    %49 = tpu.matmul %47, %48, %cst_28 {dimension_numbers = #tpu.dot_dimension_numbers<[1], [0], [0], [1], [0, 0, 1, 1], [], []>} : vector<32x256xf32>, vector<256x256xf32>, vector<32x256xf32> -> vector<32x256xf32>
    %50 = arith.addf %49, %2 : vector<32x256xf32>
    %cst_29 = arith.constant 0.000000e+00 : f32
    %51 = vector.broadcast %cst_29 : f32 to vector<32x256xf32>
    %52 = arith.cmpf ogt, %50, %51 : vector<32x256xf32>
    %cst_30 = arith.constant 0.000000e+00 : f32
    %53 = vector.broadcast %cst_30 : f32 to vector<32x256xf32>
    %54 = arith.minimumf %50, %53 : vector<32x256xf32>
    %55 = math.exp %54 : vector<32x256xf32>
    %cst_31 = arith.constant 1.000000e+00 : f32
    %56 = vector.broadcast %cst_31 : f32 to vector<32x256xf32>
    %57 = arith.subf %55, %56 : vector<32x256xf32>
    %58 = arith.select %52, %50, %57 : vector<32x256xi1>, vector<32x256xf32>
    %c0_32 = arith.constant 0 : index
    %c512 = arith.constant 512 : index
    %59 = vector.load %arg9[%c0_32, %c512] : memref<32x2048xf32, #tpu.memory_space<vmem>>, vector<32x256xf32>
    tpu.vector_store %arg9[%c0_32, %c512], %58 {strides = array<i32>} : memref<32x2048xf32, #tpu.memory_space<vmem>>, vector<32x256xf32>,
    %c0_33 = arith.constant 0 : index
    %c256_34 = arith.constant 256 : index
    %60 = vector.load %arg1[%c0_33, %c256_34] : memref<32x1024xi8, #tpu.memory_space<vmem>>, vector<32x256xi8>
    %61 = arith.sitofp %60 : vector<32x256xi8> to vector<32x256xf32>
    %cst_35 = arith.constant 0.000000e+00 : f32
    %62 = vector.broadcast %cst_35 : f32 to vector<32x256xf32>
    %63 = arith.cmpf olt, %61, %62 : vector<32x256xf32>
    %cst_36 = arith.constant 2.560000e+02 : f32
    %64 = vector.broadcast %cst_36 : f32 to vector<32x256xf32>
    %65 = arith.addf %61, %64 : vector<32x256xf32>
    %66 = arith.select %63, %65, %61 : vector<32x256xi1>, vector<32x256xf32>
    %c0_37 = arith.constant 0 : index
    %c0_38 = arith.constant 0 : index
    %67 = vector.load %arg2[%c0_37, %c0_38] : memref<256x256xf32, #tpu.memory_space<vmem>>, vector<256x256xf32>
    %cst_39 = arith.constant dense<0.000000e+00> : vector<32x256xf32>
    %68 = tpu.matmul %66, %67, %cst_39 {dimension_numbers = #tpu.dot_dimension_numbers<[1], [0], [0], [1], [0, 0, 1, 1], [], []>} : vector<32x256xf32>, vector<256x256xf32>, vector<32x256xf32> -> vector<32x256xf32>
    %69 = arith.addf %68, %2 : vector<32x256xf32>
    %cst_40 = arith.constant 0.000000e+00 : f32
    %70 = vector.broadcast %cst_40 : f32 to vector<32x256xf32>
    %71 = arith.cmpf ogt, %69, %70 : vector<32x256xf32>
    %cst_41 = arith.constant 0.000000e+00 : f32
    %72 = vector.broadcast %cst_41 : f32 to vector<32x256xf32>
    %73 = arith.minimumf %69, %72 : vector<32x256xf32>
    %74 = math.exp %73 : vector<32x256xf32>
    %cst_42 = arith.constant 1.000000e+00 : f32
    %75 = vector.broadcast %cst_42 : f32 to vector<32x256xf32>
    %76 = arith.subf %74, %75 : vector<32x256xf32>
    %77 = arith.select %71, %69, %76 : vector<32x256xi1>, vector<32x256xf32>
    %c0_43 = arith.constant 0 : index
    %c768 = arith.constant 768 : index
    %78 = vector.load %arg9[%c0_43, %c768] : memref<32x2048xf32, #tpu.memory_space<vmem>>, vector<32x256xf32>
    tpu.vector_store %arg9[%c0_43, %c768], %77 {strides = array<i32>} : memref<32x2048xf32, #tpu.memory_space<vmem>>, vector<32x256xf32>,
    %c0_44 = arith.constant 0 : index
    %c384 = arith.constant 384 : index
    %79 = vector.load %arg1[%c0_44, %c384] : memref<32x1024xi8, #tpu.memory_space<vmem>>, vector<32x256xi8>
    %80 = arith.sitofp %79 : vector<32x256xi8> to vector<32x256xf32>
    %cst_45 = arith.constant 0.000000e+00 : f32
    %81 = vector.broadcast %cst_45 : f32 to vector<32x256xf32>
    %82 = arith.cmpf olt, %80, %81 : vector<32x256xf32>
    %cst_46 = arith.constant 2.560000e+02 : f32
    %83 = vector.broadcast %cst_46 : f32 to vector<32x256xf32>
    %84 = arith.addf %80, %83 : vector<32x256xf32>
    %85 = arith.select %82, %84, %80 : vector<32x256xi1>, vector<32x256xf32>
    %c0_47 = arith.constant 0 : index
    %c0_48 = arith.constant 0 : index
    %86 = vector.load %arg2[%c0_47, %c0_48] : memref<256x256xf32, #tpu.memory_space<vmem>>, vector<256x256xf32>
    %cst_49 = arith.constant dense<0.000000e+00> : vector<32x256xf32>
    %87 = tpu.matmul %85, %86, %cst_49 {dimension_numbers = #tpu.dot_dimension_numbers<[1], [0], [0], [1], [0, 0, 1, 1], [], []>} : vector<32x256xf32>, vector<256x256xf32>, vector<32x256xf32> -> vector<32x256xf32>
    %88 = arith.addf %87, %2 : vector<32x256xf32>
    %cst_50 = arith.constant 0.000000e+00 : f32
    %89 = vector.broadcast %cst_50 : f32 to vector<32x256xf32>
    %90 = arith.cmpf ogt, %88, %89 : vector<32x256xf32>
    %cst_51 = arith.constant 0.000000e+00 : f32
    %91 = vector.broadcast %cst_51 : f32 to vector<32x256xf32>
    %92 = arith.minimumf %88, %91 : vector<32x256xf32>
    %93 = math.exp %92 : vector<32x256xf32>
    %cst_52 = arith.constant 1.000000e+00 : f32
    %94 = vector.broadcast %cst_52 : f32 to vector<32x256xf32>
    %95 = arith.subf %93, %94 : vector<32x256xf32>
    %96 = arith.select %90, %88, %95 : vector<32x256xi1>, vector<32x256xf32>
    %c0_53 = arith.constant 0 : index
    %c1024 = arith.constant 1024 : index
    %97 = vector.load %arg9[%c0_53, %c1024] : memref<32x2048xf32, #tpu.memory_space<vmem>>, vector<32x256xf32>
    tpu.vector_store %arg9[%c0_53, %c1024], %96 {strides = array<i32>} : memref<32x2048xf32, #tpu.memory_space<vmem>>, vector<32x256xf32>,
    %c0_54 = arith.constant 0 : index
    %c512_55 = arith.constant 512 : index
    %98 = vector.load %arg1[%c0_54, %c512_55] : memref<32x1024xi8, #tpu.memory_space<vmem>>, vector<32x256xi8>
    %99 = arith.sitofp %98 : vector<32x256xi8> to vector<32x256xf32>
    %cst_56 = arith.constant 0.000000e+00 : f32
    %100 = vector.broadcast %cst_56 : f32 to vector<32x256xf32>
    %101 = arith.cmpf olt, %99, %100 : vector<32x256xf32>
    %cst_57 = arith.constant 2.560000e+02 : f32
    %102 = vector.broadcast %cst_57 : f32 to vector<32x256xf32>
    %103 = arith.addf %99, %102 : vector<32x256xf32>
    %104 = arith.select %101, %103, %99 : vector<32x256xi1>, vector<32x256xf32>
    %c0_58 = arith.constant 0 : index
    %c0_59 = arith.constant 0 : index
    %105 = vector.load %arg2[%c0_58, %c0_59] : memref<256x256xf32, #tpu.memory_space<vmem>>, vector<256x256xf32>
    %cst_60 = arith.constant dense<0.000000e+00> : vector<32x256xf32>
    %106 = tpu.matmul %104, %105, %cst_60 {dimension_numbers = #tpu.dot_dimension_numbers<[1], [0], [0], [1], [0, 0, 1, 1], [], []>} : vector<32x256xf32>, vector<256x256xf32>, vector<32x256xf32> -> vector<32x256xf32>
    %107 = arith.addf %106, %2 : vector<32x256xf32>
    %cst_61 = arith.constant 0.000000e+00 : f32
    %108 = vector.broadcast %cst_61 : f32 to vector<32x256xf32>
    %109 = arith.cmpf ogt, %107, %108 : vector<32x256xf32>
    %cst_62 = arith.constant 0.000000e+00 : f32
    %110 = vector.broadcast %cst_62 : f32 to vector<32x256xf32>
    %111 = arith.minimumf %107, %110 : vector<32x256xf32>
    %112 = math.exp %111 : vector<32x256xf32>
    %cst_63 = arith.constant 1.000000e+00 : f32
    %113 = vector.broadcast %cst_63 : f32 to vector<32x256xf32>
    %114 = arith.subf %112, %113 : vector<32x256xf32>
    %115 = arith.select %109, %107, %114 : vector<32x256xi1>, vector<32x256xf32>
    %c0_64 = arith.constant 0 : index
    %c1280 = arith.constant 1280 : index
    %116 = vector.load %arg9[%c0_64, %c1280] : memref<32x2048xf32, #tpu.memory_space<vmem>>, vector<32x256xf32>
    tpu.vector_store %arg9[%c0_64, %c1280], %115 {strides = array<i32>} : memref<32x2048xf32, #tpu.memory_space<vmem>>, vector<32x256xf32>,
    %c0_65 = arith.constant 0 : index
    %c640 = arith.constant 640 : index
    %117 = vector.load %arg1[%c0_65, %c640] : memref<32x1024xi8, #tpu.memory_space<vmem>>, vector<32x256xi8>
    %118 = arith.sitofp %117 : vector<32x256xi8> to vector<32x256xf32>
    %cst_66 = arith.constant 0.000000e+00 : f32
    %119 = vector.broadcast %cst_66 : f32 to vector<32x256xf32>
    %120 = arith.cmpf olt, %118, %119 : vector<32x256xf32>
    %cst_67 = arith.constant 2.560000e+02 : f32
    %121 = vector.broadcast %cst_67 : f32 to vector<32x256xf32>
    %122 = arith.addf %118, %121 : vector<32x256xf32>
    %123 = arith.select %120, %122, %118 : vector<32x256xi1>, vector<32x256xf32>
    %c0_68 = arith.constant 0 : index
    %c0_69 = arith.constant 0 : index
    %124 = vector.load %arg2[%c0_68, %c0_69] : memref<256x256xf32, #tpu.memory_space<vmem>>, vector<256x256xf32>
    %cst_70 = arith.constant dense<0.000000e+00> : vector<32x256xf32>
    %125 = tpu.matmul %123, %124, %cst_70 {dimension_numbers = #tpu.dot_dimension_numbers<[1], [0], [0], [1], [0, 0, 1, 1], [], []>} : vector<32x256xf32>, vector<256x256xf32>, vector<32x256xf32> -> vector<32x256xf32>
    %126 = arith.addf %125, %2 : vector<32x256xf32>
    %cst_71 = arith.constant 0.000000e+00 : f32
    %127 = vector.broadcast %cst_71 : f32 to vector<32x256xf32>
    %128 = arith.cmpf ogt, %126, %127 : vector<32x256xf32>
    %cst_72 = arith.constant 0.000000e+00 : f32
    %129 = vector.broadcast %cst_72 : f32 to vector<32x256xf32>
    %130 = arith.minimumf %126, %129 : vector<32x256xf32>
    %131 = math.exp %130 : vector<32x256xf32>
    %cst_73 = arith.constant 1.000000e+00 : f32
    %132 = vector.broadcast %cst_73 : f32 to vector<32x256xf32>
    %133 = arith.subf %131, %132 : vector<32x256xf32>
    %134 = arith.select %128, %126, %133 : vector<32x256xi1>, vector<32x256xf32>
    %c0_74 = arith.constant 0 : index
    %c1536 = arith.constant 1536 : index
    %135 = vector.load %arg9[%c0_74, %c1536] : memref<32x2048xf32, #tpu.memory_space<vmem>>, vector<32x256xf32>
    tpu.vector_store %arg9[%c0_74, %c1536], %134 {strides = array<i32>} : memref<32x2048xf32, #tpu.memory_space<vmem>>, vector<32x256xf32>,
    %c0_75 = arith.constant 0 : index
    %c768_76 = arith.constant 768 : index
    %136 = vector.load %arg1[%c0_75, %c768_76] : memref<32x1024xi8, #tpu.memory_space<vmem>>, vector<32x256xi8>
    %137 = arith.sitofp %136 : vector<32x256xi8> to vector<32x256xf32>
    %cst_77 = arith.constant 0.000000e+00 : f32
    %138 = vector.broadcast %cst_77 : f32 to vector<32x256xf32>
    %139 = arith.cmpf olt, %137, %138 : vector<32x256xf32>
    %cst_78 = arith.constant 2.560000e+02 : f32
    %140 = vector.broadcast %cst_78 : f32 to vector<32x256xf32>
    %141 = arith.addf %137, %140 : vector<32x256xf32>
    %142 = arith.select %139, %141, %137 : vector<32x256xi1>, vector<32x256xf32>
    %c0_79 = arith.constant 0 : index
    %c0_80 = arith.constant 0 : index
    %143 = vector.load %arg2[%c0_79, %c0_80] : memref<256x256xf32, #tpu.memory_space<vmem>>, vector<256x256xf32>
    %cst_81 = arith.constant dense<0.000000e+00> : vector<32x256xf32>
    %144 = tpu.matmul %142, %143, %cst_81 {dimension_numbers = #tpu.dot_dimension_numbers<[1], [0], [0], [1], [0, 0, 1, 1], [], []>} : vector<32x256xf32>, vector<256x256xf32>, vector<32x256xf32> -> vector<32x256xf32>
    %145 = arith.addf %144, %2 : vector<32x256xf32>
    %cst_82 = arith.constant 0.000000e+00 : f32
    %146 = vector.broadcast %cst_82 : f32 to vector<32x256xf32>
    %147 = arith.cmpf ogt, %145, %146 : vector<32x256xf32>
    %cst_83 = arith.constant 0.000000e+00 : f32
    %148 = vector.broadcast %cst_83 : f32 to vector<32x256xf32>
    %149 = arith.minimumf %145, %148 : vector<32x256xf32>
    %150 = math.exp %149 : vector<32x256xf32>
    %cst_84 = arith.constant 1.000000e+00 : f32
    %151 = vector.broadcast %cst_84 : f32 to vector<32x256xf32>
    %152 = arith.subf %150, %151 : vector<32x256xf32>
    %153 = arith.select %147, %145, %152 : vector<32x256xi1>, vector<32x256xf32>
    %c0_85 = arith.constant 0 : index
    %c1792 = arith.constant 1792 : index
    %154 = vector.load %arg9[%c0_85, %c1792] : memref<32x2048xf32, #tpu.memory_space<vmem>>, vector<32x256xf32>
    tpu.vector_store %arg9[%c0_85, %c1792], %153 {strides = array<i32>} : memref<32x2048xf32, #tpu.memory_space<vmem>>, vector<32x256xf32>,
    %c0_86 = arith.constant 0 : index
    %c0_87 = arith.constant 0 : index
    %155 = vector.load %arg5[%c0_86, %c0_87] : memref<1x128xf32, #tpu.memory_space<vmem>>, vector<1x128xf32>
    %156 = vector.shape_cast %155 : vector<1x128xf32> to vector<1x128xf32>
    %157 = vector.broadcast %156 : vector<1x128xf32> to vector<32x128xf32>
    %c0_88 = arith.constant 0 : index
    %c0_89 = arith.constant 0 : index
    %158 = vector.load %arg9[%c0_88, %c0_89] : memref<32x2048xf32, #tpu.memory_space<vmem>>, vector<32x512xf32>
    %c256_90 = arith.constant 256 : index
    %c0_91 = arith.constant 0 : index
    %159 = vector.load %arg4[%c256_90, %c0_91] : memref<768x128xf32, #tpu.memory_space<vmem>>, vector<512x128xf32>
    %cst_92 = arith.constant dense<0.000000e+00> : vector<32x128xf32>
    %160 = tpu.matmul %158, %159, %cst_92 {dimension_numbers = #tpu.dot_dimension_numbers<[1], [0], [0], [1], [0, 0, 1, 1], [], []>} : vector<32x512xf32>, vector<512x128xf32>, vector<32x128xf32> -> vector<32x128xf32>
    %161 = arith.addf %160, %157 : vector<32x128xf32>
    %cst_93 = arith.constant 0.000000e+00 : f32
    %162 = vector.broadcast %cst_93 : f32 to vector<32x128xf32>
    %163 = arith.cmpf ogt, %161, %162 : vector<32x128xf32>
    %cst_94 = arith.constant 0.000000e+00 : f32
    %164 = vector.broadcast %cst_94 : f32 to vector<32x128xf32>
    %165 = arith.minimumf %161, %164 : vector<32x128xf32>
    %166 = math.exp %165 : vector<32x128xf32>
    %cst_95 = arith.constant 1.000000e+00 : f32
    %167 = vector.broadcast %cst_95 : f32 to vector<32x128xf32>
    %168 = arith.subf %166, %167 : vector<32x128xf32>
    %169 = arith.select %163, %161, %168 : vector<32x128xi1>, vector<32x128xf32>
    %c0_96 = arith.constant 0 : index
    %c0_97 = arith.constant 0 : index
    %170 = vector.load %arg10[%c0_96, %c0_97] : memref<32x512xf32, #tpu.memory_space<vmem>>, vector<32x128xf32>
    tpu.vector_store %arg10[%c0_96, %c0_97], %169 {strides = array<i32>} : memref<32x512xf32, #tpu.memory_space<vmem>>, vector<32x128xf32>,
    %c0_98 = arith.constant 0 : index
    %c256_99 = arith.constant 256 : index
    %171 = vector.load %arg9[%c0_98, %c256_99] : memref<32x2048xf32, #tpu.memory_space<vmem>>, vector<32x768xf32>
    %c0_100 = arith.constant 0 : index
    %c0_101 = arith.constant 0 : index
    %172 = vector.load %arg4[%c0_100, %c0_101] : memref<768x128xf32, #tpu.memory_space<vmem>>, vector<768x128xf32>
    %cst_102 = arith.constant dense<0.000000e+00> : vector<32x128xf32>
    %173 = tpu.matmul %171, %172, %cst_102 {dimension_numbers = #tpu.dot_dimension_numbers<[1], [0], [0], [1], [0, 0, 1, 1], [], []>} : vector<32x768xf32>, vector<768x128xf32>, vector<32x128xf32> -> vector<32x128xf32>
    %174 = arith.addf %173, %157 : vector<32x128xf32>
    %cst_103 = arith.constant 0.000000e+00 : f32
    %175 = vector.broadcast %cst_103 : f32 to vector<32x128xf32>
    %176 = arith.cmpf ogt, %174, %175 : vector<32x128xf32>
    %cst_104 = arith.constant 0.000000e+00 : f32
    %177 = vector.broadcast %cst_104 : f32 to vector<32x128xf32>
    %178 = arith.minimumf %174, %177 : vector<32x128xf32>
    %179 = math.exp %178 : vector<32x128xf32>
    %cst_105 = arith.constant 1.000000e+00 : f32
    %180 = vector.broadcast %cst_105 : f32 to vector<32x128xf32>
    %181 = arith.subf %179, %180 : vector<32x128xf32>
    %182 = arith.select %176, %174, %181 : vector<32x128xi1>, vector<32x128xf32>
    %c0_106 = arith.constant 0 : index
    %c128_107 = arith.constant 128 : index
    %183 = vector.load %arg10[%c0_106, %c128_107] : memref<32x512xf32, #tpu.memory_space<vmem>>, vector<32x128xf32>
    tpu.vector_store %arg10[%c0_106, %c128_107], %182 {strides = array<i32>} : memref<32x512xf32, #tpu.memory_space<vmem>>, vector<32x128xf32>,
    %c0_108 = arith.constant 0 : index
    %c768_109 = arith.constant 768 : index
    %184 = vector.load %arg9[%c0_108, %c768_109] : memref<32x2048xf32, #tpu.memory_space<vmem>>, vector<32x768xf32>
    %c0_110 = arith.constant 0 : index
    %c0_111 = arith.constant 0 : index
    %185 = vector.load %arg4[%c0_110, %c0_111] : memref<768x128xf32, #tpu.memory_space<vmem>>, vector<768x128xf32>
    %cst_112 = arith.constant dense<0.000000e+00> : vector<32x128xf32>
    %186 = tpu.matmul %184, %185, %cst_112 {dimension_numbers = #tpu.dot_dimension_numbers<[1], [0], [0], [1], [0, 0, 1, 1], [], []>} : vector<32x768xf32>, vector<768x128xf32>, vector<32x128xf32> -> vector<32x128xf32>
    %187 = arith.addf %186, %157 : vector<32x128xf32>
    %cst_113 = arith.constant 0.000000e+00 : f32
    %188 = vector.broadcast %cst_113 : f32 to vector<32x128xf32>
    %189 = arith.cmpf ogt, %187, %188 : vector<32x128xf32>
    %cst_114 = arith.constant 0.000000e+00 : f32
    %190 = vector.broadcast %cst_114 : f32 to vector<32x128xf32>
    %191 = arith.minimumf %187, %190 : vector<32x128xf32>
    %192 = math.exp %191 : vector<32x128xf32>
    %cst_115 = arith.constant 1.000000e+00 : f32
    %193 = vector.broadcast %cst_115 : f32 to vector<32x128xf32>
    %194 = arith.subf %192, %193 : vector<32x128xf32>
    %195 = arith.select %189, %187, %194 : vector<32x128xi1>, vector<32x128xf32>
    %c0_116 = arith.constant 0 : index
    %c256_117 = arith.constant 256 : index
    %196 = vector.load %arg10[%c0_116, %c256_117] : memref<32x512xf32, #tpu.memory_space<vmem>>, vector<32x128xf32>
    tpu.vector_store %arg10[%c0_116, %c256_117], %195 {strides = array<i32>} : memref<32x512xf32, #tpu.memory_space<vmem>>, vector<32x128xf32>,
    %c0_118 = arith.constant 0 : index
    %c1280_119 = arith.constant 1280 : index
    %197 = vector.load %arg9[%c0_118, %c1280_119] : memref<32x2048xf32, #tpu.memory_space<vmem>>, vector<32x768xf32>
    %c0_120 = arith.constant 0 : index
    %c0_121 = arith.constant 0 : index
    %198 = vector.load %arg4[%c0_120, %c0_121] : memref<768x128xf32, #tpu.memory_space<vmem>>, vector<768x128xf32>
    %cst_122 = arith.constant dense<0.000000e+00> : vector<32x128xf32>
    %199 = tpu.matmul %197, %198, %cst_122 {dimension_numbers = #tpu.dot_dimension_numbers<[1], [0], [0], [1], [0, 0, 1, 1], [], []>} : vector<32x768xf32>, vector<768x128xf32>, vector<32x128xf32> -> vector<32x128xf32>
    %200 = arith.addf %199, %157 : vector<32x128xf32>
    %cst_123 = arith.constant 0.000000e+00 : f32
    %201 = vector.broadcast %cst_123 : f32 to vector<32x128xf32>
    %202 = arith.cmpf ogt, %200, %201 : vector<32x128xf32>
    %cst_124 = arith.constant 0.000000e+00 : f32
    %203 = vector.broadcast %cst_124 : f32 to vector<32x128xf32>
    %204 = arith.minimumf %200, %203 : vector<32x128xf32>
    %205 = math.exp %204 : vector<32x128xf32>
    %cst_125 = arith.constant 1.000000e+00 : f32
    %206 = vector.broadcast %cst_125 : f32 to vector<32x128xf32>
    %207 = arith.subf %205, %206 : vector<32x128xf32>
    %208 = arith.select %202, %200, %207 : vector<32x128xi1>, vector<32x128xf32>
    %c0_126 = arith.constant 0 : index
    %c384_127 = arith.constant 384 : index
    %209 = vector.load %arg10[%c0_126, %c384_127] : memref<32x512xf32, #tpu.memory_space<vmem>>, vector<32x128xf32>
    tpu.vector_store %arg10[%c0_126, %c384_127], %208 {strides = array<i32>} : memref<32x512xf32, #tpu.memory_space<vmem>>, vector<32x128xf32>,
    %c0_128 = arith.constant 0 : index
    %c0_129 = arith.constant 0 : index
    %210 = vector.load %arg7[%c0_128, %c0_129] : memref<1x512xf32, #tpu.memory_space<vmem>>, vector<1x512xf32>
    %211 = vector.shape_cast %210 : vector<1x512xf32> to vector<1x512xf32>
    %212 = vector.broadcast %211 : vector<1x512xf32> to vector<32x512xf32>
    %c0_130 = arith.constant 0 : index
    %c0_131 = arith.constant 0 : index
    %213 = vector.load %arg10[%c0_130, %c0_131] : memref<32x512xf32, #tpu.memory_space<vmem>>, vector<32x512xf32>
    %c0_132 = arith.constant 0 : index
    %c0_133 = arith.constant 0 : index
    %214 = vector.load %arg6[%c0_132, %c0_133] : memref<512x512xf32, #tpu.memory_space<vmem>>, vector<512x512xf32>
    %cst_134 = arith.constant dense<0.000000e+00> : vector<32x512xf32>
    %215 = tpu.matmul %213, %214, %cst_134 {dimension_numbers = #tpu.dot_dimension_numbers<[1], [0], [0], [1], [0, 0, 1, 1], [], []>} : vector<32x512xf32>, vector<512x512xf32>, vector<32x512xf32> -> vector<32x512xf32>
    %216 = arith.addf %215, %212 : vector<32x512xf32>
    %cst_135 = arith.constant 0.000000e+00 : f32
    %217 = vector.broadcast %cst_135 : f32 to vector<32x512xf32>
    %218 = arith.cmpf ogt, %216, %217 : vector<32x512xf32>
    %cst_136 = arith.constant 0.000000e+00 : f32
    %219 = vector.broadcast %cst_136 : f32 to vector<32x512xf32>
    %220 = arith.minimumf %216, %219 : vector<32x512xf32>
    %221 = math.exp %220 : vector<32x512xf32>
    %cst_137 = arith.constant 1.000000e+00 : f32
    %222 = vector.broadcast %cst_137 : f32 to vector<32x512xf32>
    %223 = arith.subf %221, %222 : vector<32x512xf32>
    %224 = arith.select %218, %216, %223 : vector<32x512xi1>, vector<32x512xf32>
    %c0_138 = arith.constant 0 : index
    %c0_139 = arith.constant 0 : index
    %225 = vector.load %arg8[%c0_138, %c0_139] : memref<32x512xf32, #tpu.memory_space<vmem>>, vector<32x512xf32>
    tpu.vector_store %arg8[%c0_138, %c0_139], %224 {strides = array<i32>} : memref<32x512xf32, #tpu.memory_space<vmem>>, vector<32x512xf32>,
    return
  }
  func.func @transform_0(%arg0: i32) -> (i32, i32) {
    %c0_i32 = arith.constant 0 : i32
    %c0_i32_0 = arith.constant 0 : i32
    return %arg0, %c0_i32 : i32, i32
  }
  func.func @transform_1(%arg0: i32) -> (i32, i32) {
    %c0_i32 = arith.constant 0 : i32
    %c0_i32_0 = arith.constant 0 : i32
    %c0_i32_1 = arith.constant 0 : i32
    return %c0_i32, %c0_i32_0 : i32, i32
  }
  func.func @transform_2(%arg0: i32) -> (i32, i32) {
    %c0_i32 = arith.constant 0 : i32
    %c0_i32_0 = arith.constant 0 : i32
    %c0_i32_1 = arith.constant 0 : i32
    return %c0_i32, %c0_i32_0 : i32, i32
  }
  func.func @transform_3(%arg0: i32) -> (i32, i32) {
    %c0_i32 = arith.constant 0 : i32
    %c0_i32_0 = arith.constant 0 : i32
    %c0_i32_1 = arith.constant 0 : i32
    return %c0_i32, %c0_i32_0 : i32, i32
  }
  func.func @transform_4(%arg0: i32) -> (i32, i32) {
    %c0_i32 = arith.constant 0 : i32
    %c0_i32_0 = arith.constant 0 : i32
    %c0_i32_1 = arith.constant 0 : i32
    return %c0_i32, %c0_i32_0 : i32, i32
  }
  func.func @transform_5(%arg0: i32) -> (i32, i32) {
    %c0_i32 = arith.constant 0 : i32
    %c0_i32_0 = arith.constant 0 : i32
    %c0_i32_1 = arith.constant 0 : i32
    return %c0_i32, %c0_i32_0 : i32, i32
  }
  func.func @transform_6(%arg0: i32) -> (i32, i32) {
    %c0_i32 = arith.constant 0 : i32
    %c0_i32_0 = arith.constant 0 : i32
    %c0_i32_1 = arith.constant 0 : i32
    return %c0_i32, %c0_i32_0 : i32, i32
  }
  func.func @transform_7(%arg0: i32) -> (i32, i32) {
    %c0_i32 = arith.constant 0 : i32
    %c0_i32_0 = arith.constant 0 : i32
    return %arg0, %c0_i32 : i32, i32
  }
}

</mosaic_0001>

<llo_original>
// kernel: state_embedding_forward.1
$region0: #{state_embedding_forward.1}
  #allocation0 [shape = 'u32[]', space=smem, size = 0x4, offset = 0x4, fixed_abs, tag = 'smem constant byte address 0x4 - core index']
  #allocation1 [shape = 'u32[72,128]{1,0:T(1,128)}', space=vmem, size = 0x9000, scoped, tag = 'internal scratch']
  #allocation2 [shape = 'f32[32,2048]{1,0:T(8,128)}', space=vmem, size = 0x40000, scoped, tag = 'scratch operand']
  #allocation3 [shape = 'f32[32,512]{1,0:T(8,128)}', space=vmem, size = 0x10000, scoped, tag = 'scratch operand']
  %s0 = inlined_call_operand.vmem [shape: s8[32,1024], index: 0, kind: input, shape index: {}]
  %s1 = inlined_call_operand.vmem [shape: f32[256,256], index: 1, kind: input, shape index: {}]
  %s2 = inlined_call_operand.vmem [shape: f32[1,256], index: 2, kind: input, shape index: {}]
  %s3 = inlined_call_operand.hbm [shape: f32[768,128], index: 3, kind: input, shape index: {}]
  %s4 = inlined_call_operand.vmem [shape: f32[1,128], index: 4, kind: input, shape index: {}]
  %s5 = inlined_call_operand.hbm [shape: f32[512,512], index: 5, kind: input, shape index: {}]
  %s6 = inlined_call_operand.vmem [shape: f32[1,512], index: 6, kind: input, shape index: {}]
  %s7 = inlined_call_operand.vmem [shape: f32[32,512], index: 7, kind: output, shape index: {}]
  %s8 = sld [smem:[#allocation0]]
  $region46: #{state_embedding_forward.1} parent=0
    _
  %s10 = ssub.s32 1, %s8
  %s11 = scalar_select 0, %s10, %s8
  $region1: #{state_embedding_forward.1} parent=0
    #allocation4 [shape = 'u8[393216]{0}', space=vmem, size = 0x60000, scoped, tag = 'input window, operand 3, single buffered']
    #allocation5 [shape = 's32[1]{0}', space=sflag, size = 0x4, scoped, tag = 'scoped memory for state_embedding_forward.1']
    #allocation6 [shape = 'u8[1048576]{0}', space=vmem, size = 0x100000, scoped, tag = 'input window, operand 5, single buffered']
    #allocation7 [shape = 's32[1]{0}', space=sflag, size = 0x4, scoped, tag = 'scoped memory for state_embedding_forward.1']
    %12 = vsyncpa [#allocation5], 0
    %13 = vsyncpa [#allocation7], 0
    // Predicated region
    $region2: #{state_embedding_forward.1} parent=1 // pred_check
      _
    $region3: #{state_embedding_forward.1} parent=1 // pred_check_branch
      %15 = sbr.rel (0) target = $region5
    $region4: #{state_embedding_forward.1} parent=1 // pred_region
      _
    $region5: #{state_embedding_forward.1} parent=1 // pred_fallthru
      _
    // Predicated region
    $region6: #{state_embedding_forward.1} parent=1 // pred_check
      _
    $region7: #{state_embedding_forward.1} parent=1 // pred_check_branch
      %17 = sbr.rel (0) target = $region9
    $region8: #{state_embedding_forward.1} parent=1 // pred_region
      _
    $region9: #{state_embedding_forward.1} parent=1 // pred_fallthru
      _
    // Predicated region
    $region10: #{state_embedding_forward.1} parent=1 // pred_check
      _
    $region11: #{state_embedding_forward.1} parent=1 // pred_check_branch
      %19 = sbr.rel (0) target = $region13
    $region12: #{state_embedding_forward.1} parent=1 // pred_region
      _
    $region13: #{state_embedding_forward.1} parent=1 // pred_fallthru
      _
    // Predicated region
    $region14: #{state_embedding_forward.1} parent=1 // pred_check
      _
    $region15: #{state_embedding_forward.1} parent=1 // pred_check_branch
      %21 = sbr.rel (0) target = $region17
    $region16: #{state_embedding_forward.1} parent=1 // pred_region
      %23 = vsyncadd [#allocation5], 0
      %s24 = sshll.u32 %s3, 4
      %s25 = int_to_ptr.hbm [resolvable:$true] %s24
      %s26 = sshll.u32 [#allocation4], 4
      %s27 = int_to_ptr.vmem [resolvable:$true] %s26
      %32 = dma.hbm_to_vmem [thread:$0]  %s25, 12288, %s27, [#allocation5], 128, 128, 8
    $region17: #{state_embedding_forward.1} parent=1 // pred_fallthru
      _
    // Predicated region
    $region18: #{state_embedding_forward.1} parent=1 // pred_check
      _
    $region19: #{state_embedding_forward.1} parent=1 // pred_check_branch
      %34 = sbr.rel (0) target = $region21
    $region20: #{state_embedding_forward.1} parent=1 // pred_region
      _
    $region21: #{state_embedding_forward.1} parent=1 // pred_fallthru
      _
    // Predicated region
    $region22: #{state_embedding_forward.1} parent=1 // pred_check
      _
    $region23: #{state_embedding_forward.1} parent=1 // pred_check_branch
      %36 = sbr.rel (0) target = $region25
    $region24: #{state_embedding_forward.1} parent=1 // pred_region
      %38 = vsyncadd [#allocation7], 0
      %s39 = sshll.u32 %s5, 4
      %s40 = int_to_ptr.hbm [resolvable:$true] %s39
      %s41 = sshll.u32 [#allocation6], 4
      %s42 = int_to_ptr.vmem [resolvable:$true] %s41
      %47 = dma.hbm_to_vmem [thread:$0]  %s40, 32768, %s42, [#allocation7], 512, 512, 32
    $region25: #{state_embedding_forward.1} parent=1 // pred_fallthru
      _
    // Predicated region
    $region26: #{state_embedding_forward.1} parent=1 // pred_check
      _
    $region27: #{state_embedding_forward.1} parent=1 // pred_check_branch
      %49 = sbr.rel (0) target = $region29
    $region28: #{state_embedding_forward.1} parent=1 // pred_region
      _
    $region29: #{state_embedding_forward.1} parent=1 // pred_fallthru
      _
    // Predicated region
    $region30: #{state_embedding_forward.1} parent=1 // pred_check
      _
    $region31: #{state_embedding_forward.1} parent=1 // pred_check_branch
      %51 = sbr.rel (0) target = $region33
    $region32: #{state_embedding_forward.1} parent=1 // pred_region
      %53 = dma.done [#allocation5], 12288
    $region33: #{state_embedding_forward.1} parent=1 // pred_fallthru
      _
    // Predicated region
    $region34: #{state_embedding_forward.1} parent=1 // pred_check
      _
    $region35: #{state_embedding_forward.1} parent=1 // pred_check_branch
      %55 = sbr.rel (0) target = $region37
    $region36: #{state_embedding_forward.1} parent=1 // pred_region
      %57 = dma.done [#allocation7], 32768
    $region37: #{state_embedding_forward.1} parent=1 // pred_fallthru
      _
    %v58 = vld [vmem:[%s2] sm:$0x3]
    %v60 = vperm.slane %v58, 0
    %v61 = vperm.slane %v58, 1
    %v64 = vld [vmem:[%s0] sm:$0xff]
    %v65 = vunpack.c.0.s8 %v64
    %v66 = vunpack.c.1.s8 %v64
    %v67 = vunpack.c.2.s8 %v64
    %v68 = vunpack.c.3.s8 %v64
    %v69 = vcvt.s32.f32 %v65
    %v70 = vcvt.s32.f32 %v66
    %v71 = vcvt.s32.f32 %v67
    %v72 = vcvt.s32.f32 %v68
    %vm73 = vcmp.lt.f32.partialorder %v69, 0.0
    %vm74 = vcmp.lt.f32.partialorder %v70, 0.0
    %vm75 = vcmp.lt.f32.partialorder %v71, 0.0
    %vm76 = vcmp.lt.f32.partialorder %v72, 0.0
    %v77 = vadd.f32 %v69, 256.0
    %v78 = vadd.f32 %v70, 256.0
    %v79 = vadd.f32 %v71, 256.0
    %v80 = vadd.f32 %v72, 256.0
    %v81 = vsel %vm73, %v77, %v69
    %v82 = vsel %vm74, %v78, %v70
    %v83 = vsel %vm75, %v79, %v71
    %v84 = vsel %vm76, %v80, %v72
    %v85 = vld [vmem:[%s1 + $0x100] sm:$0xff]
    %v86 = vld [vmem:[%s1 + $0x108] sm:$0xff]
    %v87 = vld [vmem:[%s1 + $0x110] sm:$0xff]
    %v88 = vld [vmem:[%s1 + $0x118] sm:$0xff]
    %v89 = vld [vmem:[%s1 + $0x120] sm:$0xff]
    %v90 = vld [vmem:[%s1 + $0x128] sm:$0xff]
    %v91 = vld [vmem:[%s1 + $0x130] sm:$0xff]
    %v92 = vld [vmem:[%s1 + $0x138] sm:$0xff]
    %v93 = vld [vmem:[%s1 + $0x140] sm:$0xff]
    %v94 = vld [vmem:[%s1 + $0x148] sm:$0xff]
    %v95 = vld [vmem:[%s1 + $0x150] sm:$0xff]
    %v96 = vld [vmem:[%s1 + $0x158] sm:$0xff]
    %v97 = vld [vmem:[%s1 + $0x160] sm:$0xff]
    %v98 = vld [vmem:[%s1 + $0x168] sm:$0xff]
    %v99 = vld [vmem:[%s1 + $0x170] sm:$0xff]
    %v100 = vld [vmem:[%s1 + $0x178] sm:$0xff]
    %v101 = vld [vmem:[%s1 + $0x180] sm:$0xff]
    %v102 = vld [vmem:[%s1 + $0x188] sm:$0xff]
    %v103 = vld [vmem:[%s1 + $0x190] sm:$0xff]
    %v104 = vld [vmem:[%s1 + $0x198] sm:$0xff]
    %v105 = vld [vmem:[%s1 + $0x1a0] sm:$0xff]
    %v106 = vld [vmem:[%s1 + $0x1a8] sm:$0xff]
    %v107 = vld [vmem:[%s1 + $0x1b0] sm:$0xff]
    %v108 = vld [vmem:[%s1 + $0x1b8] sm:$0xff]
    %v109 = vld [vmem:[%s1 + $0x1c0] sm:$0xff]
    %v110 = vld [vmem:[%s1 + $0x1c8] sm:$0xff]
    %v111 = vld [vmem:[%s1 + $0x1d0] sm:$0xff]
    %v112 = vld [vmem:[%s1 + $0x1d8] sm:$0xff]
    %v113 = vld [vmem:[%s1 + $0x1e0] sm:$0xff]
    %v114 = vld [vmem:[%s1 + $0x1e8] sm:$0xff]
    %v115 = vld [vmem:[%s1 + $0x1f0] sm:$0xff]
    %v116 = vld [vmem:[%s1 + $0x1f8] sm:$0xff]
    %117 = vmatpush.msra.mxu0 %v115
    %118 = vmatpush.msra.mxu0 %v113
    %119 = vmatpush.msra.mxu0 %v111
    %120 = vmatpush.msra.mxu0 %v109
    %121 = vmatpush.msra.mxu0 %v107
    %122 = vmatpush.msra.mxu0 %v105
    %123 = vmatpush.msra.mxu0 %v103
    %124 = vmatpush.msra.mxu0 %v101
    %125 = vmatpush.msra.mxu0 %v99
    %126 = vmatpush.msra.mxu0 %v97
    %127 = vmatpush.msra.mxu0 %v95
    %128 = vmatpush.msra.mxu0 %v93
    %129 = vmatpush.msra.mxu0 %v91
    %130 = vmatpush.msra.mxu0 %v89
    %131 = vmatpush.msra.mxu0 %v87
    %132 = vmatpush.msra.mxu0 %v85
    %133 = vmatmul.f32.gmra.mxu0 %v81
    %v134 = vpop.f32.mrf.mxu0
    %v135 = vadd.f32 %v60, %v134
    %136 = vmatmul.f32.gmra.mxu0 %v82
    %v137 = vpop.f32.mrf.mxu0
    %v138 = vadd.f32 %v60, %v137
    %139 = vmatmul.f32.gmra.mxu0 %v83
    %v140 = vpop.f32.mrf.mxu0
    %v141 = vadd.f32 %v60, %v140
    %142 = vmatmul.f32.gmra.mxu0 %v84
    %v143 = vpop.f32.mrf.mxu0
    %v144 = vadd.f32 %v60, %v143
    %145 = vdwg.mxu0
    %146 = vmatpush.msra.mxu0 %v116
    %147 = vmatpush.msra.mxu0 %v114
    %148 = vmatpush.msra.mxu0 %v112
    %149 = vmatpush.msra.mxu0 %v110
    %150 = vmatpush.msra.mxu0 %v108
    %151 = vmatpush.msra.mxu0 %v106
    %152 = vmatpush.msra.mxu0 %v104
    %153 = vmatpush.msra.mxu0 %v102
    %154 = vmatpush.msra.mxu0 %v100
    %155 = vmatpush.msra.mxu0 %v98
    %156 = vmatpush.msra.mxu0 %v96
    %157 = vmatpush.msra.mxu0 %v94
    %158 = vmatpush.msra.mxu0 %v92
    %159 = vmatpush.msra.mxu0 %v90
    %160 = vmatpush.msra.mxu0 %v88
    %161 = vmatpush.msra.mxu0 %v86
    %162 = vmatmul.f32.gmra.mxu0 %v81
    %v163 = vpop.f32.mrf.mxu0
    %v164 = vadd.f32 %v61, %v163
    %165 = vmatmul.f32.gmra.mxu0 %v82
    %v166 = vpop.f32.mrf.mxu0
    %v167 = vadd.f32 %v61, %v166
    %168 = vmatmul.f32.gmra.mxu0 %v83
    %v169 = vpop.f32.mrf.mxu0
    %v170 = vadd.f32 %v61, %v169
    %171 = vmatmul.f32.gmra.mxu0 %v84
    %v172 = vpop.f32.mrf.mxu0
    %v173 = vadd.f32 %v61, %v172
    %174 = vdwg.mxu0
    %vm175 = vcmp.gt.f32.partialorder %v135, 0.0
    %vm176 = vcmp.gt.f32.partialorder %v164, 0.0
    %vm177 = vcmp.gt.f32.partialorder %v138, 0.0
    %vm178 = vcmp.gt.f32.partialorder %v167, 0.0
    %vm179 = vcmp.gt.f32.partialorder %v141, 0.0
    %vm180 = vcmp.gt.f32.partialorder %v170, 0.0
    %vm181 = vcmp.gt.f32.partialorder %v144, 0.0
    %vm182 = vcmp.gt.f32.partialorder %v173, 0.0
    %v183 = vmin.f32 %v135, 0.0
    %v184 = vmin.f32 %v164, 0.0
    %v185 = vmin.f32 %v138, 0.0
    %v186 = vmin.f32 %v167, 0.0
    %v187 = vmin.f32 %v141, 0.0
    %v188 = vmin.f32 %v170, 0.0
    %v189 = vmin.f32 %v144, 0.0
    %v190 = vmin.f32 %v173, 0.0
    %v191 = vmul.f32 %v183, 1.442695
    %v192 = vpow.pop %v191
    %v193 = vmul.f32 %v184, 1.442695
    %v194 = vpow.pop %v193
    %v195 = vmul.f32 %v185, 1.442695
    %v196 = vpow.pop %v195
    %v197 = vmul.f32 %v186, 1.442695
    %v198 = vpow.pop %v197
    %v199 = vmul.f32 %v187, 1.442695
    %v200 = vpow.pop %v199
    %v201 = vmul.f32 %v188, 1.442695
    %v202 = vpow.pop %v201
    %v203 = vmul.f32 %v189, 1.442695
    %v204 = vpow.pop %v203
    %v205 = vmul.f32 %v190, 1.442695
    %v206 = vpow.pop %v205
    %v207 = vsub.f32 %v192, 1.0
    %v208 = vsub.f32 %v194, 1.0
    %v209 = vsub.f32 %v196, 1.0
    %v210 = vsub.f32 %v198, 1.0
    %v211 = vsub.f32 %v200, 1.0
    %v212 = vsub.f32 %v202, 1.0
    %v213 = vsub.f32 %v204, 1.0
    %v214 = vsub.f32 %v206, 1.0
    %v215 = vsel %vm175, %v135, %v207
    %v216 = vsel %vm176, %v164, %v208
    %v217 = vsel %vm177, %v138, %v209
    %v218 = vsel %vm178, %v167, %v210
    %v219 = vsel %vm179, %v141, %v211
    %v220 = vsel %vm180, %v170, %v212
    %v221 = vsel %vm181, %v144, %v213
    %v222 = vsel %vm182, %v173, %v214
    %223 = vst [vmem:[#allocation2] sm:$0xff] %v215
    %224 = vst [vmem:[#allocation2 + $0x8] sm:$0xff] %v216
    %225 = vst [vmem:[#allocation2 + $0x80] sm:$0xff] %v217
    %226 = vst [vmem:[#allocation2 + $0x88] sm:$0xff] %v218
    %227 = vst [vmem:[#allocation2 + $0x100] sm:$0xff] %v219
    %228 = vst [vmem:[#allocation2 + $0x108] sm:$0xff] %v220
    %229 = vst [vmem:[#allocation2 + $0x180] sm:$0xff] %v221
    %230 = vst [vmem:[#allocation2 + $0x188] sm:$0xff] %v222
    %v231 = vld [vmem:[%s0] sm:$0xff]
    %v232 = vld [vmem:[%s0 + $0x8] sm:$0xff]
    %v233 = vunpack.c.0.s8 %v231
    %v234 = vunpack.c.0.s8 %v232
    %v235 = vunpack.c.1.s8 %v231
    %v236 = vunpack.c.1.s8 %v232
    %v237 = vunpack.c.2.s8 %v231
    %v238 = vunpack.c.2.s8 %v232
    %v239 = vunpack.c.3.s8 %v231
    %v240 = vunpack.c.3.s8 %v232
    %v241 = vcvt.s32.f32 %v233
    %v242 = vcvt.s32.f32 %v234
    %v243 = vcvt.s32.f32 %v235
    %v244 = vcvt.s32.f32 %v236
    %v245 = vcvt.s32.f32 %v237
    %v246 = vcvt.s32.f32 %v238
    %v247 = vcvt.s32.f32 %v239
    %v248 = vcvt.s32.f32 %v240
    %vm249 = vcmp.lt.f32.partialorder %v241, 0.0
    %vm250 = vcmp.lt.f32.partialorder %v242, 0.0
    %vm251 = vcmp.lt.f32.partialorder %v243, 0.0
    %vm252 = vcmp.lt.f32.partialorder %v244, 0.0
    %vm253 = vcmp.lt.f32.partialorder %v245, 0.0
    %vm254 = vcmp.lt.f32.partialorder %v246, 0.0
    %vm255 = vcmp.lt.f32.partialorder %v247, 0.0
    %vm256 = vcmp.lt.f32.partialorder %v248, 0.0
    %v257 = vadd.f32 %v241, 256.0
    %v258 = vadd.f32 %v242, 256.0
    %v259 = vadd.f32 %v243, 256.0
    %v260 = vadd.f32 %v244, 256.0
    %v261 = vadd.f32 %v245, 256.0
    %v262 = vadd.f32 %v246, 256.0
    %v263 = vadd.f32 %v247, 256.0
    %v264 = vadd.f32 %v248, 256.0
    %v265 = vsel %vm249, %v257, %v241
    %v266 = vsel %vm250, %v258, %v242
    %v267 = vsel %vm251, %v259, %v243
    %v268 = vsel %vm252, %v260, %v244
    %v269 = vsel %vm253, %v261, %v245
    %v270 = vsel %vm254, %v262, %v246
    %v271 = vsel %vm255, %v263, %v247
    %v272 = vsel %vm256, %v264, %v248
    %v273 = vld [vmem:[%s1] sm:$0xff]
    %v274 = vld [vmem:[%s1 + $0x8] sm:$0xff]
    %v275 = vld [vmem:[%s1 + $0x10] sm:$0xff]
    %v276 = vld [vmem:[%s1 + $0x18] sm:$0xff]
    %v277 = vld [vmem:[%s1 + $0x20] sm:$0xff]
    %v278 = vld [vmem:[%s1 + $0x28] sm:$0xff]
    %v279 = vld [vmem:[%s1 + $0x30] sm:$0xff]
    %v280 = vld [vmem:[%s1 + $0x38] sm:$0xff]
    %v281 = vld [vmem:[%s1 + $0x40] sm:$0xff]
    %v282 = vld [vmem:[%s1 + $0x48] sm:$0xff]
    %v283 = vld [vmem:[%s1 + $0x50] sm:$0xff]
    %v284 = vld [vmem:[%s1 + $0x58] sm:$0xff]
    %v285 = vld [vmem:[%s1 + $0x60] sm:$0xff]
    %v286 = vld [vmem:[%s1 + $0x68] sm:$0xff]
    %v287 = vld [vmem:[%s1 + $0x70] sm:$0xff]
    %v288 = vld [vmem:[%s1 + $0x78] sm:$0xff]
    %v289 = vld [vmem:[%s1 + $0x80] sm:$0xff]
    %v290 = vld [vmem:[%s1 + $0x88] sm:$0xff]
    %v291 = vld [vmem:[%s1 + $0x90] sm:$0xff]
    %v292 = vld [vmem:[%s1 + $0x98] sm:$0xff]
    %v293 = vld [vmem:[%s1 + $0xa0] sm:$0xff]
    %v294 = vld [vmem:[%s1 + $0xa8] sm:$0xff]
    %v295 = vld [vmem:[%s1 + $0xb0] sm:$0xff]
    %v296 = vld [vmem:[%s1 + $0xb8] sm:$0xff]
    %v297 = vld [vmem:[%s1 + $0xc0] sm:$0xff]
    %v298 = vld [vmem:[%s1 + $0xc8] sm:$0xff]
    %v299 = vld [vmem:[%s1 + $0xd0] sm:$0xff]
    %v300 = vld [vmem:[%s1 + $0xd8] sm:$0xff]
    %v301 = vld [vmem:[%s1 + $0xe0] sm:$0xff]
    %v302 = vld [vmem:[%s1 + $0xe8] sm:$0xff]
    %v303 = vld [vmem:[%s1 + $0xf0] sm:$0xff]
    %v304 = vld [vmem:[%s1 + $0xf8] sm:$0xff]
    %v305 = vld [vmem:[%s1 + $0x100] sm:$0xff]
    %v306 = vld [vmem:[%s1 + $0x108] sm:$0xff]
    %v307 = vld [vmem:[%s1 + $0x110] sm:$0xff]
    %v308 = vld [vmem:[%s1 + $0x118] sm:$0xff]
    %v309 = vld [vmem:[%s1 + $0x120] sm:$0xff]
    %v310 = vld [vmem:[%s1 + $0x128] sm:$0xff]
    %v311 = vld [vmem:[%s1 + $0x130] sm:$0xff]
    %v312 = vld [vmem:[%s1 + $0x138] sm:$0xff]
    %v313 = vld [vmem:[%s1 + $0x140] sm:$0xff]
    %v314 = vld [vmem:[%s1 + $0x148] sm:$0xff]
    %v315 = vld [vmem:[%s1 + $0x150] sm:$0xff]
    %v316 = vld [vmem:[%s1 + $0x158] sm:$0xff]
    %v317 = vld [vmem:[%s1 + $0x160] sm:$0xff]
    %v318 = vld [vmem:[%s1 + $0x168] sm:$0xff]
    %v319 = vld [vmem:[%s1 + $0x170] sm:$0xff]
    %v320 = vld [vmem:[%s1 + $0x178] sm:$0xff]
    %v321 = vld [vmem:[%s1 + $0x180] sm:$0xff]
    %v322 = vld [vmem:[%s1 + $0x188] sm:$0xff]
    %v323 = vld [vmem:[%s1 + $0x190] sm:$0xff]
    %v324 = vld [vmem:[%s1 + $0x198] sm:$0xff]
    %v325 = vld [vmem:[%s1 + $0x1a0] sm:$0xff]
    %v326 = vld [vmem:[%s1 + $0x1a8] sm:$0xff]
    %v327 = vld [vmem:[%s1 + $0x1b0] sm:$0xff]
    %v328 = vld [vmem:[%s1 + $0x1b8] sm:$0xff]
    %v329 = vld [vmem:[%s1 + $0x1c0] sm:$0xff]
    %v330 = vld [vmem:[%s1 + $0x1c8] sm:$0xff]
    %v331 = vld [vmem:[%s1 + $0x1d0] sm:$0xff]
    %v332 = vld [vmem:[%s1 + $0x1d8] sm:$0xff]
    %v333 = vld [vmem:[%s1 + $0x1e0] sm:$0xff]
    %v334 = vld [vmem:[%s1 + $0x1e8] sm:$0xff]
    %v335 = vld [vmem:[%s1 + $0x1f0] sm:$0xff]
    %v336 = vld [vmem:[%s1 + $0x1f8] sm:$0xff]
    %337 = vmatpush.msra.mxu0 %v303
    %338 = vmatpush.msra.mxu0 %v301
    %339 = vmatpush.msra.mxu0 %v299
    %340 = vmatpush.msra.mxu0 %v297
    %341 = vmatpush.msra.mxu0 %v295
    %342 = vmatpush.msra.mxu0 %v293
    %343 = vmatpush.msra.mxu0 %v291
    %344 = vmatpush.msra.mxu0 %v289
    %345 = vmatpush.msra.mxu0 %v287
    %346 = vmatpush.msra.mxu0 %v285
    %347 = vmatpush.msra.mxu0 %v283
    %348 = vmatpush.msra.mxu0 %v281
    %349 = vmatpush.msra.mxu0 %v279
    %350 = vmatpush.msra.mxu0 %v277
    %351 = vmatpush.msra.mxu0 %v275
    %352 = vmatpush.msra.mxu0 %v273
    %353 = vmatmul.f32.gmra.mxu0 %v265
    %v354 = vpop.f32.mrf.mxu0
    %v355 = vadd.f32 %v60, %v354
    %356 = vmatmul.f32.gmra.mxu0 %v267
    %v357 = vpop.f32.mrf.mxu0
    %v358 = vadd.f32 %v60, %v357
    %359 = vmatmul.f32.gmra.mxu0 %v269
    %v360 = vpop.f32.mrf.mxu0
    %v361 = vadd.f32 %v60, %v360
    %362 = vmatmul.f32.gmra.mxu0 %v271
    %v363 = vpop.f32.mrf.mxu0
    %v364 = vadd.f32 %v60, %v363
    %365 = vdwg.mxu0
    %366 = vmatpush.msra.mxu0 %v335
    %367 = vmatpush.msra.mxu0 %v333
    %368 = vmatpush.msra.mxu0 %v331
    %369 = vmatpush.msra.mxu0 %v329
    %370 = vmatpush.msra.mxu0 %v327
    %371 = vmatpush.msra.mxu0 %v325
    %372 = vmatpush.msra.mxu0 %v323
    %373 = vmatpush.msra.mxu0 %v321
    %374 = vmatpush.msra.mxu0 %v319
    %375 = vmatpush.msra.mxu0 %v317
    %376 = vmatpush.msra.mxu0 %v315
    %377 = vmatpush.msra.mxu0 %v313
    %378 = vmatpush.msra.mxu0 %v311
    %379 = vmatpush.msra.mxu0 %v309
    %380 = vmatpush.msra.mxu0 %v307
    %381 = vmatpush.msra.mxu0 %v305
    %382 = vmatmul.f32.gmra.mxu0 %v266
    %v383 = vpop.f32.mrf.mxu0
    %v384 = vadd.f32 %v355, %v383
    %385 = vmatmul.f32.gmra.mxu0 %v268
    %v386 = vpop.f32.mrf.mxu0
    %v387 = vadd.f32 %v358, %v386
    %388 = vmatmul.f32.gmra.mxu0 %v270
    %v389 = vpop.f32.mrf.mxu0
    %v390 = vadd.f32 %v361, %v389
    %391 = vmatmul.f32.gmra.mxu0 %v272
    %v392 = vpop.f32.mrf.mxu0
    %v393 = vadd.f32 %v364, %v392
    %394 = vdwg.mxu0
    %395 = vmatpush.msra.mxu0 %v304
    %396 = vmatpush.msra.mxu0 %v302
    %397 = vmatpush.msra.mxu0 %v300
    %398 = vmatpush.msra.mxu0 %v298
    %399 = vmatpush.msra.mxu0 %v296
    %400 = vmatpush.msra.mxu0 %v294
    %401 = vmatpush.msra.mxu0 %v292
    %402 = vmatpush.msra.mxu0 %v290
    %403 = vmatpush.msra.mxu0 %v288
    %404 = vmatpush.msra.mxu0 %v286
    %405 = vmatpush.msra.mxu0 %v284
    %406 = vmatpush.msra.mxu0 %v282
    %407 = vmatpush.msra.mxu0 %v280
    %408 = vmatpush.msra.mxu0 %v278
    %409 = vmatpush.msra.mxu0 %v276
    %410 = vmatpush.msra.mxu0 %v274
    %411 = vmatmul.f32.gmra.mxu0 %v265
    %v412 = vpop.f32.mrf.mxu0
    %v413 = vadd.f32 %v61, %v412
    %414 = vmatmul.f32.gmra.mxu0 %v267
    %v415 = vpop.f32.mrf.mxu0
    %v416 = vadd.f32 %v61, %v415
    %417 = vmatmul.f32.gmra.mxu0 %v269
    %v418 = vpop.f32.mrf.mxu0
    %v419 = vadd.f32 %v61, %v418
    %420 = vmatmul.f32.gmra.mxu0 %v271
    %v421 = vpop.f32.mrf.mxu0
    %v422 = vadd.f32 %v61, %v421
    %423 = vdwg.mxu0
    %424 = vmatpush.msra.mxu0 %v336
    %425 = vmatpush.msra.mxu0 %v334
    %426 = vmatpush.msra.mxu0 %v332
    %427 = vmatpush.msra.mxu0 %v330
    %428 = vmatpush.msra.mxu0 %v328
    %429 = vmatpush.msra.mxu0 %v326
    %430 = vmatpush.msra.mxu0 %v324
    %431 = vmatpush.msra.mxu0 %v322
    %432 = vmatpush.msra.mxu0 %v320
    %433 = vmatpush.msra.mxu0 %v318
    %434 = vmatpush.msra.mxu0 %v316
    %435 = vmatpush.msra.mxu0 %v314
    %436 = vmatpush.msra.mxu0 %v312
    %437 = vmatpush.msra.mxu0 %v310
    %438 = vmatpush.msra.mxu0 %v308
    %439 = vmatpush.msra.mxu0 %v306
    %440 = vmatmul.f32.gmra.mxu0 %v266
    %v441 = vpop.f32.mrf.mxu0
    %v442 = vadd.f32 %v413, %v441
    %443 = vmatmul.f32.gmra.mxu0 %v268
    %v444 = vpop.f32.mrf.mxu0
    %v445 = vadd.f32 %v416, %v444
    %446 = vmatmul.f32.gmra.mxu0 %v270
    %v447 = vpop.f32.mrf.mxu0
    %v448 = vadd.f32 %v419, %v447
    %449 = vmatmul.f32.gmra.mxu0 %v272
    %v450 = vpop.f32.mrf.mxu0
    %v451 = vadd.f32 %v422, %v450
    %452 = vdwg.mxu0
    %vm453 = vcmp.gt.f32.partialorder %v384, 0.0
    %vm454 = vcmp.gt.f32.partialorder %v442, 0.0
    %vm455 = vcmp.gt.f32.partialorder %v387, 0.0
    %vm456 = vcmp.gt.f32.partialorder %v445, 0.0
    %vm457 = vcmp.gt.f32.partialorder %v390, 0.0
    %vm458 = vcmp.gt.f32.partialorder %v448, 0.0
    %vm459 = vcmp.gt.f32.partialorder %v393, 0.0
    %vm460 = vcmp.gt.f32.partialorder %v451, 0.0
    %v461 = vmin.f32 %v384, 0.0
    %v462 = vmin.f32 %v442, 0.0
    %v463 = vmin.f32 %v387, 0.0
    %v464 = vmin.f32 %v445, 0.0
    %v465 = vmin.f32 %v390, 0.0
    %v466 = vmin.f32 %v448, 0.0
    %v467 = vmin.f32 %v393, 0.0
    %v468 = vmin.f32 %v451, 0.0
    %v469 = vmul.f32 %v461, 1.442695
    %v470 = vpow.pop %v469
    %v471 = vmul.f32 %v462, 1.442695
    %v472 = vpow.pop %v471
    %v473 = vmul.f32 %v463, 1.442695
    %v474 = vpow.pop %v473
    %v475 = vmul.f32 %v464, 1.442695
    %v476 = vpow.pop %v475
    %v477 = vmul.f32 %v465, 1.442695
    %v478 = vpow.pop %v477
    %v479 = vmul.f32 %v466, 1.442695
    %v480 = vpow.pop %v479
    %v481 = vmul.f32 %v467, 1.442695
    %v482 = vpow.pop %v481
    %v483 = vmul.f32 %v468, 1.442695
    %v484 = vpow.pop %v483
    %v485 = vsub.f32 %v470, 1.0
    %v486 = vsub.f32 %v472, 1.0
    %v487 = vsub.f32 %v474, 1.0
    %v488 = vsub.f32 %v476, 1.0
    %v489 = vsub.f32 %v478, 1.0
    %v490 = vsub.f32 %v480, 1.0
    %v491 = vsub.f32 %v482, 1.0
    %v492 = vsub.f32 %v484, 1.0
    %v493 = vsel %vm453, %v384, %v485
    %v494 = vsel %vm454, %v442, %v486
    %v495 = vsel %vm455, %v387, %v487
    %v496 = vsel %vm456, %v445, %v488
    %v497 = vsel %vm457, %v390, %v489
    %v498 = vsel %vm458, %v448, %v490
    %v499 = vsel %vm459, %v393, %v491
    %v500 = vsel %vm460, %v451, %v492
    %501 = vst [vmem:[#allocation2 + $0x10] sm:$0xff] %v493
    %502 = vst [vmem:[#allocation2 + $0x18] sm:$0xff] %v494
    %503 = vst [vmem:[#allocation2 + $0x90] sm:$0xff] %v495
    %504 = vst [vmem:[#allocation2 + $0x98] sm:$0xff] %v496
    %505 = vst [vmem:[#allocation2 + $0x110] sm:$0xff] %v497
    %506 = vst [vmem:[#allocation2 + $0x118] sm:$0xff] %v498
    %507 = vst [vmem:[#allocation2 + $0x190] sm:$0xff] %v499
    %508 = vst [vmem:[#allocation2 + $0x198] sm:$0xff] %v500
    %v509 = vld [vmem:[%s0 + $0x8] sm:$0xff]
    %v510 = vld [vmem:[%s0 + $0x10] sm:$0xff]
    %v511 = vunpack.c.0.s8 %v509
    %v512 = vunpack.c.0.s8 %v510
    %v513 = vunpack.c.1.s8 %v509
    %v514 = vunpack.c.1.s8 %v510
    %v515 = vunpack.c.2.s8 %v509
    %v516 = vunpack.c.2.s8 %v510
    %v517 = vunpack.c.3.s8 %v509
    %v518 = vunpack.c.3.s8 %v510
    %v519 = vcvt.s32.f32 %v511
    %v520 = vcvt.s32.f32 %v512
    %v521 = vcvt.s32.f32 %v513
    %v522 = vcvt.s32.f32 %v514
    %v523 = vcvt.s32.f32 %v515
    %v524 = vcvt.s32.f32 %v516
    %v525 = vcvt.s32.f32 %v517
    %v526 = vcvt.s32.f32 %v518
    %vm527 = vcmp.lt.f32.partialorder %v519, 0.0
    %vm528 = vcmp.lt.f32.partialorder %v520, 0.0
    %vm529 = vcmp.lt.f32.partialorder %v521, 0.0
    %vm530 = vcmp.lt.f32.partialorder %v522, 0.0
    %vm531 = vcmp.lt.f32.partialorder %v523, 0.0
    %vm532 = vcmp.lt.f32.partialorder %v524, 0.0
    %vm533 = vcmp.lt.f32.partialorder %v525, 0.0
    %vm534 = vcmp.lt.f32.partialorder %v526, 0.0
    %v535 = vadd.f32 %v519, 256.0
    %v536 = vadd.f32 %v520, 256.0
    %v537 = vadd.f32 %v521, 256.0
    %v538 = vadd.f32 %v522, 256.0
    %v539 = vadd.f32 %v523, 256.0
    %v540 = vadd.f32 %v524, 256.0
    %v541 = vadd.f32 %v525, 256.0
    %v542 = vadd.f32 %v526, 256.0
    %v543 = vsel %vm527, %v535, %v519
    %v544 = vsel %vm528, %v536, %v520
    %v545 = vsel %vm529, %v537, %v521
    %v546 = vsel %vm530, %v538, %v522
    %v547 = vsel %vm531, %v539, %v523
    %v548 = vsel %vm532, %v540, %v524
    %v549 = vsel %vm533, %v541, %v525
    %v550 = vsel %vm534, %v542, %v526
    %v551 = vld [vmem:[%s1] sm:$0xff]
    %v552 = vld [vmem:[%s1 + $0x8] sm:$0xff]
    %v553 = vld [vmem:[%s1 + $0x10] sm:$0xff]
    %v554 = vld [vmem:[%s1 + $0x18] sm:$0xff]
    %v555 = vld [vmem:[%s1 + $0x20] sm:$0xff]
    %v556 = vld [vmem:[%s1 + $0x28] sm:$0xff]
    %v557 = vld [vmem:[%s1 + $0x30] sm:$0xff]
    %v558 = vld [vmem:[%s1 + $0x38] sm:$0xff]
    %v559 = vld [vmem:[%s1 + $0x40] sm:$0xff]
    %v560 = vld [vmem:[%s1 + $0x48] sm:$0xff]
    %v561 = vld [vmem:[%s1 + $0x50] sm:$0xff]
    %v562 = vld [vmem:[%s1 + $0x58] sm:$0xff]
    %v563 = vld [vmem:[%s1 + $0x60] sm:$0xff]
    %v564 = vld [vmem:[%s1 + $0x68] sm:$0xff]
    %v565 = vld [vmem:[%s1 + $0x70] sm:$0xff]
    %v566 = vld [vmem:[%s1 + $0x78] sm:$0xff]
    %v567 = vld [vmem:[%s1 + $0x80] sm:$0xff]
    %v568 = vld [vmem:[%s1 + $0x88] sm:$0xff]
    %v569 = vld [vmem:[%s1 + $0x90] sm:$0xff]
    %v570 = vld [vmem:[%s1 + $0x98] sm:$0xff]
    %v571 = vld [vmem:[%s1 + $0xa0] sm:$0xff]
    %v572 = vld [vmem:[%s1 + $0xa8] sm:$0xff]
    %v573 = vld [vmem:[%s1 + $0xb0] sm:$0xff]
    %v574 = vld [vmem:[%s1 + $0xb8] sm:$0xff]
    %v575 = vld [vmem:[%s1 + $0xc0] sm:$0xff]
    %v576 = vld [vmem:[%s1 + $0xc8] sm:$0xff]
    %v577 = vld [vmem:[%s1 + $0xd0] sm:$0xff]
    %v578 = vld [vmem:[%s1 + $0xd8] sm:$0xff]
    %v579 = vld [vmem:[%s1 + $0xe0] sm:$0xff]
    %v580 = vld [vmem:[%s1 + $0xe8] sm:$0xff]
    %v581 = vld [vmem:[%s1 + $0xf0] sm:$0xff]
    %v582 = vld [vmem:[%s1 + $0xf8] sm:$0xff]
    %v583 = vld [vmem:[%s1 + $0x100] sm:$0xff]
    %v584 = vld [vmem:[%s1 + $0x108] sm:$0xff]
    %v585 = vld [vmem:[%s1 + $0x110] sm:$0xff]
    %v586 = vld [vmem:[%s1 + $0x118] sm:$0xff]
    %v587 = vld [vmem:[%s1 + $0x120] sm:$0xff]
    %v588 = vld [vmem:[%s1 + $0x128] sm:$0xff]
    %v589 = vld [vmem:[%s1 + $0x130] sm:$0xff]
    %v590 = vld [vmem:[%s1 + $0x138] sm:$0xff]
    %v591 = vld [vmem:[%s1 + $0x140] sm:$0xff]
    %v592 = vld [vmem:[%s1 + $0x148] sm:$0xff]
    %v593 = vld [vmem:[%s1 + $0x150] sm:$0xff]
    %v594 = vld [vmem:[%s1 + $0x158] sm:$0xff]
    %v595 = vld [vmem:[%s1 + $0x160] sm:$0xff]
    %v596 = vld [vmem:[%s1 + $0x168] sm:$0xff]
    %v597 = vld [vmem:[%s1 + $0x170] sm:$0xff]
    %v598 = vld [vmem:[%s1 + $0x178] sm:$0xff]
    %v599 = vld [vmem:[%s1 + $0x180] sm:$0xff]
    %v600 = vld [vmem:[%s1 + $0x188] sm:$0xff]
    %v601 = vld [vmem:[%s1 + $0x190] sm:$0xff]
    %v602 = vld [vmem:[%s1 + $0x198] sm:$0xff]
    %v603 = vld [vmem:[%s1 + $0x1a0] sm:$0xff]
    %v604 = vld [vmem:[%s1 + $0x1a8] sm:$0xff]
    %v605 = vld [vmem:[%s1 + $0x1b0] sm:$0xff]
    %v606 = vld [vmem:[%s1 + $0x1b8] sm:$0xff]
    %v607 = vld [vmem:[%s1 + $0x1c0] sm:$0xff]
    %v608 = vld [vmem:[%s1 + $0x1c8] sm:$0xff]
    %v609 = vld [vmem:[%s1 + $0x1d0] sm:$0xff]
    %v610 = vld [vmem:[%s1 + $0x1d8] sm:$0xff]
    %v611 = vld [vmem:[%s1 + $0x1e0] sm:$0xff]
    %v612 = vld [vmem:[%s1 + $0x1e8] sm:$0xff]
    %v613 = vld [vmem:[%s1 + $0x1f0] sm:$0xff]
    %v614 = vld [vmem:[%s1 + $0x1f8] sm:$0xff]
    %615 = vmatpush.msra.mxu0 %v581
    %616 = vmatpush.msra.mxu0 %v579
    %617 = vmatpush.msra.mxu0 %v577
    %618 = vmatpush.msra.mxu0 %v575
    %619 = vmatpush.msra.mxu0 %v573
    %620 = vmatpush.msra.mxu0 %v571
    %621 = vmatpush.msra.mxu0 %v569
    %622 = vmatpush.msra.mxu0 %v567
    %623 = vmatpush.msra.mxu0 %v565
    %624 = vmatpush.msra.mxu0 %v563
    %625 = vmatpush.msra.mxu0 %v561
    %626 = vmatpush.msra.mxu0 %v559
    %627 = vmatpush.msra.mxu0 %v557
    %628 = vmatpush.msra.mxu0 %v555
    %629 = vmatpush.msra.mxu0 %v553
    %630 = vmatpush.msra.mxu0 %v551
    %631 = vmatmul.f32.gmra.mxu0 %v543
    %v632 = vpop.f32.mrf.mxu0
    %v633 = vadd.f32 %v60, %v632
    %634 = vmatmul.f32.gmra.mxu0 %v545
    %v635 = vpop.f32.mrf.mxu0
    %v636 = vadd.f32 %v60, %v635
    %637 = vmatmul.f32.gmra.mxu0 %v547
    %v638 = vpop.f32.mrf.mxu0
    %v639 = vadd.f32 %v60, %v638
    %640 = vmatmul.f32.gmra.mxu0 %v549
    %v641 = vpop.f32.mrf.mxu0
    %v642 = vadd.f32 %v60, %v641
    %643 = vdwg.mxu0
    %644 = vmatpush.msra.mxu0 %v613
    %645 = vmatpush.msra.mxu0 %v611
    %646 = vmatpush.msra.mxu0 %v609
    %647 = vmatpush.msra.mxu0 %v607
    %648 = vmatpush.msra.mxu0 %v605
    %649 = vmatpush.msra.mxu0 %v603
    %650 = vmatpush.msra.mxu0 %v601
    %651 = vmatpush.msra.mxu0 %v599
    %652 = vmatpush.msra.mxu0 %v597
    %653 = vmatpush.msra.mxu0 %v595
    %654 = vmatpush.msra.mxu0 %v593
    %655 = vmatpush.msra.mxu0 %v591
    %656 = vmatpush.msra.mxu0 %v589
    %657 = vmatpush.msra.mxu0 %v587
    %658 = vmatpush.msra.mxu0 %v585
    %659 = vmatpush.msra.mxu0 %v583
    %660 = vmatmul.f32.gmra.mxu0 %v544
    %v661 = vpop.f32.mrf.mxu0
    %v662 = vadd.f32 %v633, %v661
    %663 = vmatmul.f32.gmra.mxu0 %v546
    %v664 = vpop.f32.mrf.mxu0
    %v665 = vadd.f32 %v636, %v664
    %666 = vmatmul.f32.gmra.mxu0 %v548
    %v667 = vpop.f32.mrf.mxu0
    %v668 = vadd.f32 %v639, %v667
    %669 = vmatmul.f32.gmra.mxu0 %v550
    %v670 = vpop.f32.mrf.mxu0
    %v671 = vadd.f32 %v642, %v670
    %672 = vdwg.mxu0
    %673 = vmatpush.msra.mxu0 %v582
    %674 = vmatpush.msra.mxu0 %v580
    %675 = vmatpush.msra.mxu0 %v578
    %676 = vmatpush.msra.mxu0 %v576
    %677 = vmatpush.msra.mxu0 %v574
    %678 = vmatpush.msra.mxu0 %v572
    %679 = vmatpush.msra.mxu0 %v570
    %680 = vmatpush.msra.mxu0 %v568
    %681 = vmatpush.msra.mxu0 %v566
    %682 = vmatpush.msra.mxu0 %v564
    %683 = vmatpush.msra.mxu0 %v562
    %684 = vmatpush.msra.mxu0 %v560
    %685 = vmatpush.msra.mxu0 %v558
    %686 = vmatpush.msra.mxu0 %v556
    %687 = vmatpush.msra.mxu0 %v554
    %688 = vmatpush.msra.mxu0 %v552
    %689 = vmatmul.f32.gmra.mxu0 %v543
    %v690 = vpop.f32.mrf.mxu0
    %v691 = vadd.f32 %v61, %v690
    %692 = vmatmul.f32.gmra.mxu0 %v545
    %v693 = vpop.f32.mrf.mxu0
    %v694 = vadd.f32 %v61, %v693
    %695 = vmatmul.f32.gmra.mxu0 %v547
    %v696 = vpop.f32.mrf.mxu0
    %v697 = vadd.f32 %v61, %v696
    %698 = vmatmul.f32.gmra.mxu0 %v549
    %v699 = vpop.f32.mrf.mxu0
    %v700 = vadd.f32 %v61, %v699
    %701 = vdwg.mxu0
    %702 = vmatpush.msra.mxu0 %v614
    %703 = vmatpush.msra.mxu0 %v612
    %704 = vmatpush.msra.mxu0 %v610
    %705 = vmatpush.msra.mxu0 %v608
    %706 = vmatpush.msra.mxu0 %v606
    %707 = vmatpush.msra.mxu0 %v604
    %708 = vmatpush.msra.mxu0 %v602
    %709 = vmatpush.msra.mxu0 %v600
    %710 = vmatpush.msra.mxu0 %v598
    %711 = vmatpush.msra.mxu0 %v596
    %712 = vmatpush.msra.mxu0 %v594
    %713 = vmatpush.msra.mxu0 %v592
    %714 = vmatpush.msra.mxu0 %v590
    %715 = vmatpush.msra.mxu0 %v588
    %716 = vmatpush.msra.mxu0 %v586
    %717 = vmatpush.msra.mxu0 %v584
    %718 = vmatmul.f32.gmra.mxu0 %v544
    %v719 = vpop.f32.mrf.mxu0
    %v720 = vadd.f32 %v691, %v719
    %721 = vmatmul.f32.gmra.mxu0 %v546
    %v722 = vpop.f32.mrf.mxu0
    %v723 = vadd.f32 %v694, %v722
    %724 = vmatmul.f32.gmra.mxu0 %v548
    %v725 = vpop.f32.mrf.mxu0
    %v726 = vadd.f32 %v697, %v725
    %727 = vmatmul.f32.gmra.mxu0 %v550
    %v728 = vpop.f32.mrf.mxu0
    %v729 = vadd.f32 %v700, %v728
    %730 = vdwg.mxu0
    %vm731 = vcmp.gt.f32.partialorder %v662, 0.0
    %vm732 = vcmp.gt.f32.partialorder %v720, 0.0
    %vm733 = vcmp.gt.f32.partialorder %v665, 0.0
    %vm734 = vcmp.gt.f32.partialorder %v723, 0.0
    %vm735 = vcmp.gt.f32.partialorder %v668, 0.0
    %vm736 = vcmp.gt.f32.partialorder %v726, 0.0
    %vm737 = vcmp.gt.f32.partialorder %v671, 0.0
    %vm738 = vcmp.gt.f32.partialorder %v729, 0.0
    %v739 = vmin.f32 %v662, 0.0
    %v740 = vmin.f32 %v720, 0.0
    %v741 = vmin.f32 %v665, 0.0
    %v742 = vmin.f32 %v723, 0.0
    %v743 = vmin.f32 %v668, 0.0
    %v744 = vmin.f32 %v726, 0.0
    %v745 = vmin.f32 %v671, 0.0
    %v746 = vmin.f32 %v729, 0.0
    %v747 = vmul.f32 %v739, 1.442695
    %v748 = vpow.pop %v747
    %v749 = vmul.f32 %v740, 1.442695
    %v750 = vpow.pop %v749
    %v751 = vmul.f32 %v741, 1.442695
    %v752 = vpow.pop %v751
    %v753 = vmul.f32 %v742, 1.442695
    %v754 = vpow.pop %v753
    %v755 = vmul.f32 %v743, 1.442695
    %v756 = vpow.pop %v755
    %v757 = vmul.f32 %v744, 1.442695
    %v758 = vpow.pop %v757
    %v759 = vmul.f32 %v745, 1.442695
    %v760 = vpow.pop %v759
    %v761 = vmul.f32 %v746, 1.442695
    %v762 = vpow.pop %v761
    %v763 = vsub.f32 %v748, 1.0
    %v764 = vsub.f32 %v750, 1.0
    %v765 = vsub.f32 %v752, 1.0
    %v766 = vsub.f32 %v754, 1.0
    %v767 = vsub.f32 %v756, 1.0
    %v768 = vsub.f32 %v758, 1.0
    %v769 = vsub.f32 %v760, 1.0
    %v770 = vsub.f32 %v762, 1.0
    %v771 = vsel %vm731, %v662, %v763
    %v772 = vsel %vm732, %v720, %v764
    %v773 = vsel %vm733, %v665, %v765
    %v774 = vsel %vm734, %v723, %v766
    %v775 = vsel %vm735, %v668, %v767
    %v776 = vsel %vm736, %v726, %v768
    %v777 = vsel %vm737, %v671, %v769
    %v778 = vsel %vm738, %v729, %v770
    %779 = vst [vmem:[#allocation2 + $0x20] sm:$0xff] %v771
    %780 = vst [vmem:[#allocation2 + $0x28] sm:$0xff] %v772
    %781 = vst [vmem:[#allocation2 + $0xa0] sm:$0xff] %v773
    %782 = vst [vmem:[#allocation2 + $0xa8] sm:$0xff] %v774
    %783 = vst [vmem:[#allocation2 + $0x120] sm:$0xff] %v775
    %784 = vst [vmem:[#allocation2 + $0x128] sm:$0xff] %v776
    %785 = vst [vmem:[#allocation2 + $0x1a0] sm:$0xff] %v777
    %786 = vst [vmem:[#allocation2 + $0x1a8] sm:$0xff] %v778
    %v787 = vld [vmem:[%s0 + $0x10] sm:$0xff]
    %v788 = vld [vmem:[%s0 + $0x18] sm:$0xff]
    %v789 = vunpack.c.0.s8 %v787
    %v790 = vunpack.c.0.s8 %v788
    %v791 = vunpack.c.1.s8 %v787
    %v792 = vunpack.c.1.s8 %v788
    %v793 = vunpack.c.2.s8 %v787
    %v794 = vunpack.c.2.s8 %v788
    %v795 = vunpack.c.3.s8 %v787
    %v796 = vunpack.c.3.s8 %v788
    %v797 = vcvt.s32.f32 %v789
    %v798 = vcvt.s32.f32 %v790
    %v799 = vcvt.s32.f32 %v791
    %v800 = vcvt.s32.f32 %v792
    %v801 = vcvt.s32.f32 %v793
    %v802 = vcvt.s32.f32 %v794
    %v803 = vcvt.s32.f32 %v795
    %v804 = vcvt.s32.f32 %v796
    %vm805 = vcmp.lt.f32.partialorder %v797, 0.0
    %vm806 = vcmp.lt.f32.partialorder %v798, 0.0
    %vm807 = vcmp.lt.f32.partialorder %v799, 0.0
    %vm808 = vcmp.lt.f32.partialorder %v800, 0.0
    %vm809 = vcmp.lt.f32.partialorder %v801, 0.0
    %vm810 = vcmp.lt.f32.partialorder %v802, 0.0
    %vm811 = vcmp.lt.f32.partialorder %v803, 0.0
    %vm812 = vcmp.lt.f32.partialorder %v804, 0.0
    %v813 = vadd.f32 %v797, 256.0
    %v814 = vadd.f32 %v798, 256.0
    %v815 = vadd.f32 %v799, 256.0
    %v816 = vadd.f32 %v800, 256.0
    %v817 = vadd.f32 %v801, 256.0
    %v818 = vadd.f32 %v802, 256.0
    %v819 = vadd.f32 %v803, 256.0
    %v820 = vadd.f32 %v804, 256.0
    %v821 = vsel %vm805, %v813, %v797
    %v822 = vsel %vm806, %v814, %v798
    %v823 = vsel %vm807, %v815, %v799
    %v824 = vsel %vm808, %v816, %v800
    %v825 = vsel %vm809, %v817, %v801
    %v826 = vsel %vm810, %v818, %v802
    %v827 = vsel %vm811, %v819, %v803
    %v828 = vsel %vm812, %v820, %v804
    %v829 = vld [vmem:[%s1] sm:$0xff]
    %v830 = vld [vmem:[%s1 + $0x8] sm:$0xff]
    %v831 = vld [vmem:[%s1 + $0x10] sm:$0xff]
    %v832 = vld [vmem:[%s1 + $0x18] sm:$0xff]
    %v833 = vld [vmem:[%s1 + $0x20] sm:$0xff]
    %v834 = vld [vmem:[%s1 + $0x28] sm:$0xff]
    %v835 = vld [vmem:[%s1 + $0x30] sm:$0xff]
    %v836 = vld [vmem:[%s1 + $0x38] sm:$0xff]
    %v837 = vld [vmem:[%s1 + $0x40] sm:$0xff]
    %v838 = vld [vmem:[%s1 + $0x48] sm:$0xff]
    %v839 = vld [vmem:[%s1 + $0x50] sm:$0xff]
    %v840 = vld [vmem:[%s1 + $0x58] sm:$0xff]
    %v841 = vld [vmem:[%s1 + $0x60] sm:$0xff]
    %v842 = vld [vmem:[%s1 + $0x68] sm:$0xff]
    %v843 = vld [vmem:[%s1 + $0x70] sm:$0xff]
    %v844 = vld [vmem:[%s1 + $0x78] sm:$0xff]
    %v845 = vld [vmem:[%s1 + $0x80] sm:$0xff]
    %v846 = vld [vmem:[%s1 + $0x88] sm:$0xff]
    %v847 = vld [vmem:[%s1 + $0x90] sm:$0xff]
    %v848 = vld [vmem:[%s1 + $0x98] sm:$0xff]
    %v849 = vld [vmem:[%s1 + $0xa0] sm:$0xff]
    %v850 = vld [vmem:[%s1 + $0xa8] sm:$0xff]
    %v851 = vld [vmem:[%s1 + $0xb0] sm:$0xff]
    %v852 = vld [vmem:[%s1 + $0xb8] sm:$0xff]
    %v853 = vld [vmem:[%s1 + $0xc0] sm:$0xff]
    %v854 = vld [vmem:[%s1 + $0xc8] sm:$0xff]
    %v855 = vld [vmem:[%s1 + $0xd0] sm:$0xff]
    %v856 = vld [vmem:[%s1 + $0xd8] sm:$0xff]
    %v857 = vld [vmem:[%s1 + $0xe0] sm:$0xff]
    %v858 = vld [vmem:[%s1 + $0xe8] sm:$0xff]
    %v859 = vld [vmem:[%s1 + $0xf0] sm:$0xff]
    %v860 = vld [vmem:[%s1 + $0xf8] sm:$0xff]
    %v861 = vld [vmem:[%s1 + $0x100] sm:$0xff]
    %v862 = vld [vmem:[%s1 + $0x108] sm:$0xff]
    %v863 = vld [vmem:[%s1 + $0x110] sm:$0xff]
    %v864 = vld [vmem:[%s1 + $0x118] sm:$0xff]
    %v865 = vld [vmem:[%s1 + $0x120] sm:$0xff]
    %v866 = vld [vmem:[%s1 + $0x128] sm:$0xff]
    %v867 = vld [vmem:[%s1 + $0x130] sm:$0xff]
    %v868 = vld [vmem:[%s1 + $0x138] sm:$0xff]
    %v869 = vld [vmem:[%s1 + $0x140] sm:$0xff]
    %v870 = vld [vmem:[%s1 + $0x148] sm:$0xff]
    %v871 = vld [vmem:[%s1 + $0x150] sm:$0xff]
    %v872 = vld [vmem:[%s1 + $0x158] sm:$0xff]
    %v873 = vld [vmem:[%s1 + $0x160] sm:$0xff]
    %v874 = vld [vmem:[%s1 + $0x168] sm:$0xff]
    %v875 = vld [vmem:[%s1 + $0x170] sm:$0xff]
    %v876 = vld [vmem:[%s1 + $0x178] sm:$0xff]
    %v877 = vld [vmem:[%s1 + $0x180] sm:$0xff]
    %v878 = vld [vmem:[%s1 + $0x188] sm:$0xff]
    %v879 = vld [vmem:[%s1 + $0x190] sm:$0xff]
    %v880 = vld [vmem:[%s1 + $0x198] sm:$0xff]
    %v881 = vld [vmem:[%s1 + $0x1a0] sm:$0xff]
    %v882 = vld [vmem:[%s1 + $0x1a8] sm:$0xff]
    %v883 = vld [vmem:[%s1 + $0x1b0] sm:$0xff]
    %v884 = vld [vmem:[%s1 + $0x1b8] sm:$0xff]
    %v885 = vld [vmem:[%s1 + $0x1c0] sm:$0xff]
    %v886 = vld [vmem:[%s1 + $0x1c8] sm:$0xff]
    %v887 = vld [vmem:[%s1 + $0x1d0] sm:$0xff]
    %v888 = vld [vmem:[%s1 + $0x1d8] sm:$0xff]
    %v889 = vld [vmem:[%s1 + $0x1e0] sm:$0xff]
    %v890 = vld [vmem:[%s1 + $0x1e8] sm:$0xff]
    %v891 = vld [vmem:[%s1 + $0x1f0] sm:$0xff]
    %v892 = vld [vmem:[%s1 + $0x1f8] sm:$0xff]
    %893 = vmatpush.msra.mxu0 %v859
    %894 = vmatpush.msra.mxu0 %v857
    %895 = vmatpush.msra.mxu0 %v855
    %896 = vmatpush.msra.mxu0 %v853
    %897 = vmatpush.msra.mxu0 %v851
    %898 = vmatpush.msra.mxu0 %v849
    %899 = vmatpush.msra.mxu0 %v847
    %900 = vmatpush.msra.mxu0 %v845
    %901 = vmatpush.msra.mxu0 %v843
    %902 = vmatpush.msra.mxu0 %v841
    %903 = vmatpush.msra.mxu0 %v839
    %904 = vmatpush.msra.mxu0 %v837
    %905 = vmatpush.msra.mxu0 %v835
    %906 = vmatpush.msra.mxu0 %v833
    %907 = vmatpush.msra.mxu0 %v831
    %908 = vmatpush.msra.mxu0 %v829
    %909 = vmatmul.f32.gmra.mxu0 %v821
    %v910 = vpop.f32.mrf.mxu0
    %v911 = vadd.f32 %v60, %v910
    %912 = vmatmul.f32.gmra.mxu0 %v823
    %v913 = vpop.f32.mrf.mxu0
    %v914 = vadd.f32 %v60, %v913
    %915 = vmatmul.f32.gmra.mxu0 %v825
    %v916 = vpop.f32.mrf.mxu0
    %v917 = vadd.f32 %v60, %v916
    %918 = vmatmul.f32.gmra.mxu0 %v827
    %v919 = vpop.f32.mrf.mxu0
    %v920 = vadd.f32 %v60, %v919
    %921 = vdwg.mxu0
    %922 = vmatpush.msra.mxu0 %v891
    %923 = vmatpush.msra.mxu0 %v889
    %924 = vmatpush.msra.mxu0 %v887
    %925 = vmatpush.msra.mxu0 %v885
    %926 = vmatpush.msra.mxu0 %v883
    %927 = vmatpush.msra.mxu0 %v881
    %928 = vmatpush.msra.mxu0 %v879
    %929 = vmatpush.msra.mxu0 %v877
    %930 = vmatpush.msra.mxu0 %v875
    %931 = vmatpush.msra.mxu0 %v873
    %932 = vmatpush.msra.mxu0 %v871
    %933 = vmatpush.msra.mxu0 %v869
    %934 = vmatpush.msra.mxu0 %v867
    %935 = vmatpush.msra.mxu0 %v865
    %936 = vmatpush.msra.mxu0 %v863
    %937 = vmatpush.msra.mxu0 %v861
    %938 = vmatmul.f32.gmra.mxu0 %v822
    %v939 = vpop.f32.mrf.mxu0
    %v940 = vadd.f32 %v911, %v939
    %941 = vmatmul.f32.gmra.mxu0 %v824
    %v942 = vpop.f32.mrf.mxu0
    %v943 = vadd.f32 %v914, %v942
    %944 = vmatmul.f32.gmra.mxu0 %v826
    %v945 = vpop.f32.mrf.mxu0
    %v946 = vadd.f32 %v917, %v945
    %947 = vmatmul.f32.gmra.mxu0 %v828
    %v948 = vpop.f32.mrf.mxu0
    %v949 = vadd.f32 %v920, %v948
    %950 = vdwg.mxu0
    %951 = vmatpush.msra.mxu0 %v860
    %952 = vmatpush.msra.mxu0 %v858
    %953 = vmatpush.msra.mxu0 %v856
    %954 = vmatpush.msra.mxu0 %v854
    %955 = vmatpush.msra.mxu0 %v852
    %956 = vmatpush.msra.mxu0 %v850
    %957 = vmatpush.msra.mxu0 %v848
    %958 = vmatpush.msra.mxu0 %v846
    %959 = vmatpush.msra.mxu0 %v844
    %960 = vmatpush.msra.mxu0 %v842
    %961 = vmatpush.msra.mxu0 %v840
    %962 = vmatpush.msra.mxu0 %v838
    %963 = vmatpush.msra.mxu0 %v836
    %964 = vmatpush.msra.mxu0 %v834
    %965 = vmatpush.msra.mxu0 %v832
    %966 = vmatpush.msra.mxu0 %v830
    %967 = vmatmul.f32.gmra.mxu0 %v821
    %v968 = vpop.f32.mrf.mxu0
    %v969 = vadd.f32 %v61, %v968
    %970 = vmatmul.f32.gmra.mxu0 %v823
    %v971 = vpop.f32.mrf.mxu0
    %v972 = vadd.f32 %v61, %v971
    %973 = vmatmul.f32.gmra.mxu0 %v825
    %v974 = vpop.f32.mrf.mxu0
    %v975 = vadd.f32 %v61, %v974
    %976 = vmatmul.f32.gmra.mxu0 %v827
    %v977 = vpop.f32.mrf.mxu0
    %v978 = vadd.f32 %v61, %v977
    %979 = vdwg.mxu0
    %980 = vmatpush.msra.mxu0 %v892
    %981 = vmatpush.msra.mxu0 %v890
    %982 = vmatpush.msra.mxu0 %v888
    %983 = vmatpush.msra.mxu0 %v886
    %984 = vmatpush.msra.mxu0 %v884
    %985 = vmatpush.msra.mxu0 %v882
    %986 = vmatpush.msra.mxu0 %v880
    %987 = vmatpush.msra.mxu0 %v878
    %988 = vmatpush.msra.mxu0 %v876
    %989 = vmatpush.msra.mxu0 %v874
    %990 = vmatpush.msra.mxu0 %v872
    %991 = vmatpush.msra.mxu0 %v870
    %992 = vmatpush.msra.mxu0 %v868
    %993 = vmatpush.msra.mxu0 %v866
    %994 = vmatpush.msra.mxu0 %v864
    %995 = vmatpush.msra.mxu0 %v862
    %996 = vmatmul.f32.gmra.mxu0 %v822
    %v997 = vpop.f32.mrf.mxu0
    %v998 = vadd.f32 %v969, %v997
    %999 = vmatmul.f32.gmra.mxu0 %v824
    %v1000 = vpop.f32.mrf.mxu0
    %v1001 = vadd.f32 %v972, %v1000
    %1002 = vmatmul.f32.gmra.mxu0 %v826
    %v1003 = vpop.f32.mrf.mxu0
    %v1004 = vadd.f32 %v975, %v1003
    %1005 = vmatmul.f32.gmra.mxu0 %v828
    %v1006 = vpop.f32.mrf.mxu0
    %v1007 = vadd.f32 %v978, %v1006
    %1008 = vdwg.mxu0
    %vm1009 = vcmp.gt.f32.partialorder %v940, 0.0
    %vm1010 = vcmp.gt.f32.partialorder %v998, 0.0
    %vm1011 = vcmp.gt.f32.partialorder %v943, 0.0
    %vm1012 = vcmp.gt.f32.partialorder %v1001, 0.0
    %vm1013 = vcmp.gt.f32.partialorder %v946, 0.0
    %vm1014 = vcmp.gt.f32.partialorder %v1004, 0.0
    %vm1015 = vcmp.gt.f32.partialorder %v949, 0.0
    %vm1016 = vcmp.gt.f32.partialorder %v1007, 0.0
    %v1017 = vmin.f32 %v940, 0.0
    %v1018 = vmin.f32 %v998, 0.0
    %v1019 = vmin.f32 %v943, 0.0
    %v1020 = vmin.f32 %v1001, 0.0
    %v1021 = vmin.f32 %v946, 0.0
    %v1022 = vmin.f32 %v1004, 0.0
    %v1023 = vmin.f32 %v949, 0.0
    %v1024 = vmin.f32 %v1007, 0.0
    %v1025 = vmul.f32 %v1017, 1.442695
    %v1026 = vpow.pop %v1025
    %v1027 = vmul.f32 %v1018, 1.442695
    %v1028 = vpow.pop %v1027
    %v1029 = vmul.f32 %v1019, 1.442695
    %v1030 = vpow.pop %v1029
    %v1031 = vmul.f32 %v1020, 1.442695
    %v1032 = vpow.pop %v1031
    %v1033 = vmul.f32 %v1021, 1.442695
    %v1034 = vpow.pop %v1033
    %v1035 = vmul.f32 %v1022, 1.442695
    %v1036 = vpow.pop %v1035
    %v1037 = vmul.f32 %v1023, 1.442695
    %v1038 = vpow.pop %v1037
    %v1039 = vmul.f32 %v1024, 1.442695
    %v1040 = vpow.pop %v1039
    %v1041 = vsub.f32 %v1026, 1.0
    %v1042 = vsub.f32 %v1028, 1.0
    %v1043 = vsub.f32 %v1030, 1.0
    %v1044 = vsub.f32 %v1032, 1.0
    %v1045 = vsub.f32 %v1034, 1.0
    %v1046 = vsub.f32 %v1036, 1.0
    %v1047 = vsub.f32 %v1038, 1.0
    %v1048 = vsub.f32 %v1040, 1.0
    %v1049 = vsel %vm1009, %v940, %v1041
    %v1050 = vsel %vm1010, %v998, %v1042
    %v1051 = vsel %vm1011, %v943, %v1043
    %v1052 = vsel %vm1012, %v1001, %v1044
    %v1053 = vsel %vm1013, %v946, %v1045
    %v1054 = vsel %vm1014, %v1004, %v1046
    %v1055 = vsel %vm1015, %v949, %v1047
    %v1056 = vsel %vm1016, %v1007, %v1048
    %1057 = vst [vmem:[#allocation2 + $0x30] sm:$0xff] %v1049
    %1058 = vst [vmem:[#allocation2 + $0x38] sm:$0xff] %v1050
    %1059 = vst [vmem:[#allocation2 + $0xb0] sm:$0xff] %v1051
    %1060 = vst [vmem:[#allocation2 + $0xb8] sm:$0xff] %v1052
    %1061 = vst [vmem:[#allocation2 + $0x130] sm:$0xff] %v1053
    %1062 = vst [vmem:[#allocation2 + $0x138] sm:$0xff] %v1054
    %1063 = vst [vmem:[#allocation2 + $0x1b0] sm:$0xff] %v1055
    %1064 = vst [vmem:[#allocation2 + $0x1b8] sm:$0xff] %v1056
    %v1065 = vld [vmem:[%s0 + $0x18] sm:$0xff]
    %v1066 = vld [vmem:[%s0 + $0x20] sm:$0xff]
    %v1067 = vunpack.c.0.s8 %v1065
    %v1068 = vunpack.c.0.s8 %v1066
    %v1069 = vunpack.c.1.s8 %v1065
    %v1070 = vunpack.c.1.s8 %v1066
    %v1071 = vunpack.c.2.s8 %v1065
    %v1072 = vunpack.c.2.s8 %v1066
    %v1073 = vunpack.c.3.s8 %v1065
    %v1074 = vunpack.c.3.s8 %v1066
    %v1075 = vcvt.s32.f32 %v1067
    %v1076 = vcvt.s32.f32 %v1068
    %v1077 = vcvt.s32.f32 %v1069
    %v1078 = vcvt.s32.f32 %v1070
    %v1079 = vcvt.s32.f32 %v1071
    %v1080 = vcvt.s32.f32 %v1072
    %v1081 = vcvt.s32.f32 %v1073
    %v1082 = vcvt.s32.f32 %v1074
    %vm1083 = vcmp.lt.f32.partialorder %v1075, 0.0
    %vm1084 = vcmp.lt.f32.partialorder %v1076, 0.0
    %vm1085 = vcmp.lt.f32.partialorder %v1077, 0.0
    %vm1086 = vcmp.lt.f32.partialorder %v1078, 0.0
    %vm1087 = vcmp.lt.f32.partialorder %v1079, 0.0
    %vm1088 = vcmp.lt.f32.partialorder %v1080, 0.0
    %vm1089 = vcmp.lt.f32.partialorder %v1081, 0.0
    %vm1090 = vcmp.lt.f32.partialorder %v1082, 0.0
    %v1091 = vadd.f32 %v1075, 256.0
    %v1092 = vadd.f32 %v1076, 256.0
    %v1093 = vadd.f32 %v1077, 256.0
    %v1094 = vadd.f32 %v1078, 256.0
    %v1095 = vadd.f32 %v1079, 256.0
    %v1096 = vadd.f32 %v1080, 256.0
    %v1097 = vadd.f32 %v1081, 256.0
    %v1098 = vadd.f32 %v1082, 256.0
    %v1099 = vsel %vm1083, %v1091, %v1075
    %v1100 = vsel %vm1084, %v1092, %v1076
    %v1101 = vsel %vm1085, %v1093, %v1077
    %v1102 = vsel %vm1086, %v1094, %v1078
    %v1103 = vsel %vm1087, %v1095, %v1079
    %v1104 = vsel %vm1088, %v1096, %v1080
    %v1105 = vsel %vm1089, %v1097, %v1081
    %v1106 = vsel %vm1090, %v1098, %v1082
    %v1107 = vld [vmem:[%s1] sm:$0xff]
    %v1108 = vld [vmem:[%s1 + $0x8] sm:$0xff]
    %v1109 = vld [vmem:[%s1 + $0x10] sm:$0xff]
    %v1110 = vld [vmem:[%s1 + $0x18] sm:$0xff]
    %v1111 = vld [vmem:[%s1 + $0x20] sm:$0xff]
    %v1112 = vld [vmem:[%s1 + $0x28] sm:$0xff]
    %v1113 = vld [vmem:[%s1 + $0x30] sm:$0xff]
    %v1114 = vld [vmem:[%s1 + $0x38] sm:$0xff]
    %v1115 = vld [vmem:[%s1 + $0x40] sm:$0xff]
    %v1116 = vld [vmem:[%s1 + $0x48] sm:$0xff]
    %v1117 = vld [vmem:[%s1 + $0x50] sm:$0xff]
    %v1118 = vld [vmem:[%s1 + $0x58] sm:$0xff]
    %v1119 = vld [vmem:[%s1 + $0x60] sm:$0xff]
    %v1120 = vld [vmem:[%s1 + $0x68] sm:$0xff]
    %v1121 = vld [vmem:[%s1 + $0x70] sm:$0xff]
    %v1122 = vld [vmem:[%s1 + $0x78] sm:$0xff]
    %v1123 = vld [vmem:[%s1 + $0x80] sm:$0xff]
    %v1124 = vld [vmem:[%s1 + $0x88] sm:$0xff]
    %v1125 = vld [vmem:[%s1 + $0x90] sm:$0xff]
    %v1126 = vld [vmem:[%s1 + $0x98] sm:$0xff]
    %v1127 = vld [vmem:[%s1 + $0xa0] sm:$0xff]
    %v1128 = vld [vmem:[%s1 + $0xa8] sm:$0xff]
    %v1129 = vld [vmem:[%s1 + $0xb0] sm:$0xff]
    %v1130 = vld [vmem:[%s1 + $0xb8] sm:$0xff]
    %v1131 = vld [vmem:[%s1 + $0xc0] sm:$0xff]
    %v1132 = vld [vmem:[%s1 + $0xc8] sm:$0xff]
    %v1133 = vld [vmem:[%s1 + $0xd0] sm:$0xff]
    %v1134 = vld [vmem:[%s1 + $0xd8] sm:$0xff]
    %v1135 = vld [vmem:[%s1 + $0xe0] sm:$0xff]
    %v1136 = vld [vmem:[%s1 + $0xe8] sm:$0xff]
    %v1137 = vld [vmem:[%s1 + $0xf0] sm:$0xff]
    %v1138 = vld [vmem:[%s1 + $0xf8] sm:$0xff]
    %v1139 = vld [vmem:[%s1 + $0x100] sm:$0xff]
    %v1140 = vld [vmem:[%s1 + $0x108] sm:$0xff]
    %v1141 = vld [vmem:[%s1 + $0x110] sm:$0xff]
    %v1142 = vld [vmem:[%s1 + $0x118] sm:$0xff]
    %v1143 = vld [vmem:[%s1 + $0x120] sm:$0xff]
    %v1144 = vld [vmem:[%s1 + $0x128] sm:$0xff]
    %v1145 = vld [vmem:[%s1 + $0x130] sm:$0xff]
    %v1146 = vld [vmem:[%s1 + $0x138] sm:$0xff]
    %v1147 = vld [vmem:[%s1 + $0x140] sm:$0xff]
    %v1148 = vld [vmem:[%s1 + $0x148] sm:$0xff]
    %v1149 = vld [vmem:[%s1 + $0x150] sm:$0xff]
    %v1150 = vld [vmem:[%s1 + $0x158] sm:$0xff]
    %v1151 = vld [vmem:[%s1 + $0x160] sm:$0xff]
    %v1152 = vld [vmem:[%s1 + $0x168] sm:$0xff]
    %v1153 = vld [vmem:[%s1 + $0x170] sm:$0xff]
    %v1154 = vld [vmem:[%s1 + $0x178] sm:$0xff]
    %v1155 = vld [vmem:[%s1 + $0x180] sm:$0xff]
    %v1156 = vld [vmem:[%s1 + $0x188] sm:$0xff]
    %v1157 = vld [vmem:[%s1 + $0x190] sm:$0xff]
    %v1158 = vld [vmem:[%s1 + $0x198] sm:$0xff]
    %v1159 = vld [vmem:[%s1 + $0x1a0] sm:$0xff]
    %v1160 = vld [vmem:[%s1 + $0x1a8] sm:$0xff]
    %v1161 = vld [vmem:[%s1 + $0x1b0] sm:$0xff]
    %v1162 = vld [vmem:[%s1 + $0x1b8] sm:$0xff]
    %v1163 = vld [vmem:[%s1 + $0x1c0] sm:$0xff]
    %v1164 = vld [vmem:[%s1 + $0x1c8] sm:$0xff]
    %v1165 = vld [vmem:[%s1 + $0x1d0] sm:$0xff]
    %v1166 = vld [vmem:[%s1 + $0x1d8] sm:$0xff]
    %v1167 = vld [vmem:[%s1 + $0x1e0] sm:$0xff]
    %v1168 = vld [vmem:[%s1 + $0x1e8] sm:$0xff]
    %v1169 = vld [vmem:[%s1 + $0x1f0] sm:$0xff]
    %v1170 = vld [vmem:[%s1 + $0x1f8] sm:$0xff]
    %1171 = vmatpush.msra.mxu0 %v1137
    %1172 = vmatpush.msra.mxu0 %v1135
    %1173 = vmatpush.msra.mxu0 %v1133
    %1174 = vmatpush.msra.mxu0 %v1131
    %1175 = vmatpush.msra.mxu0 %v1129
    %1176 = vmatpush.msra.mxu0 %v1127
    %1177 = vmatpush.msra.mxu0 %v1125
    %1178 = vmatpush.msra.mxu0 %v1123
    %1179 = vmatpush.msra.mxu0 %v1121
    %1180 = vmatpush.msra.mxu0 %v1119
    %1181 = vmatpush.msra.mxu0 %v1117
    %1182 = vmatpush.msra.mxu0 %v1115
    %1183 = vmatpush.msra.mxu0 %v1113
    %1184 = vmatpush.msra.mxu0 %v1111
    %1185 = vmatpush.msra.mxu0 %v1109
    %1186 = vmatpush.msra.mxu0 %v1107
    %1187 = vmatmul.f32.gmra.mxu0 %v1099
    %v1188 = vpop.f32.mrf.mxu0
    %v1189 = vadd.f32 %v60, %v1188
    %1190 = vmatmul.f32.gmra.mxu0 %v1101
    %v1191 = vpop.f32.mrf.mxu0
    %v1192 = vadd.f32 %v60, %v1191
    %1193 = vmatmul.f32.gmra.mxu0 %v1103
    %v1194 = vpop.f32.mrf.mxu0
    %v1195 = vadd.f32 %v60, %v1194
    %1196 = vmatmul.f32.gmra.mxu0 %v1105
    %v1197 = vpop.f32.mrf.mxu0
    %v1198 = vadd.f32 %v60, %v1197
    %1199 = vdwg.mxu0
    %1200 = vmatpush.msra.mxu0 %v1169
    %1201 = vmatpush.msra.mxu0 %v1167
    %1202 = vmatpush.msra.mxu0 %v1165
    %1203 = vmatpush.msra.mxu0 %v1163
    %1204 = vmatpush.msra.mxu0 %v1161
    %1205 = vmatpush.msra.mxu0 %v1159
    %1206 = vmatpush.msra.mxu0 %v1157
    %1207 = vmatpush.msra.mxu0 %v1155
    %1208 = vmatpush.msra.mxu0 %v1153
    %1209 = vmatpush.msra.mxu0 %v1151
    %1210 = vmatpush.msra.mxu0 %v1149
    %1211 = vmatpush.msra.mxu0 %v1147
    %1212 = vmatpush.msra.mxu0 %v1145
    %1213 = vmatpush.msra.mxu0 %v1143
    %1214 = vmatpush.msra.mxu0 %v1141
    %1215 = vmatpush.msra.mxu0 %v1139
    %1216 = vmatmul.f32.gmra.mxu0 %v1100
    %v1217 = vpop.f32.mrf.mxu0
    %v1218 = vadd.f32 %v1189, %v1217
    %1219 = vmatmul.f32.gmra.mxu0 %v1102
    %v1220 = vpop.f32.mrf.mxu0
    %v1221 = vadd.f32 %v1192, %v1220
    %1222 = vmatmul.f32.gmra.mxu0 %v1104
    %v1223 = vpop.f32.mrf.mxu0
    %v1224 = vadd.f32 %v1195, %v1223
    %1225 = vmatmul.f32.gmra.mxu0 %v1106
    %v1226 = vpop.f32.mrf.mxu0
    %v1227 = vadd.f32 %v1198, %v1226
    %1228 = vdwg.mxu0
    %1229 = vmatpush.msra.mxu0 %v1138
    %1230 = vmatpush.msra.mxu0 %v1136
    %1231 = vmatpush.msra.mxu0 %v1134
    %1232 = vmatpush.msra.mxu0 %v1132
    %1233 = vmatpush.msra.mxu0 %v1130
    %1234 = vmatpush.msra.mxu0 %v1128
    %1235 = vmatpush.msra.mxu0 %v1126
    %1236 = vmatpush.msra.mxu0 %v1124
    %1237 = vmatpush.msra.mxu0 %v1122
    %1238 = vmatpush.msra.mxu0 %v1120
    %1239 = vmatpush.msra.mxu0 %v1118
    %1240 = vmatpush.msra.mxu0 %v1116
    %1241 = vmatpush.msra.mxu0 %v1114
    %1242 = vmatpush.msra.mxu0 %v1112
    %1243 = vmatpush.msra.mxu0 %v1110
    %1244 = vmatpush.msra.mxu0 %v1108
    %1245 = vmatmul.f32.gmra.mxu0 %v1099
    %v1246 = vpop.f32.mrf.mxu0
    %v1247 = vadd.f32 %v61, %v1246
    %1248 = vmatmul.f32.gmra.mxu0 %v1101
    %v1249 = vpop.f32.mrf.mxu0
    %v1250 = vadd.f32 %v61, %v1249
    %1251 = vmatmul.f32.gmra.mxu0 %v1103
    %v1252 = vpop.f32.mrf.mxu0
    %v1253 = vadd.f32 %v61, %v1252
    %1254 = vmatmul.f32.gmra.mxu0 %v1105
    %v1255 = vpop.f32.mrf.mxu0
    %v1256 = vadd.f32 %v61, %v1255
    %1257 = vdwg.mxu0
    %1258 = vmatpush.msra.mxu0 %v1170
    %1259 = vmatpush.msra.mxu0 %v1168
    %1260 = vmatpush.msra.mxu0 %v1166
    %1261 = vmatpush.msra.mxu0 %v1164
    %1262 = vmatpush.msra.mxu0 %v1162
    %1263 = vmatpush.msra.mxu0 %v1160
    %1264 = vmatpush.msra.mxu0 %v1158
    %1265 = vmatpush.msra.mxu0 %v1156
    %1266 = vmatpush.msra.mxu0 %v1154
    %1267 = vmatpush.msra.mxu0 %v1152
    %1268 = vmatpush.msra.mxu0 %v1150
    %1269 = vmatpush.msra.mxu0 %v1148
    %1270 = vmatpush.msra.mxu0 %v1146
    %1271 = vmatpush.msra.mxu0 %v1144
    %1272 = vmatpush.msra.mxu0 %v1142
    %1273 = vmatpush.msra.mxu0 %v1140
    %1274 = vmatmul.f32.gmra.mxu0 %v1100
    %v1275 = vpop.f32.mrf.mxu0
    %v1276 = vadd.f32 %v1247, %v1275
    %1277 = vmatmul.f32.gmra.mxu0 %v1102
    %v1278 = vpop.f32.mrf.mxu0
    %v1279 = vadd.f32 %v1250, %v1278
    %1280 = vmatmul.f32.gmra.mxu0 %v1104
    %v1281 = vpop.f32.mrf.mxu0
    %v1282 = vadd.f32 %v1253, %v1281
    %1283 = vmatmul.f32.gmra.mxu0 %v1106
    %v1284 = vpop.f32.mrf.mxu0
    %v1285 = vadd.f32 %v1256, %v1284
    %1286 = vdwg.mxu0
    %vm1287 = vcmp.gt.f32.partialorder %v1218, 0.0
    %vm1288 = vcmp.gt.f32.partialorder %v1276, 0.0
    %vm1289 = vcmp.gt.f32.partialorder %v1221, 0.0
    %vm1290 = vcmp.gt.f32.partialorder %v1279, 0.0
    %vm1291 = vcmp.gt.f32.partialorder %v1224, 0.0
    %vm1292 = vcmp.gt.f32.partialorder %v1282, 0.0
    %vm1293 = vcmp.gt.f32.partialorder %v1227, 0.0
    %vm1294 = vcmp.gt.f32.partialorder %v1285, 0.0
    %v1295 = vmin.f32 %v1218, 0.0
    %v1296 = vmin.f32 %v1276, 0.0
    %v1297 = vmin.f32 %v1221, 0.0
    %v1298 = vmin.f32 %v1279, 0.0
    %v1299 = vmin.f32 %v1224, 0.0
    %v1300 = vmin.f32 %v1282, 0.0
    %v1301 = vmin.f32 %v1227, 0.0
    %v1302 = vmin.f32 %v1285, 0.0
    %v1303 = vmul.f32 %v1295, 1.442695
    %v1304 = vpow.pop %v1303
    %v1305 = vmul.f32 %v1296, 1.442695
    %v1306 = vpow.pop %v1305
    %v1307 = vmul.f32 %v1297, 1.442695
    %v1308 = vpow.pop %v1307
    %v1309 = vmul.f32 %v1298, 1.442695
    %v1310 = vpow.pop %v1309
    %v1311 = vmul.f32 %v1299, 1.442695
    %v1312 = vpow.pop %v1311
    %v1313 = vmul.f32 %v1300, 1.442695
    %v1314 = vpow.pop %v1313
    %v1315 = vmul.f32 %v1301, 1.442695
    %v1316 = vpow.pop %v1315
    %v1317 = vmul.f32 %v1302, 1.442695
    %v1318 = vpow.pop %v1317
    %v1319 = vsub.f32 %v1304, 1.0
    %v1320 = vsub.f32 %v1306, 1.0
    %v1321 = vsub.f32 %v1308, 1.0
    %v1322 = vsub.f32 %v1310, 1.0
    %v1323 = vsub.f32 %v1312, 1.0
    %v1324 = vsub.f32 %v1314, 1.0
    %v1325 = vsub.f32 %v1316, 1.0
    %v1326 = vsub.f32 %v1318, 1.0
    %v1327 = vsel %vm1287, %v1218, %v1319
    %v1328 = vsel %vm1288, %v1276, %v1320
    %v1329 = vsel %vm1289, %v1221, %v1321
    %v1330 = vsel %vm1290, %v1279, %v1322
    %v1331 = vsel %vm1291, %v1224, %v1323
    %v1332 = vsel %vm1292, %v1282, %v1324
    %v1333 = vsel %vm1293, %v1227, %v1325
    %v1334 = vsel %vm1294, %v1285, %v1326
    %1335 = vst [vmem:[#allocation2 + $0x40] sm:$0xff] %v1327
    %1336 = vst [vmem:[#allocation2 + $0x48] sm:$0xff] %v1328
    %1337 = vst [vmem:[#allocation2 + $0xc0] sm:$0xff] %v1329
    %1338 = vst [vmem:[#allocation2 + $0xc8] sm:$0xff] %v1330
    %1339 = vst [vmem:[#allocation2 + $0x140] sm:$0xff] %v1331
    %1340 = vst [vmem:[#allocation2 + $0x148] sm:$0xff] %v1332
    %1341 = vst [vmem:[#allocation2 + $0x1c0] sm:$0xff] %v1333
    %1342 = vst [vmem:[#allocation2 + $0x1c8] sm:$0xff] %v1334
    %v1343 = vld [vmem:[%s0 + $0x20] sm:$0xff]
    %v1344 = vld [vmem:[%s0 + $0x28] sm:$0xff]
    %v1345 = vunpack.c.0.s8 %v1343
    %v1346 = vunpack.c.0.s8 %v1344
    %v1347 = vunpack.c.1.s8 %v1343
    %v1348 = vunpack.c.1.s8 %v1344
    %v1349 = vunpack.c.2.s8 %v1343
    %v1350 = vunpack.c.2.s8 %v1344
    %v1351 = vunpack.c.3.s8 %v1343
    %v1352 = vunpack.c.3.s8 %v1344
    %v1353 = vcvt.s32.f32 %v1345
    %v1354 = vcvt.s32.f32 %v1346
    %v1355 = vcvt.s32.f32 %v1347
    %v1356 = vcvt.s32.f32 %v1348
    %v1357 = vcvt.s32.f32 %v1349
    %v1358 = vcvt.s32.f32 %v1350
    %v1359 = vcvt.s32.f32 %v1351
    %v1360 = vcvt.s32.f32 %v1352
    %vm1361 = vcmp.lt.f32.partialorder %v1353, 0.0
    %vm1362 = vcmp.lt.f32.partialorder %v1354, 0.0
    %vm1363 = vcmp.lt.f32.partialorder %v1355, 0.0
    %vm1364 = vcmp.lt.f32.partialorder %v1356, 0.0
    %vm1365 = vcmp.lt.f32.partialorder %v1357, 0.0
    %vm1366 = vcmp.lt.f32.partialorder %v1358, 0.0
    %vm1367 = vcmp.lt.f32.partialorder %v1359, 0.0
    %vm1368 = vcmp.lt.f32.partialorder %v1360, 0.0
    %v1369 = vadd.f32 %v1353, 256.0
    %v1370 = vadd.f32 %v1354, 256.0
    %v1371 = vadd.f32 %v1355, 256.0
    %v1372 = vadd.f32 %v1356, 256.0
    %v1373 = vadd.f32 %v1357, 256.0
    %v1374 = vadd.f32 %v1358, 256.0
    %v1375 = vadd.f32 %v1359, 256.0
    %v1376 = vadd.f32 %v1360, 256.0
    %v1377 = vsel %vm1361, %v1369, %v1353
    %v1378 = vsel %vm1362, %v1370, %v1354
    %v1379 = vsel %vm1363, %v1371, %v1355
    %v1380 = vsel %vm1364, %v1372, %v1356
    %v1381 = vsel %vm1365, %v1373, %v1357
    %v1382 = vsel %vm1366, %v1374, %v1358
    %v1383 = vsel %vm1367, %v1375, %v1359
    %v1384 = vsel %vm1368, %v1376, %v1360
    %v1385 = vld [vmem:[%s1] sm:$0xff]
    %v1386 = vld [vmem:[%s1 + $0x8] sm:$0xff]
    %v1387 = vld [vmem:[%s1 + $0x10] sm:$0xff]
    %v1388 = vld [vmem:[%s1 + $0x18] sm:$0xff]
    %v1389 = vld [vmem:[%s1 + $0x20] sm:$0xff]
    %v1390 = vld [vmem:[%s1 + $0x28] sm:$0xff]
    %v1391 = vld [vmem:[%s1 + $0x30] sm:$0xff]
    %v1392 = vld [vmem:[%s1 + $0x38] sm:$0xff]
    %v1393 = vld [vmem:[%s1 + $0x40] sm:$0xff]
    %v1394 = vld [vmem:[%s1 + $0x48] sm:$0xff]
    %v1395 = vld [vmem:[%s1 + $0x50] sm:$0xff]
    %v1396 = vld [vmem:[%s1 + $0x58] sm:$0xff]
    %v1397 = vld [vmem:[%s1 + $0x60] sm:$0xff]
    %v1398 = vld [vmem:[%s1 + $0x68] sm:$0xff]
    %v1399 = vld [vmem:[%s1 + $0x70] sm:$0xff]
    %v1400 = vld [vmem:[%s1 + $0x78] sm:$0xff]
    %v1401 = vld [vmem:[%s1 + $0x80] sm:$0xff]
    %v1402 = vld [vmem:[%s1 + $0x88] sm:$0xff]
    %v1403 = vld [vmem:[%s1 + $0x90] sm:$0xff]
    %v1404 = vld [vmem:[%s1 + $0x98] sm:$0xff]
    %v1405 = vld [vmem:[%s1 + $0xa0] sm:$0xff]
    %v1406 = vld [vmem:[%s1 + $0xa8] sm:$0xff]
    %v1407 = vld [vmem:[%s1 + $0xb0] sm:$0xff]
    %v1408 = vld [vmem:[%s1 + $0xb8] sm:$0xff]
    %v1409 = vld [vmem:[%s1 + $0xc0] sm:$0xff]
    %v1410 = vld [vmem:[%s1 + $0xc8] sm:$0xff]
    %v1411 = vld [vmem:[%s1 + $0xd0] sm:$0xff]
    %v1412 = vld [vmem:[%s1 + $0xd8] sm:$0xff]
    %v1413 = vld [vmem:[%s1 + $0xe0] sm:$0xff]
    %v1414 = vld [vmem:[%s1 + $0xe8] sm:$0xff]
    %v1415 = vld [vmem:[%s1 + $0xf0] sm:$0xff]
    %v1416 = vld [vmem:[%s1 + $0xf8] sm:$0xff]
    %v1417 = vld [vmem:[%s1 + $0x100] sm:$0xff]
    %v1418 = vld [vmem:[%s1 + $0x108] sm:$0xff]
    %v1419 = vld [vmem:[%s1 + $0x110] sm:$0xff]
    %v1420 = vld [vmem:[%s1 + $0x118] sm:$0xff]
    %v1421 = vld [vmem:[%s1 + $0x120] sm:$0xff]
    %v1422 = vld [vmem:[%s1 + $0x128] sm:$0xff]
    %v1423 = vld [vmem:[%s1 + $0x130] sm:$0xff]
    %v1424 = vld [vmem:[%s1 + $0x138] sm:$0xff]
    %v1425 = vld [vmem:[%s1 + $0x140] sm:$0xff]
    %v1426 = vld [vmem:[%s1 + $0x148] sm:$0xff]
    %v1427 = vld [vmem:[%s1 + $0x150] sm:$0xff]
    %v1428 = vld [vmem:[%s1 + $0x158] sm:$0xff]
    %v1429 = vld [vmem:[%s1 + $0x160] sm:$0xff]
    %v1430 = vld [vmem:[%s1 + $0x168] sm:$0xff]
    %v1431 = vld [vmem:[%s1 + $0x170] sm:$0xff]
    %v1432 = vld [vmem:[%s1 + $0x178] sm:$0xff]
    %v1433 = vld [vmem:[%s1 + $0x180] sm:$0xff]
    %v1434 = vld [vmem:[%s1 + $0x188] sm:$0xff]
    %v1435 = vld [vmem:[%s1 + $0x190] sm:$0xff]
    %v1436 = vld [vmem:[%s1 + $0x198] sm:$0xff]
    %v1437 = vld [vmem:[%s1 + $0x1a0] sm:$0xff]
    %v1438 = vld [vmem:[%s1 + $0x1a8] sm:$0xff]
    %v1439 = vld [vmem:[%s1 + $0x1b0] sm:$0xff]
    %v1440 = vld [vmem:[%s1 + $0x1b8] sm:$0xff]
    %v1441 = vld [vmem:[%s1 + $0x1c0] sm:$0xff]
    %v1442 = vld [vmem:[%s1 + $0x1c8] sm:$0xff]
    %v1443 = vld [vmem:[%s1 + $0x1d0] sm:$0xff]
    %v1444 = vld [vmem:[%s1 + $0x1d8] sm:$0xff]
    %v1445 = vld [vmem:[%s1 + $0x1e0] sm:$0xff]
    %v1446 = vld [vmem:[%s1 + $0x1e8] sm:$0xff]
    %v1447 = vld [vmem:[%s1 + $0x1f0] sm:$0xff]
    %v1448 = vld [vmem:[%s1 + $0x1f8] sm:$0xff]
    %1449 = vmatpush.msra.mxu0 %v1415
    %1450 = vmatpush.msra.mxu0 %v1413
    %1451 = vmatpush.msra.mxu0 %v1411
    %1452 = vmatpush.msra.mxu0 %v1409
    %1453 = vmatpush.msra.mxu0 %v1407
    %1454 = vmatpush.msra.mxu0 %v1405
    %1455 = vmatpush.msra.mxu0 %v1403
    %1456 = vmatpush.msra.mxu0 %v1401
    %1457 = vmatpush.msra.mxu0 %v1399
    %1458 = vmatpush.msra.mxu0 %v1397
    %1459 = vmatpush.msra.mxu0 %v1395
    %1460 = vmatpush.msra.mxu0 %v1393
    %1461 = vmatpush.msra.mxu0 %v1391
    %1462 = vmatpush.msra.mxu0 %v1389
    %1463 = vmatpush.msra.mxu0 %v1387
    %1464 = vmatpush.msra.mxu0 %v1385
    %1465 = vmatmul.f32.gmra.mxu0 %v1377
    %v1466 = vpop.f32.mrf.mxu0
    %v1467 = vadd.f32 %v60, %v1466
    %1468 = vmatmul.f32.gmra.mxu0 %v1379
    %v1469 = vpop.f32.mrf.mxu0
    %v1470 = vadd.f32 %v60, %v1469
    %1471 = vmatmul.f32.gmra.mxu0 %v1381
    %v1472 = vpop.f32.mrf.mxu0
    %v1473 = vadd.f32 %v60, %v1472
    %1474 = vmatmul.f32.gmra.mxu0 %v1383
    %v1475 = vpop.f32.mrf.mxu0
    %v1476 = vadd.f32 %v60, %v1475
    %1477 = vdwg.mxu0
    %1478 = vmatpush.msra.mxu0 %v1447
    %1479 = vmatpush.msra.mxu0 %v1445
    %1480 = vmatpush.msra.mxu0 %v1443
    %1481 = vmatpush.msra.mxu0 %v1441
    %1482 = vmatpush.msra.mxu0 %v1439
    %1483 = vmatpush.msra.mxu0 %v1437
    %1484 = vmatpush.msra.mxu0 %v1435
    %1485 = vmatpush.msra.mxu0 %v1433
    %1486 = vmatpush.msra.mxu0 %v1431
    %1487 = vmatpush.msra.mxu0 %v1429
    %1488 = vmatpush.msra.mxu0 %v1427
    %1489 = vmatpush.msra.mxu0 %v1425
    %1490 = vmatpush.msra.mxu0 %v1423
    %1491 = vmatpush.msra.mxu0 %v1421
    %1492 = vmatpush.msra.mxu0 %v1419
    %1493 = vmatpush.msra.mxu0 %v1417
    %1494 = vmatmul.f32.gmra.mxu0 %v1378
    %v1495 = vpop.f32.mrf.mxu0
    %v1496 = vadd.f32 %v1467, %v1495
    %1497 = vmatmul.f32.gmra.mxu0 %v1380
    %v1498 = vpop.f32.mrf.mxu0
    %v1499 = vadd.f32 %v1470, %v1498
    %1500 = vmatmul.f32.gmra.mxu0 %v1382
    %v1501 = vpop.f32.mrf.mxu0
    %v1502 = vadd.f32 %v1473, %v1501
    %1503 = vmatmul.f32.gmra.mxu0 %v1384
    %v1504 = vpop.f32.mrf.mxu0
    %v1505 = vadd.f32 %v1476, %v1504
    %1506 = vdwg.mxu0
    %1507 = vmatpush.msra.mxu0 %v1416
    %1508 = vmatpush.msra.mxu0 %v1414
    %1509 = vmatpush.msra.mxu0 %v1412
    %1510 = vmatpush.msra.mxu0 %v1410
    %1511 = vmatpush.msra.mxu0 %v1408
    %1512 = vmatpush.msra.mxu0 %v1406
    %1513 = vmatpush.msra.mxu0 %v1404
    %1514 = vmatpush.msra.mxu0 %v1402
    %1515 = vmatpush.msra.mxu0 %v1400
    %1516 = vmatpush.msra.mxu0 %v1398
    %1517 = vmatpush.msra.mxu0 %v1396
    %1518 = vmatpush.msra.mxu0 %v1394
    %1519 = vmatpush.msra.mxu0 %v1392
    %1520 = vmatpush.msra.mxu0 %v1390
    %1521 = vmatpush.msra.mxu0 %v1388
    %1522 = vmatpush.msra.mxu0 %v1386
    %1523 = vmatmul.f32.gmra.mxu0 %v1377
    %v1524 = vpop.f32.mrf.mxu0
    %v1525 = vadd.f32 %v61, %v1524
    %1526 = vmatmul.f32.gmra.mxu0 %v1379
    %v1527 = vpop.f32.mrf.mxu0
    %v1528 = vadd.f32 %v61, %v1527
    %1529 = vmatmul.f32.gmra.mxu0 %v1381
    %v1530 = vpop.f32.mrf.mxu0
    %v1531 = vadd.f32 %v61, %v1530
    %1532 = vmatmul.f32.gmra.mxu0 %v1383
    %v1533 = vpop.f32.mrf.mxu0
    %v1534 = vadd.f32 %v61, %v1533
    %1535 = vdwg.mxu0
    %1536 = vmatpush.msra.mxu0 %v1448
    %1537 = vmatpush.msra.mxu0 %v1446
    %1538 = vmatpush.msra.mxu0 %v1444
    %1539 = vmatpush.msra.mxu0 %v1442
    %1540 = vmatpush.msra.mxu0 %v1440
    %1541 = vmatpush.msra.mxu0 %v1438
    %1542 = vmatpush.msra.mxu0 %v1436
    %1543 = vmatpush.msra.mxu0 %v1434
    %1544 = vmatpush.msra.mxu0 %v1432
    %1545 = vmatpush.msra.mxu0 %v1430
    %1546 = vmatpush.msra.mxu0 %v1428
    %1547 = vmatpush.msra.mxu0 %v1426
    %1548 = vmatpush.msra.mxu0 %v1424
    %1549 = vmatpush.msra.mxu0 %v1422
    %1550 = vmatpush.msra.mxu0 %v1420
    %1551 = vmatpush.msra.mxu0 %v1418
    %1552 = vmatmul.f32.gmra.mxu0 %v1378
    %v1553 = vpop.f32.mrf.mxu0
    %v1554 = vadd.f32 %v1525, %v1553
    %1555 = vmatmul.f32.gmra.mxu0 %v1380
    %v1556 = vpop.f32.mrf.mxu0
    %v1557 = vadd.f32 %v1528, %v1556
    %1558 = vmatmul.f32.gmra.mxu0 %v1382
    %v1559 = vpop.f32.mrf.mxu0
    %v1560 = vadd.f32 %v1531, %v1559
    %1561 = vmatmul.f32.gmra.mxu0 %v1384
    %v1562 = vpop.f32.mrf.mxu0
    %v1563 = vadd.f32 %v1534, %v1562
    %1564 = vdwg.mxu0
    %vm1565 = vcmp.gt.f32.partialorder %v1496, 0.0
    %vm1566 = vcmp.gt.f32.partialorder %v1554, 0.0
    %vm1567 = vcmp.gt.f32.partialorder %v1499, 0.0
    %vm1568 = vcmp.gt.f32.partialorder %v1557, 0.0
    %vm1569 = vcmp.gt.f32.partialorder %v1502, 0.0
    %vm1570 = vcmp.gt.f32.partialorder %v1560, 0.0
    %vm1571 = vcmp.gt.f32.partialorder %v1505, 0.0
    %vm1572 = vcmp.gt.f32.partialorder %v1563, 0.0
    %v1573 = vmin.f32 %v1496, 0.0
    %v1574 = vmin.f32 %v1554, 0.0
    %v1575 = vmin.f32 %v1499, 0.0
    %v1576 = vmin.f32 %v1557, 0.0
    %v1577 = vmin.f32 %v1502, 0.0
    %v1578 = vmin.f32 %v1560, 0.0
    %v1579 = vmin.f32 %v1505, 0.0
    %v1580 = vmin.f32 %v1563, 0.0
    %v1581 = vmul.f32 %v1573, 1.442695
    %v1582 = vpow.pop %v1581
    %v1583 = vmul.f32 %v1574, 1.442695
    %v1584 = vpow.pop %v1583
    %v1585 = vmul.f32 %v1575, 1.442695
    %v1586 = vpow.pop %v1585
    %v1587 = vmul.f32 %v1576, 1.442695
    %v1588 = vpow.pop %v1587
    %v1589 = vmul.f32 %v1577, 1.442695
    %v1590 = vpow.pop %v1589
    %v1591 = vmul.f32 %v1578, 1.442695
    %v1592 = vpow.pop %v1591
    %v1593 = vmul.f32 %v1579, 1.442695
    %v1594 = vpow.pop %v1593
    %v1595 = vmul.f32 %v1580, 1.442695
    %v1596 = vpow.pop %v1595
    %v1597 = vsub.f32 %v1582, 1.0
    %v1598 = vsub.f32 %v1584, 1.0
    %v1599 = vsub.f32 %v1586, 1.0
    %v1600 = vsub.f32 %v1588, 1.0
    %v1601 = vsub.f32 %v1590, 1.0
    %v1602 = vsub.f32 %v1592, 1.0
    %v1603 = vsub.f32 %v1594, 1.0
    %v1604 = vsub.f32 %v1596, 1.0
    %v1605 = vsel %vm1565, %v1496, %v1597
    %v1606 = vsel %vm1566, %v1554, %v1598
    %v1607 = vsel %vm1567, %v1499, %v1599
    %v1608 = vsel %vm1568, %v1557, %v1600
    %v1609 = vsel %vm1569, %v1502, %v1601
    %v1610 = vsel %vm1570, %v1560, %v1602
    %v1611 = vsel %vm1571, %v1505, %v1603
    %v1612 = vsel %vm1572, %v1563, %v1604
    %1613 = vst [vmem:[#allocation2 + $0x50] sm:$0xff] %v1605
    %1614 = vst [vmem:[#allocation2 + $0x58] sm:$0xff] %v1606
    %1615 = vst [vmem:[#allocation2 + $0xd0] sm:$0xff] %v1607
    %1616 = vst [vmem:[#allocation2 + $0xd8] sm:$0xff] %v1608
    %1617 = vst [vmem:[#allocation2 + $0x150] sm:$0xff] %v1609
    %1618 = vst [vmem:[#allocation2 + $0x158] sm:$0xff] %v1610
    %1619 = vst [vmem:[#allocation2 + $0x1d0] sm:$0xff] %v1611
    %1620 = vst [vmem:[#allocation2 + $0x1d8] sm:$0xff] %v1612
    %v1621 = vld [vmem:[%s0 + $0x28] sm:$0xff]
    %v1622 = vld [vmem:[%s0 + $0x30] sm:$0xff]
    %v1623 = vunpack.c.0.s8 %v1621
    %v1624 = vunpack.c.0.s8 %v1622
    %v1625 = vunpack.c.1.s8 %v1621
    %v1626 = vunpack.c.1.s8 %v1622
    %v1627 = vunpack.c.2.s8 %v1621
    %v1628 = vunpack.c.2.s8 %v1622
    %v1629 = vunpack.c.3.s8 %v1621
    %v1630 = vunpack.c.3.s8 %v1622
    %v1631 = vcvt.s32.f32 %v1623
    %v1632 = vcvt.s32.f32 %v1624
    %v1633 = vcvt.s32.f32 %v1625
    %v1634 = vcvt.s32.f32 %v1626
    %v1635 = vcvt.s32.f32 %v1627
    %v1636 = vcvt.s32.f32 %v1628
    %v1637 = vcvt.s32.f32 %v1629
    %v1638 = vcvt.s32.f32 %v1630
    %vm1639 = vcmp.lt.f32.partialorder %v1631, 0.0
    %vm1640 = vcmp.lt.f32.partialorder %v1632, 0.0
    %vm1641 = vcmp.lt.f32.partialorder %v1633, 0.0
    %vm1642 = vcmp.lt.f32.partialorder %v1634, 0.0
    %vm1643 = vcmp.lt.f32.partialorder %v1635, 0.0
    %vm1644 = vcmp.lt.f32.partialorder %v1636, 0.0
    %vm1645 = vcmp.lt.f32.partialorder %v1637, 0.0
    %vm1646 = vcmp.lt.f32.partialorder %v1638, 0.0
    %v1647 = vadd.f32 %v1631, 256.0
    %v1648 = vadd.f32 %v1632, 256.0
    %v1649 = vadd.f32 %v1633, 256.0
    %v1650 = vadd.f32 %v1634, 256.0
    %v1651 = vadd.f32 %v1635, 256.0
    %v1652 = vadd.f32 %v1636, 256.0
    %v1653 = vadd.f32 %v1637, 256.0
    %v1654 = vadd.f32 %v1638, 256.0
    %v1655 = vsel %vm1639, %v1647, %v1631
    %v1656 = vsel %vm1640, %v1648, %v1632
    %v1657 = vsel %vm1641, %v1649, %v1633
    %v1658 = vsel %vm1642, %v1650, %v1634
    %v1659 = vsel %vm1643, %v1651, %v1635
    %v1660 = vsel %vm1644, %v1652, %v1636
    %v1661 = vsel %vm1645, %v1653, %v1637
    %v1662 = vsel %vm1646, %v1654, %v1638
    %v1663 = vld [vmem:[%s1] sm:$0xff]
    %v1664 = vld [vmem:[%s1 + $0x8] sm:$0xff]
    %v1665 = vld [vmem:[%s1 + $0x10] sm:$0xff]
    %v1666 = vld [vmem:[%s1 + $0x18] sm:$0xff]
    %v1667 = vld [vmem:[%s1 + $0x20] sm:$0xff]
    %v1668 = vld [vmem:[%s1 + $0x28] sm:$0xff]
    %v1669 = vld [vmem:[%s1 + $0x30] sm:$0xff]
    %v1670 = vld [vmem:[%s1 + $0x38] sm:$0xff]
    %v1671 = vld [vmem:[%s1 + $0x40] sm:$0xff]
    %v1672 = vld [vmem:[%s1 + $0x48] sm:$0xff]
    %v1673 = vld [vmem:[%s1 + $0x50] sm:$0xff]
    %v1674 = vld [vmem:[%s1 + $0x58] sm:$0xff]
    %v1675 = vld [vmem:[%s1 + $0x60] sm:$0xff]
    %v1676 = vld [vmem:[%s1 + $0x68] sm:$0xff]
    %v1677 = vld [vmem:[%s1 + $0x70] sm:$0xff]
    %v1678 = vld [vmem:[%s1 + $0x78] sm:$0xff]
    %v1679 = vld [vmem:[%s1 + $0x80] sm:$0xff]
    %v1680 = vld [vmem:[%s1 + $0x88] sm:$0xff]
    %v1681 = vld [vmem:[%s1 + $0x90] sm:$0xff]
    %v1682 = vld [vmem:[%s1 + $0x98] sm:$0xff]
    %v1683 = vld [vmem:[%s1 + $0xa0] sm:$0xff]
    %v1684 = vld [vmem:[%s1 + $0xa8] sm:$0xff]
    %v1685 = vld [vmem:[%s1 + $0xb0] sm:$0xff]
    %v1686 = vld [vmem:[%s1 + $0xb8] sm:$0xff]
    %v1687 = vld [vmem:[%s1 + $0xc0] sm:$0xff]
    %v1688 = vld [vmem:[%s1 + $0xc8] sm:$0xff]
    %v1689 = vld [vmem:[%s1 + $0xd0] sm:$0xff]
    %v1690 = vld [vmem:[%s1 + $0xd8] sm:$0xff]
    %v1691 = vld [vmem:[%s1 + $0xe0] sm:$0xff]
    %v1692 = vld [vmem:[%s1 + $0xe8] sm:$0xff]
    %v1693 = vld [vmem:[%s1 + $0xf0] sm:$0xff]
    %v1694 = vld [vmem:[%s1 + $0xf8] sm:$0xff]
    %v1695 = vld [vmem:[%s1 + $0x100] sm:$0xff]
    %v1696 = vld [vmem:[%s1 + $0x108] sm:$0xff]
    %v1697 = vld [vmem:[%s1 + $0x110] sm:$0xff]
    %v1698 = vld [vmem:[%s1 + $0x118] sm:$0xff]
    %v1699 = vld [vmem:[%s1 + $0x120] sm:$0xff]
    %v1700 = vld [vmem:[%s1 + $0x128] sm:$0xff]
    %v1701 = vld [vmem:[%s1 + $0x130] sm:$0xff]
    %v1702 = vld [vmem:[%s1 + $0x138] sm:$0xff]
    %v1703 = vld [vmem:[%s1 + $0x140] sm:$0xff]
    %v1704 = vld [vmem:[%s1 + $0x148] sm:$0xff]
    %v1705 = vld [vmem:[%s1 + $0x150] sm:$0xff]
    %v1706 = vld [vmem:[%s1 + $0x158] sm:$0xff]
    %v1707 = vld [vmem:[%s1 + $0x160] sm:$0xff]
    %v1708 = vld [vmem:[%s1 + $0x168] sm:$0xff]
    %v1709 = vld [vmem:[%s1 + $0x170] sm:$0xff]
    %v1710 = vld [vmem:[%s1 + $0x178] sm:$0xff]
    %v1711 = vld [vmem:[%s1 + $0x180] sm:$0xff]
    %v1712 = vld [vmem:[%s1 + $0x188] sm:$0xff]
    %v1713 = vld [vmem:[%s1 + $0x190] sm:$0xff]
    %v1714 = vld [vmem:[%s1 + $0x198] sm:$0xff]
    %v1715 = vld [vmem:[%s1 + $0x1a0] sm:$0xff]
    %v1716 = vld [vmem:[%s1 + $0x1a8] sm:$0xff]
    %v1717 = vld [vmem:[%s1 + $0x1b0] sm:$0xff]
    %v1718 = vld [vmem:[%s1 + $0x1b8] sm:$0xff]
    %v1719 = vld [vmem:[%s1 + $0x1c0] sm:$0xff]
    %v1720 = vld [vmem:[%s1 + $0x1c8] sm:$0xff]
    %v1721 = vld [vmem:[%s1 + $0x1d0] sm:$0xff]
    %v1722 = vld [vmem:[%s1 + $0x1d8] sm:$0xff]
    %v1723 = vld [vmem:[%s1 + $0x1e0] sm:$0xff]
    %v1724 = vld [vmem:[%s1 + $0x1e8] sm:$0xff]
    %v1725 = vld [vmem:[%s1 + $0x1f0] sm:$0xff]
    %v1726 = vld [vmem:[%s1 + $0x1f8] sm:$0xff]
    %1727 = vmatpush.msra.mxu0 %v1693
    %1728 = vmatpush.msra.mxu0 %v1691
    %1729 = vmatpush.msra.mxu0 %v1689
    %1730 = vmatpush.msra.mxu0 %v1687
    %1731 = vmatpush.msra.mxu0 %v1685
    %1732 = vmatpush.msra.mxu0 %v1683
    %1733 = vmatpush.msra.mxu0 %v1681
    %1734 = vmatpush.msra.mxu0 %v1679
    %1735 = vmatpush.msra.mxu0 %v1677
    %1736 = vmatpush.msra.mxu0 %v1675
    %1737 = vmatpush.msra.mxu0 %v1673
    %1738 = vmatpush.msra.mxu0 %v1671
    %1739 = vmatpush.msra.mxu0 %v1669
    %1740 = vmatpush.msra.mxu0 %v1667
    %1741 = vmatpush.msra.mxu0 %v1665
    %1742 = vmatpush.msra.mxu0 %v1663
    %1743 = vmatmul.f32.gmra.mxu0 %v1655
    %v1744 = vpop.f32.mrf.mxu0
    %v1745 = vadd.f32 %v60, %v1744
    %1746 = vmatmul.f32.gmra.mxu0 %v1657
    %v1747 = vpop.f32.mrf.mxu0
    %v1748 = vadd.f32 %v60, %v1747
    %1749 = vmatmul.f32.gmra.mxu0 %v1659
    %v1750 = vpop.f32.mrf.mxu0
    %v1751 = vadd.f32 %v60, %v1750
    %1752 = vmatmul.f32.gmra.mxu0 %v1661
    %v1753 = vpop.f32.mrf.mxu0
    %v1754 = vadd.f32 %v60, %v1753
    %1755 = vdwg.mxu0
    %1756 = vmatpush.msra.mxu0 %v1725
    %1757 = vmatpush.msra.mxu0 %v1723
    %1758 = vmatpush.msra.mxu0 %v1721
    %1759 = vmatpush.msra.mxu0 %v1719
    %1760 = vmatpush.msra.mxu0 %v1717
    %1761 = vmatpush.msra.mxu0 %v1715
    %1762 = vmatpush.msra.mxu0 %v1713
    %1763 = vmatpush.msra.mxu0 %v1711
    %1764 = vmatpush.msra.mxu0 %v1709
    %1765 = vmatpush.msra.mxu0 %v1707
    %1766 = vmatpush.msra.mxu0 %v1705
    %1767 = vmatpush.msra.mxu0 %v1703
    %1768 = vmatpush.msra.mxu0 %v1701
    %1769 = vmatpush.msra.mxu0 %v1699
    %1770 = vmatpush.msra.mxu0 %v1697
    %1771 = vmatpush.msra.mxu0 %v1695
    %1772 = vmatmul.f32.gmra.mxu0 %v1656
    %v1773 = vpop.f32.mrf.mxu0
    %v1774 = vadd.f32 %v1745, %v1773
    %1775 = vmatmul.f32.gmra.mxu0 %v1658
    %v1776 = vpop.f32.mrf.mxu0
    %v1777 = vadd.f32 %v1748, %v1776
    %1778 = vmatmul.f32.gmra.mxu0 %v1660
    %v1779 = vpop.f32.mrf.mxu0
    %v1780 = vadd.f32 %v1751, %v1779
    %1781 = vmatmul.f32.gmra.mxu0 %v1662
    %v1782 = vpop.f32.mrf.mxu0
    %v1783 = vadd.f32 %v1754, %v1782
    %1784 = vdwg.mxu0
    %1785 = vmatpush.msra.mxu0 %v1694
    %1786 = vmatpush.msra.mxu0 %v1692
    %1787 = vmatpush.msra.mxu0 %v1690
    %1788 = vmatpush.msra.mxu0 %v1688
    %1789 = vmatpush.msra.mxu0 %v1686
    %1790 = vmatpush.msra.mxu0 %v1684
    %1791 = vmatpush.msra.mxu0 %v1682
    %1792 = vmatpush.msra.mxu0 %v1680
    %1793 = vmatpush.msra.mxu0 %v1678
    %1794 = vmatpush.msra.mxu0 %v1676
    %1795 = vmatpush.msra.mxu0 %v1674
    %1796 = vmatpush.msra.mxu0 %v1672
    %1797 = vmatpush.msra.mxu0 %v1670
    %1798 = vmatpush.msra.mxu0 %v1668
    %1799 = vmatpush.msra.mxu0 %v1666
    %1800 = vmatpush.msra.mxu0 %v1664
    %1801 = vmatmul.f32.gmra.mxu0 %v1655
    %v1802 = vpop.f32.mrf.mxu0
    %v1803 = vadd.f32 %v61, %v1802
    %1804 = vmatmul.f32.gmra.mxu0 %v1657
    %v1805 = vpop.f32.mrf.mxu0
    %v1806 = vadd.f32 %v61, %v1805
    %1807 = vmatmul.f32.gmra.mxu0 %v1659
    %v1808 = vpop.f32.mrf.mxu0
    %v1809 = vadd.f32 %v61, %v1808
    %1810 = vmatmul.f32.gmra.mxu0 %v1661
    %v1811 = vpop.f32.mrf.mxu0
    %v1812 = vadd.f32 %v61, %v1811
    %1813 = vdwg.mxu0
    %1814 = vmatpush.msra.mxu0 %v1726
    %1815 = vmatpush.msra.mxu0 %v1724
    %1816 = vmatpush.msra.mxu0 %v1722
    %1817 = vmatpush.msra.mxu0 %v1720
    %1818 = vmatpush.msra.mxu0 %v1718
    %1819 = vmatpush.msra.mxu0 %v1716
    %1820 = vmatpush.msra.mxu0 %v1714
    %1821 = vmatpush.msra.mxu0 %v1712
    %1822 = vmatpush.msra.mxu0 %v1710
    %1823 = vmatpush.msra.mxu0 %v1708
    %1824 = vmatpush.msra.mxu0 %v1706
    %1825 = vmatpush.msra.mxu0 %v1704
    %1826 = vmatpush.msra.mxu0 %v1702
    %1827 = vmatpush.msra.mxu0 %v1700
    %1828 = vmatpush.msra.mxu0 %v1698
    %1829 = vmatpush.msra.mxu0 %v1696
    %1830 = vmatmul.f32.gmra.mxu0 %v1656
    %v1831 = vpop.f32.mrf.mxu0
    %v1832 = vadd.f32 %v1803, %v1831
    %1833 = vmatmul.f32.gmra.mxu0 %v1658
    %v1834 = vpop.f32.mrf.mxu0
    %v1835 = vadd.f32 %v1806, %v1834
    %1836 = vmatmul.f32.gmra.mxu0 %v1660
    %v1837 = vpop.f32.mrf.mxu0
    %v1838 = vadd.f32 %v1809, %v1837
    %1839 = vmatmul.f32.gmra.mxu0 %v1662
    %v1840 = vpop.f32.mrf.mxu0
    %v1841 = vadd.f32 %v1812, %v1840
    %1842 = vdwg.mxu0
    %vm1843 = vcmp.gt.f32.partialorder %v1774, 0.0
    %vm1844 = vcmp.gt.f32.partialorder %v1832, 0.0
    %vm1845 = vcmp.gt.f32.partialorder %v1777, 0.0
    %vm1846 = vcmp.gt.f32.partialorder %v1835, 0.0
    %vm1847 = vcmp.gt.f32.partialorder %v1780, 0.0
    %vm1848 = vcmp.gt.f32.partialorder %v1838, 0.0
    %vm1849 = vcmp.gt.f32.partialorder %v1783, 0.0
    %vm1850 = vcmp.gt.f32.partialorder %v1841, 0.0
    %v1851 = vmin.f32 %v1774, 0.0
    %v1852 = vmin.f32 %v1832, 0.0
    %v1853 = vmin.f32 %v1777, 0.0
    %v1854 = vmin.f32 %v1835, 0.0
    %v1855 = vmin.f32 %v1780, 0.0
    %v1856 = vmin.f32 %v1838, 0.0
    %v1857 = vmin.f32 %v1783, 0.0
    %v1858 = vmin.f32 %v1841, 0.0
    %v1859 = vmul.f32 %v1851, 1.442695
    %v1860 = vpow.pop %v1859
    %v1861 = vmul.f32 %v1852, 1.442695
    %v1862 = vpow.pop %v1861
    %v1863 = vmul.f32 %v1853, 1.442695
    %v1864 = vpow.pop %v1863
    %v1865 = vmul.f32 %v1854, 1.442695
    %v1866 = vpow.pop %v1865
    %v1867 = vmul.f32 %v1855, 1.442695
    %v1868 = vpow.pop %v1867
    %v1869 = vmul.f32 %v1856, 1.442695
    %v1870 = vpow.pop %v1869
    %v1871 = vmul.f32 %v1857, 1.442695
    %v1872 = vpow.pop %v1871
    %v1873 = vmul.f32 %v1858, 1.442695
    %v1874 = vpow.pop %v1873
    %v1875 = vsub.f32 %v1860, 1.0
    %v1876 = vsub.f32 %v1862, 1.0
    %v1877 = vsub.f32 %v1864, 1.0
    %v1878 = vsub.f32 %v1866, 1.0
    %v1879 = vsub.f32 %v1868, 1.0
    %v1880 = vsub.f32 %v1870, 1.0
    %v1881 = vsub.f32 %v1872, 1.0
    %v1882 = vsub.f32 %v1874, 1.0
    %v1883 = vsel %vm1843, %v1774, %v1875
    %v1884 = vsel %vm1844, %v1832, %v1876
    %v1885 = vsel %vm1845, %v1777, %v1877
    %v1886 = vsel %vm1846, %v1835, %v1878
    %v1887 = vsel %vm1847, %v1780, %v1879
    %v1888 = vsel %vm1848, %v1838, %v1880
    %v1889 = vsel %vm1849, %v1783, %v1881
    %v1890 = vsel %vm1850, %v1841, %v1882
    %1891 = vst [vmem:[#allocation2 + $0x60] sm:$0xff] %v1883
    %1892 = vst [vmem:[#allocation2 + $0x68] sm:$0xff] %v1884
    %1893 = vst [vmem:[#allocation2 + $0xe0] sm:$0xff] %v1885
    %1894 = vst [vmem:[#allocation2 + $0xe8] sm:$0xff] %v1886
    %1895 = vst [vmem:[#allocation2 + $0x160] sm:$0xff] %v1887
    %1896 = vst [vmem:[#allocation2 + $0x168] sm:$0xff] %v1888
    %1897 = vst [vmem:[#allocation2 + $0x1e0] sm:$0xff] %v1889
    %1898 = vst [vmem:[#allocation2 + $0x1e8] sm:$0xff] %v1890
    %v1899 = vld [vmem:[%s0 + $0x30] sm:$0xff]
    %v1900 = vld [vmem:[%s0 + $0x38] sm:$0xff]
    %v1901 = vunpack.c.0.s8 %v1899
    %v1902 = vunpack.c.0.s8 %v1900
    %v1903 = vunpack.c.1.s8 %v1899
    %v1904 = vunpack.c.1.s8 %v1900
    %v1905 = vunpack.c.2.s8 %v1899
    %v1906 = vunpack.c.2.s8 %v1900
    %v1907 = vunpack.c.3.s8 %v1899
    %v1908 = vunpack.c.3.s8 %v1900
    %v1909 = vcvt.s32.f32 %v1901
    %v1910 = vcvt.s32.f32 %v1902
    %v1911 = vcvt.s32.f32 %v1903
    %v1912 = vcvt.s32.f32 %v1904
    %v1913 = vcvt.s32.f32 %v1905
    %v1914 = vcvt.s32.f32 %v1906
    %v1915 = vcvt.s32.f32 %v1907
    %v1916 = vcvt.s32.f32 %v1908
    %vm1917 = vcmp.lt.f32.partialorder %v1909, 0.0
    %vm1918 = vcmp.lt.f32.partialorder %v1910, 0.0
    %vm1919 = vcmp.lt.f32.partialorder %v1911, 0.0
    %vm1920 = vcmp.lt.f32.partialorder %v1912, 0.0
    %vm1921 = vcmp.lt.f32.partialorder %v1913, 0.0
    %vm1922 = vcmp.lt.f32.partialorder %v1914, 0.0
    %vm1923 = vcmp.lt.f32.partialorder %v1915, 0.0
    %vm1924 = vcmp.lt.f32.partialorder %v1916, 0.0
    %v1925 = vadd.f32 %v1909, 256.0
    %v1926 = vadd.f32 %v1910, 256.0
    %v1927 = vadd.f32 %v1911, 256.0
    %v1928 = vadd.f32 %v1912, 256.0
    %v1929 = vadd.f32 %v1913, 256.0
    %v1930 = vadd.f32 %v1914, 256.0
    %v1931 = vadd.f32 %v1915, 256.0
    %v1932 = vadd.f32 %v1916, 256.0
    %v1933 = vsel %vm1917, %v1925, %v1909
    %v1934 = vsel %vm1918, %v1926, %v1910
    %v1935 = vsel %vm1919, %v1927, %v1911
    %v1936 = vsel %vm1920, %v1928, %v1912
    %v1937 = vsel %vm1921, %v1929, %v1913
    %v1938 = vsel %vm1922, %v1930, %v1914
    %v1939 = vsel %vm1923, %v1931, %v1915
    %v1940 = vsel %vm1924, %v1932, %v1916
    %v1941 = vld [vmem:[%s1] sm:$0xff]
    %v1942 = vld [vmem:[%s1 + $0x8] sm:$0xff]
    %v1943 = vld [vmem:[%s1 + $0x10] sm:$0xff]
    %v1944 = vld [vmem:[%s1 + $0x18] sm:$0xff]
    %v1945 = vld [vmem:[%s1 + $0x20] sm:$0xff]
    %v1946 = vld [vmem:[%s1 + $0x28] sm:$0xff]
    %v1947 = vld [vmem:[%s1 + $0x30] sm:$0xff]
    %v1948 = vld [vmem:[%s1 + $0x38] sm:$0xff]
    %v1949 = vld [vmem:[%s1 + $0x40] sm:$0xff]
    %v1950 = vld [vmem:[%s1 + $0x48] sm:$0xff]
    %v1951 = vld [vmem:[%s1 + $0x50] sm:$0xff]
    %v1952 = vld [vmem:[%s1 + $0x58] sm:$0xff]
    %v1953 = vld [vmem:[%s1 + $0x60] sm:$0xff]
    %v1954 = vld [vmem:[%s1 + $0x68] sm:$0xff]
    %v1955 = vld [vmem:[%s1 + $0x70] sm:$0xff]
    %v1956 = vld [vmem:[%s1 + $0x78] sm:$0xff]
    %v1957 = vld [vmem:[%s1 + $0x80] sm:$0xff]
    %v1958 = vld [vmem:[%s1 + $0x88] sm:$0xff]
    %v1959 = vld [vmem:[%s1 + $0x90] sm:$0xff]
    %v1960 = vld [vmem:[%s1 + $0x98] sm:$0xff]
    %v1961 = vld [vmem:[%s1 + $0xa0] sm:$0xff]
    %v1962 = vld [vmem:[%s1 + $0xa8] sm:$0xff]
    %v1963 = vld [vmem:[%s1 + $0xb0] sm:$0xff]
    %v1964 = vld [vmem:[%s1 + $0xb8] sm:$0xff]
    %v1965 = vld [vmem:[%s1 + $0xc0] sm:$0xff]
    %v1966 = vld [vmem:[%s1 + $0xc8] sm:$0xff]
    %v1967 = vld [vmem:[%s1 + $0xd0] sm:$0xff]
    %v1968 = vld [vmem:[%s1 + $0xd8] sm:$0xff]
    %v1969 = vld [vmem:[%s1 + $0xe0] sm:$0xff]
    %v1970 = vld [vmem:[%s1 + $0xe8] sm:$0xff]
    %v1971 = vld [vmem:[%s1 + $0xf0] sm:$0xff]
    %v1972 = vld [vmem:[%s1 + $0xf8] sm:$0xff]
    %v1973 = vld [vmem:[%s1 + $0x100] sm:$0xff]
    %v1974 = vld [vmem:[%s1 + $0x108] sm:$0xff]
    %v1975 = vld [vmem:[%s1 + $0x110] sm:$0xff]
    %v1976 = vld [vmem:[%s1 + $0x118] sm:$0xff]
    %v1977 = vld [vmem:[%s1 + $0x120] sm:$0xff]
    %v1978 = vld [vmem:[%s1 + $0x128] sm:$0xff]
    %v1979 = vld [vmem:[%s1 + $0x130] sm:$0xff]
    %v1980 = vld [vmem:[%s1 + $0x138] sm:$0xff]
    %v1981 = vld [vmem:[%s1 + $0x140] sm:$0xff]
    %v1982 = vld [vmem:[%s1 + $0x148] sm:$0xff]
    %v1983 = vld [vmem:[%s1 + $0x150] sm:$0xff]
    %v1984 = vld [vmem:[%s1 + $0x158] sm:$0xff]
    %v1985 = vld [vmem:[%s1 + $0x160] sm:$0xff]
    %v1986 = vld [vmem:[%s1 + $0x168] sm:$0xff]
    %v1987 = vld [vmem:[%s1 + $0x170] sm:$0xff]
    %v1988 = vld [vmem:[%s1 + $0x178] sm:$0xff]
    %v1989 = vld [vmem:[%s1 + $0x180] sm:$0xff]
    %v1990 = vld [vmem:[%s1 + $0x188] sm:$0xff]
    %v1991 = vld [vmem:[%s1 + $0x190] sm:$0xff]
    %v1992 = vld [vmem:[%s1 + $0x198] sm:$0xff]
    %v1993 = vld [vmem:[%s1 + $0x1a0] sm:$0xff]
    %v1994 = vld [vmem:[%s1 + $0x1a8] sm:$0xff]
    %v1995 = vld [vmem:[%s1 + $0x1b0] sm:$0xff]
    %v1996 = vld [vmem:[%s1 + $0x1b8] sm:$0xff]
    %v1997 = vld [vmem:[%s1 + $0x1c0] sm:$0xff]
    %v1998 = vld [vmem:[%s1 + $0x1c8] sm:$0xff]
    %v1999 = vld [vmem:[%s1 + $0x1d0] sm:$0xff]
    %v2000 = vld [vmem:[%s1 + $0x1d8] sm:$0xff]
    %v2001 = vld [vmem:[%s1 + $0x1e0] sm:$0xff]
    %v2002 = vld [vmem:[%s1 + $0x1e8] sm:$0xff]
    %v2003 = vld [vmem:[%s1 + $0x1f0] sm:$0xff]
    %v2004 = vld [vmem:[%s1 + $0x1f8] sm:$0xff]
    %2005 = vmatpush.msra.mxu0 %v1971
    %2006 = vmatpush.msra.mxu0 %v1969
    %2007 = vmatpush.msra.mxu0 %v1967
    %2008 = vmatpush.msra.mxu0 %v1965
    %2009 = vmatpush.msra.mxu0 %v1963
    %2010 = vmatpush.msra.mxu0 %v1961
    %2011 = vmatpush.msra.mxu0 %v1959
    %2012 = vmatpush.msra.mxu0 %v1957
    %2013 = vmatpush.msra.mxu0 %v1955
    %2014 = vmatpush.msra.mxu0 %v1953
    %2015 = vmatpush.msra.mxu0 %v1951
    %2016 = vmatpush.msra.mxu0 %v1949
    %2017 = vmatpush.msra.mxu0 %v1947
    %2018 = vmatpush.msra.mxu0 %v1945
    %2019 = vmatpush.msra.mxu0 %v1943
    %2020 = vmatpush.msra.mxu0 %v1941
    %2021 = vmatmul.f32.gmra.mxu0 %v1933
    %v2022 = vpop.f32.mrf.mxu0
    %v2023 = vadd.f32 %v60, %v2022
    %2024 = vmatmul.f32.gmra.mxu0 %v1935
    %v2025 = vpop.f32.mrf.mxu0
    %v2026 = vadd.f32 %v60, %v2025
    %2027 = vmatmul.f32.gmra.mxu0 %v1937
    %v2028 = vpop.f32.mrf.mxu0
    %v2029 = vadd.f32 %v60, %v2028
    %2030 = vmatmul.f32.gmra.mxu0 %v1939
    %v2031 = vpop.f32.mrf.mxu0
    %v2032 = vadd.f32 %v60, %v2031
    %2033 = vdwg.mxu0
    %2034 = vmatpush.msra.mxu0 %v2003
    %2035 = vmatpush.msra.mxu0 %v2001
    %2036 = vmatpush.msra.mxu0 %v1999
    %2037 = vmatpush.msra.mxu0 %v1997
    %2038 = vmatpush.msra.mxu0 %v1995
    %2039 = vmatpush.msra.mxu0 %v1993
    %2040 = vmatpush.msra.mxu0 %v1991
    %2041 = vmatpush.msra.mxu0 %v1989
    %2042 = vmatpush.msra.mxu0 %v1987
    %2043 = vmatpush.msra.mxu0 %v1985
    %2044 = vmatpush.msra.mxu0 %v1983
    %2045 = vmatpush.msra.mxu0 %v1981
    %2046 = vmatpush.msra.mxu0 %v1979
    %2047 = vmatpush.msra.mxu0 %v1977
    %2048 = vmatpush.msra.mxu0 %v1975
    %2049 = vmatpush.msra.mxu0 %v1973
    %2050 = vmatmul.f32.gmra.mxu0 %v1934
    %v2051 = vpop.f32.mrf.mxu0
    %v2052 = vadd.f32 %v2023, %v2051
    %2053 = vmatmul.f32.gmra.mxu0 %v1936
    %v2054 = vpop.f32.mrf.mxu0
    %v2055 = vadd.f32 %v2026, %v2054
    %2056 = vmatmul.f32.gmra.mxu0 %v1938
    %v2057 = vpop.f32.mrf.mxu0
    %v2058 = vadd.f32 %v2029, %v2057
    %2059 = vmatmul.f32.gmra.mxu0 %v1940
    %v2060 = vpop.f32.mrf.mxu0
    %v2061 = vadd.f32 %v2032, %v2060
    %2062 = vdwg.mxu0
    %2063 = vmatpush.msra.mxu0 %v1972
    %2064 = vmatpush.msra.mxu0 %v1970
    %2065 = vmatpush.msra.mxu0 %v1968
    %2066 = vmatpush.msra.mxu0 %v1966
    %2067 = vmatpush.msra.mxu0 %v1964
    %2068 = vmatpush.msra.mxu0 %v1962
    %2069 = vmatpush.msra.mxu0 %v1960
    %2070 = vmatpush.msra.mxu0 %v1958
    %2071 = vmatpush.msra.mxu0 %v1956
    %2072 = vmatpush.msra.mxu0 %v1954
    %2073 = vmatpush.msra.mxu0 %v1952
    %2074 = vmatpush.msra.mxu0 %v1950
    %2075 = vmatpush.msra.mxu0 %v1948
    %2076 = vmatpush.msra.mxu0 %v1946
    %2077 = vmatpush.msra.mxu0 %v1944
    %2078 = vmatpush.msra.mxu0 %v1942
    %2079 = vmatmul.f32.gmra.mxu0 %v1933
    %v2080 = vpop.f32.mrf.mxu0
    %v2081 = vadd.f32 %v61, %v2080
    %2082 = vmatmul.f32.gmra.mxu0 %v1935
    %v2083 = vpop.f32.mrf.mxu0
    %v2084 = vadd.f32 %v61, %v2083
    %2085 = vmatmul.f32.gmra.mxu0 %v1937
    %v2086 = vpop.f32.mrf.mxu0
    %v2087 = vadd.f32 %v61, %v2086
    %2088 = vmatmul.f32.gmra.mxu0 %v1939
    %v2089 = vpop.f32.mrf.mxu0
    %v2090 = vadd.f32 %v61, %v2089
    %2091 = vdwg.mxu0
    %2092 = vmatpush.msra.mxu0 %v2004
    %2093 = vmatpush.msra.mxu0 %v2002
    %2094 = vmatpush.msra.mxu0 %v2000
    %2095 = vmatpush.msra.mxu0 %v1998
    %2096 = vmatpush.msra.mxu0 %v1996
    %2097 = vmatpush.msra.mxu0 %v1994
    %2098 = vmatpush.msra.mxu0 %v1992
    %2099 = vmatpush.msra.mxu0 %v1990
    %2100 = vmatpush.msra.mxu0 %v1988
    %2101 = vmatpush.msra.mxu0 %v1986
    %2102 = vmatpush.msra.mxu0 %v1984
    %2103 = vmatpush.msra.mxu0 %v1982
    %2104 = vmatpush.msra.mxu0 %v1980
    %2105 = vmatpush.msra.mxu0 %v1978
    %2106 = vmatpush.msra.mxu0 %v1976
    %2107 = vmatpush.msra.mxu0 %v1974
    %2108 = vmatmul.f32.gmra.mxu0 %v1934
    %v2109 = vpop.f32.mrf.mxu0
    %v2110 = vadd.f32 %v2081, %v2109
    %2111 = vmatmul.f32.gmra.mxu0 %v1936
    %v2112 = vpop.f32.mrf.mxu0
    %v2113 = vadd.f32 %v2084, %v2112
    %2114 = vmatmul.f32.gmra.mxu0 %v1938
    %v2115 = vpop.f32.mrf.mxu0
    %v2116 = vadd.f32 %v2087, %v2115
    %2117 = vmatmul.f32.gmra.mxu0 %v1940
    %v2118 = vpop.f32.mrf.mxu0
    %v2119 = vadd.f32 %v2090, %v2118
    %2120 = vdwg.mxu0
    %vm2121 = vcmp.gt.f32.partialorder %v2052, 0.0
    %vm2122 = vcmp.gt.f32.partialorder %v2110, 0.0
    %vm2123 = vcmp.gt.f32.partialorder %v2055, 0.0
    %vm2124 = vcmp.gt.f32.partialorder %v2113, 0.0
    %vm2125 = vcmp.gt.f32.partialorder %v2058, 0.0
    %vm2126 = vcmp.gt.f32.partialorder %v2116, 0.0
    %vm2127 = vcmp.gt.f32.partialorder %v2061, 0.0
    %vm2128 = vcmp.gt.f32.partialorder %v2119, 0.0
    %v2129 = vmin.f32 %v2052, 0.0
    %v2130 = vmin.f32 %v2110, 0.0
    %v2131 = vmin.f32 %v2055, 0.0
    %v2132 = vmin.f32 %v2113, 0.0
    %v2133 = vmin.f32 %v2058, 0.0
    %v2134 = vmin.f32 %v2116, 0.0
    %v2135 = vmin.f32 %v2061, 0.0
    %v2136 = vmin.f32 %v2119, 0.0
    %v2137 = vmul.f32 %v2129, 1.442695
    %v2138 = vpow.pop %v2137
    %v2139 = vmul.f32 %v2130, 1.442695
    %v2140 = vpow.pop %v2139
    %v2141 = vmul.f32 %v2131, 1.442695
    %v2142 = vpow.pop %v2141
    %v2143 = vmul.f32 %v2132, 1.442695
    %v2144 = vpow.pop %v2143
    %v2145 = vmul.f32 %v2133, 1.442695
    %v2146 = vpow.pop %v2145
    %v2147 = vmul.f32 %v2134, 1.442695
    %v2148 = vpow.pop %v2147
    %v2149 = vmul.f32 %v2135, 1.442695
    %v2150 = vpow.pop %v2149
    %v2151 = vmul.f32 %v2136, 1.442695
    %v2152 = vpow.pop %v2151
    %v2153 = vsub.f32 %v2138, 1.0
    %v2154 = vsub.f32 %v2140, 1.0
    %v2155 = vsub.f32 %v2142, 1.0
    %v2156 = vsub.f32 %v2144, 1.0
    %v2157 = vsub.f32 %v2146, 1.0
    %v2158 = vsub.f32 %v2148, 1.0
    %v2159 = vsub.f32 %v2150, 1.0
    %v2160 = vsub.f32 %v2152, 1.0
    %v2161 = vsel %vm2121, %v2052, %v2153
    %v2162 = vsel %vm2122, %v2110, %v2154
    %v2163 = vsel %vm2123, %v2055, %v2155
    %v2164 = vsel %vm2124, %v2113, %v2156
    %v2165 = vsel %vm2125, %v2058, %v2157
    %v2166 = vsel %vm2126, %v2116, %v2158
    %v2167 = vsel %vm2127, %v2061, %v2159
    %v2168 = vsel %vm2128, %v2119, %v2160
    %2169 = vst [vmem:[#allocation2 + $0x70] sm:$0xff] %v2161
    %2170 = vst [vmem:[#allocation2 + $0x78] sm:$0xff] %v2162
    %2171 = vst [vmem:[#allocation2 + $0xf0] sm:$0xff] %v2163
    %2172 = vst [vmem:[#allocation2 + $0xf8] sm:$0xff] %v2164
    %2173 = vst [vmem:[#allocation2 + $0x170] sm:$0xff] %v2165
    %2174 = vst [vmem:[#allocation2 + $0x178] sm:$0xff] %v2166
    %2175 = vst [vmem:[#allocation2 + $0x1f0] sm:$0xff] %v2167
    %2176 = vst [vmem:[#allocation2 + $0x1f8] sm:$0xff] %v2168
    %v2177 = vld [vmem:[%s4] sm:$0x1]
    %v2179 = vperm.slane %v2177, 0
    %v2181 = vld [vmem:[#allocation2] sm:$0xff]
    %v2182 = vld [vmem:[#allocation2 + $0x8] sm:$0xff]
    %v2183 = vld [vmem:[#allocation2 + $0x10] sm:$0xff]
    %v2184 = vld [vmem:[#allocation2 + $0x18] sm:$0xff]
    %v2185 = vld [vmem:[#allocation2 + $0x80] sm:$0xff]
    %v2186 = vld [vmem:[#allocation2 + $0x88] sm:$0xff]
    %v2187 = vld [vmem:[#allocation2 + $0x90] sm:$0xff]
    %v2188 = vld [vmem:[#allocation2 + $0x98] sm:$0xff]
    %v2189 = vld [vmem:[#allocation2 + $0x100] sm:$0xff]
    %v2190 = vld [vmem:[#allocation2 + $0x108] sm:$0xff]
    %v2191 = vld [vmem:[#allocation2 + $0x110] sm:$0xff]
    %v2192 = vld [vmem:[#allocation2 + $0x118] sm:$0xff]
    %v2193 = vld [vmem:[#allocation2 + $0x180] sm:$0xff]
    %v2194 = vld [vmem:[#allocation2 + $0x188] sm:$0xff]
    %v2195 = vld [vmem:[#allocation2 + $0x190] sm:$0xff]
    %v2196 = vld [vmem:[#allocation2 + $0x198] sm:$0xff]
    %v2197 = vld [vmem:[#allocation4 + $0x100] sm:$0xff]
    %v2198 = vld [vmem:[#allocation4 + $0x108] sm:$0xff]
    %v2199 = vld [vmem:[#allocation4 + $0x110] sm:$0xff]
    %v2200 = vld [vmem:[#allocation4 + $0x118] sm:$0xff]
    %v2201 = vld [vmem:[#allocation4 + $0x120] sm:$0xff]
    %v2202 = vld [vmem:[#allocation4 + $0x128] sm:$0xff]
    %v2203 = vld [vmem:[#allocation4 + $0x130] sm:$0xff]
    %v2204 = vld [vmem:[#allocation4 + $0x138] sm:$0xff]
    %v2205 = vld [vmem:[#allocation4 + $0x140] sm:$0xff]
    %v2206 = vld [vmem:[#allocation4 + $0x148] sm:$0xff]
    %v2207 = vld [vmem:[#allocation4 + $0x150] sm:$0xff]
    %v2208 = vld [vmem:[#allocation4 + $0x158] sm:$0xff]
    %v2209 = vld [vmem:[#allocation4 + $0x160] sm:$0xff]
    %v2210 = vld [vmem:[#allocation4 + $0x168] sm:$0xff]
    %v2211 = vld [vmem:[#allocation4 + $0x170] sm:$0xff]
    %v2212 = vld [vmem:[#allocation4 + $0x178] sm:$0xff]
    %v2213 = vld [vmem:[#allocation4 + $0x180] sm:$0xff]
    %v2214 = vld [vmem:[#allocation4 + $0x188] sm:$0xff]
    %v2215 = vld [vmem:[#allocation4 + $0x190] sm:$0xff]
    %v2216 = vld [vmem:[#allocation4 + $0x198] sm:$0xff]
    %v2217 = vld [vmem:[#allocation4 + $0x1a0] sm:$0xff]
    %v2218 = vld [vmem:[#allocation4 + $0x1a8] sm:$0xff]
    %v2219 = vld [vmem:[#allocation4 + $0x1b0] sm:$0xff]
    %v2220 = vld [vmem:[#allocation4 + $0x1b8] sm:$0xff]
    %v2221 = vld [vmem:[#allocation4 + $0x1c0] sm:$0xff]
    %v2222 = vld [vmem:[#allocation4 + $0x1c8] sm:$0xff]
    %v2223 = vld [vmem:[#allocation4 + $0x1d0] sm:$0xff]
    %v2224 = vld [vmem:[#allocation4 + $0x1d8] sm:$0xff]
    %v2225 = vld [vmem:[#allocation4 + $0x1e0] sm:$0xff]
    %v2226 = vld [vmem:[#allocation4 + $0x1e8] sm:$0xff]
    %v2227 = vld [vmem:[#allocation4 + $0x1f0] sm:$0xff]
    %v2228 = vld [vmem:[#allocation4 + $0x1f8] sm:$0xff]
    %v2229 = vld [vmem:[#allocation4 + $0x200] sm:$0xff]
    %v2230 = vld [vmem:[#allocation4 + $0x208] sm:$0xff]
    %v2231 = vld [vmem:[#allocation4 + $0x210] sm:$0xff]
    %v2232 = vld [vmem:[#allocation4 + $0x218] sm:$0xff]
    %v2233 = vld [vmem:[#allocation4 + $0x220] sm:$0xff]
    %v2234 = vld [vmem:[#allocation4 + $0x228] sm:$0xff]
    %v2235 = vld [vmem:[#allocation4 + $0x230] sm:$0xff]
    %v2236 = vld [vmem:[#allocation4 + $0x238] sm:$0xff]
    %v2237 = vld [vmem:[#allocation4 + $0x240] sm:$0xff]
    %v2238 = vld [vmem:[#allocation4 + $0x248] sm:$0xff]
    %v2239 = vld [vmem:[#allocation4 + $0x250] sm:$0xff]
    %v2240 = vld [vmem:[#allocation4 + $0x258] sm:$0xff]
    %v2241 = vld [vmem:[#allocation4 + $0x260] sm:$0xff]
    %v2242 = vld [vmem:[#allocation4 + $0x268] sm:$0xff]
    %v2243 = vld [vmem:[#allocation4 + $0x270] sm:$0xff]
    %v2244 = vld [vmem:[#allocation4 + $0x278] sm:$0xff]
    %v2245 = vld [vmem:[#allocation4 + $0x280] sm:$0xff]
    %v2246 = vld [vmem:[#allocation4 + $0x288] sm:$0xff]
    %v2247 = vld [vmem:[#allocation4 + $0x290] sm:$0xff]
    %v2248 = vld [vmem:[#allocation4 + $0x298] sm:$0xff]
    %v2249 = vld [vmem:[#allocation4 + $0x2a0] sm:$0xff]
    %v2250 = vld [vmem:[#allocation4 + $0x2a8] sm:$0xff]
    %v2251 = vld [vmem:[#allocation4 + $0x2b0] sm:$0xff]
    %v2252 = vld [vmem:[#allocation4 + $0x2b8] sm:$0xff]
    %v2253 = vld [vmem:[#allocation4 + $0x2c0] sm:$0xff]
    %v2254 = vld [vmem:[#allocation4 + $0x2c8] sm:$0xff]
    %v2255 = vld [vmem:[#allocation4 + $0x2d0] sm:$0xff]
    %v2256 = vld [vmem:[#allocation4 + $0x2d8] sm:$0xff]
    %v2257 = vld [vmem:[#allocation4 + $0x2e0] sm:$0xff]
    %v2258 = vld [vmem:[#allocation4 + $0x2e8] sm:$0xff]
    %v2259 = vld [vmem:[#allocation4 + $0x2f0] sm:$0xff]
    %v2260 = vld [vmem:[#allocation4 + $0x2f8] sm:$0xff]
    %2261 = vmatpush.msra.mxu0 %v2212
    %2262 = vmatpush.msra.mxu0 %v2211
    %2263 = vmatpush.msra.mxu0 %v2210
    %2264 = vmatpush.msra.mxu0 %v2209
    %2265 = vmatpush.msra.mxu0 %v2208
    %2266 = vmatpush.msra.mxu0 %v2207
    %2267 = vmatpush.msra.mxu0 %v2206
    %2268 = vmatpush.msra.mxu0 %v2205
    %2269 = vmatpush.msra.mxu0 %v2204
    %2270 = vmatpush.msra.mxu0 %v2203
    %2271 = vmatpush.msra.mxu0 %v2202
    %2272 = vmatpush.msra.mxu0 %v2201
    %2273 = vmatpush.msra.mxu0 %v2200
    %2274 = vmatpush.msra.mxu0 %v2199
    %2275 = vmatpush.msra.mxu0 %v2198
    %2276 = vmatpush.msra.mxu0 %v2197
    %2277 = vmatmul.f32.gmra.mxu0 %v2181
    %v2278 = vpop.f32.mrf.mxu0
    %v2279 = vadd.f32 %v2179, %v2278
    %2280 = vmatmul.f32.gmra.mxu0 %v2185
    %v2281 = vpop.f32.mrf.mxu0
    %v2282 = vadd.f32 %v2179, %v2281
    %2283 = vmatmul.f32.gmra.mxu0 %v2189
    %v2284 = vpop.f32.mrf.mxu0
    %v2285 = vadd.f32 %v2179, %v2284
    %2286 = vmatmul.f32.gmra.mxu0 %v2193
    %v2287 = vpop.f32.mrf.mxu0
    %v2288 = vadd.f32 %v2179, %v2287
    %2289 = vdwg.mxu0
    %2290 = vmatpush.msra.mxu0 %v2228
    %2291 = vmatpush.msra.mxu0 %v2227
    %2292 = vmatpush.msra.mxu0 %v2226
    %2293 = vmatpush.msra.mxu0 %v2225
    %2294 = vmatpush.msra.mxu0 %v2224
    %2295 = vmatpush.msra.mxu0 %v2223
    %2296 = vmatpush.msra.mxu0 %v2222
    %2297 = vmatpush.msra.mxu0 %v2221
    %2298 = vmatpush.msra.mxu0 %v2220
    %2299 = vmatpush.msra.mxu0 %v2219
    %2300 = vmatpush.msra.mxu0 %v2218
    %2301 = vmatpush.msra.mxu0 %v2217
    %2302 = vmatpush.msra.mxu0 %v2216
    %2303 = vmatpush.msra.mxu0 %v2215
    %2304 = vmatpush.msra.mxu0 %v2214
    %2305 = vmatpush.msra.mxu0 %v2213
    %2306 = vmatmul.f32.gmra.mxu0 %v2182
    %v2307 = vpop.f32.mrf.mxu0
    %v2308 = vadd.f32 %v2279, %v2307
    %2309 = vmatmul.f32.gmra.mxu0 %v2186
    %v2310 = vpop.f32.mrf.mxu0
    %v2311 = vadd.f32 %v2282, %v2310
    %2312 = vmatmul.f32.gmra.mxu0 %v2190
    %v2313 = vpop.f32.mrf.mxu0
    %v2314 = vadd.f32 %v2285, %v2313
    %2315 = vmatmul.f32.gmra.mxu0 %v2194
    %v2316 = vpop.f32.mrf.mxu0
    %v2317 = vadd.f32 %v2288, %v2316
    %2318 = vdwg.mxu0
    %2319 = vmatpush.msra.mxu0 %v2244
    %2320 = vmatpush.msra.mxu0 %v2243
    %2321 = vmatpush.msra.mxu0 %v2242
    %2322 = vmatpush.msra.mxu0 %v2241
    %2323 = vmatpush.msra.mxu0 %v2240
    %2324 = vmatpush.msra.mxu0 %v2239
    %2325 = vmatpush.msra.mxu0 %v2238
    %2326 = vmatpush.msra.mxu0 %v2237
    %2327 = vmatpush.msra.mxu0 %v2236
    %2328 = vmatpush.msra.mxu0 %v2235
    %2329 = vmatpush.msra.mxu0 %v2234
    %2330 = vmatpush.msra.mxu0 %v2233
    %2331 = vmatpush.msra.mxu0 %v2232
    %2332 = vmatpush.msra.mxu0 %v2231
    %2333 = vmatpush.msra.mxu0 %v2230
    %2334 = vmatpush.msra.mxu0 %v2229
    %2335 = vmatmul.f32.gmra.mxu0 %v2183
    %v2336 = vpop.f32.mrf.mxu0
    %v2337 = vadd.f32 %v2308, %v2336
    %2338 = vmatmul.f32.gmra.mxu0 %v2187
    %v2339 = vpop.f32.mrf.mxu0
    %v2340 = vadd.f32 %v2311, %v2339
    %2341 = vmatmul.f32.gmra.mxu0 %v2191
    %v2342 = vpop.f32.mrf.mxu0
    %v2343 = vadd.f32 %v2314, %v2342
    %2344 = vmatmul.f32.gmra.mxu0 %v2195
    %v2345 = vpop.f32.mrf.mxu0
    %v2346 = vadd.f32 %v2317, %v2345
    %2347 = vdwg.mxu0
    %2348 = vmatpush.msra.mxu0 %v2260
    %2349 = vmatpush.msra.mxu0 %v2259
    %2350 = vmatpush.msra.mxu0 %v2258
    %2351 = vmatpush.msra.mxu0 %v2257
    %2352 = vmatpush.msra.mxu0 %v2256
    %2353 = vmatpush.msra.mxu0 %v2255
    %2354 = vmatpush.msra.mxu0 %v2254
    %2355 = vmatpush.msra.mxu0 %v2253
    %2356 = vmatpush.msra.mxu0 %v2252
    %2357 = vmatpush.msra.mxu0 %v2251
    %2358 = vmatpush.msra.mxu0 %v2250
    %2359 = vmatpush.msra.mxu0 %v2249
    %2360 = vmatpush.msra.mxu0 %v2248
    %2361 = vmatpush.msra.mxu0 %v2247
    %2362 = vmatpush.msra.mxu0 %v2246
    %2363 = vmatpush.msra.mxu0 %v2245
    %2364 = vmatmul.f32.gmra.mxu0 %v2184
    %v2365 = vpop.f32.mrf.mxu0
    %v2366 = vadd.f32 %v2337, %v2365
    %2367 = vmatmul.f32.gmra.mxu0 %v2188
    %v2368 = vpop.f32.mrf.mxu0
    %v2369 = vadd.f32 %v2340, %v2368
    %2370 = vmatmul.f32.gmra.mxu0 %v2192
    %v2371 = vpop.f32.mrf.mxu0
    %v2372 = vadd.f32 %v2343, %v2371
    %2373 = vmatmul.f32.gmra.mxu0 %v2196
    %v2374 = vpop.f32.mrf.mxu0
    %v2375 = vadd.f32 %v2346, %v2374
    %2376 = vdwg.mxu0
    %vm2377 = vcmp.gt.f32.partialorder %v2366, 0.0
    %vm2378 = vcmp.gt.f32.partialorder %v2369, 0.0
    %vm2379 = vcmp.gt.f32.partialorder %v2372, 0.0
    %vm2380 = vcmp.gt.f32.partialorder %v2375, 0.0
    %v2381 = vmin.f32 %v2366, 0.0
    %v2382 = vmin.f32 %v2369, 0.0
    %v2383 = vmin.f32 %v2372, 0.0
    %v2384 = vmin.f32 %v2375, 0.0
    %v2385 = vmul.f32 %v2381, 1.442695
    %v2386 = vpow.pop %v2385
    %v2387 = vmul.f32 %v2382, 1.442695
    %v2388 = vpow.pop %v2387
    %v2389 = vmul.f32 %v2383, 1.442695
    %v2390 = vpow.pop %v2389
    %v2391 = vmul.f32 %v2384, 1.442695
    %v2392 = vpow.pop %v2391
    %v2393 = vsub.f32 %v2386, 1.0
    %v2394 = vsub.f32 %v2388, 1.0
    %v2395 = vsub.f32 %v2390, 1.0
    %v2396 = vsub.f32 %v2392, 1.0
    %v2397 = vsel %vm2377, %v2366, %v2393
    %v2398 = vsel %vm2378, %v2369, %v2394
    %v2399 = vsel %vm2379, %v2372, %v2395
    %v2400 = vsel %vm2380, %v2375, %v2396
    %2401 = vst [vmem:[#allocation3] sm:$0xff] %v2397
    %2402 = vst [vmem:[#allocation3 + $0x20] sm:$0xff] %v2398
    %2403 = vst [vmem:[#allocation3 + $0x40] sm:$0xff] %v2399
    %2404 = vst [vmem:[#allocation3 + $0x60] sm:$0xff] %v2400
    %v2405 = vld [vmem:[#allocation2 + $0x10] sm:$0xff]
    %v2406 = vld [vmem:[#allocation2 + $0x18] sm:$0xff]
    %v2407 = vld [vmem:[#allocation2 + $0x20] sm:$0xff]
    %v2408 = vld [vmem:[#allocation2 + $0x28] sm:$0xff]
    %v2409 = vld [vmem:[#allocation2 + $0x30] sm:$0xff]
    %v2410 = vld [vmem:[#allocation2 + $0x38] sm:$0xff]
    %v2411 = vld [vmem:[#allocation2 + $0x90] sm:$0xff]
    %v2412 = vld [vmem:[#allocation2 + $0x98] sm:$0xff]
    %v2413 = vld [vmem:[#allocation2 + $0xa0] sm:$0xff]
    %v2414 = vld [vmem:[#allocation2 + $0xa8] sm:$0xff]
    %v2415 = vld [vmem:[#allocation2 + $0xb0] sm:$0xff]
    %v2416 = vld [vmem:[#allocation2 + $0xb8] sm:$0xff]
    %v2417 = vld [vmem:[#allocation2 + $0x110] sm:$0xff]
    %v2418 = vld [vmem:[#allocation2 + $0x118] sm:$0xff]
    %v2419 = vld [vmem:[#allocation2 + $0x120] sm:$0xff]
    %v2420 = vld [vmem:[#allocation2 + $0x128] sm:$0xff]
    %v2421 = vld [vmem:[#allocation2 + $0x130] sm:$0xff]
    %v2422 = vld [vmem:[#allocation2 + $0x138] sm:$0xff]
    %v2423 = vld [vmem:[#allocation2 + $0x190] sm:$0xff]
    %v2424 = vld [vmem:[#allocation2 + $0x198] sm:$0xff]
    %v2425 = vld [vmem:[#allocation2 + $0x1a0] sm:$0xff]
    %v2426 = vld [vmem:[#allocation2 + $0x1a8] sm:$0xff]
    %v2427 = vld [vmem:[#allocation2 + $0x1b0] sm:$0xff]
    %v2428 = vld [vmem:[#allocation2 + $0x1b8] sm:$0xff]
    %v2429 = vld [vmem:[#allocation4] sm:$0xff]
    %v2430 = vld [vmem:[#allocation4 + $0x8] sm:$0xff]
    %v2431 = vld [vmem:[#allocation4 + $0x10] sm:$0xff]
    %v2432 = vld [vmem:[#allocation4 + $0x18] sm:$0xff]
    %v2433 = vld [vmem:[#allocation4 + $0x20] sm:$0xff]
    %v2434 = vld [vmem:[#allocation4 + $0x28] sm:$0xff]
    %v2435 = vld [vmem:[#allocation4 + $0x30] sm:$0xff]
    %v2436 = vld [vmem:[#allocation4 + $0x38] sm:$0xff]
    %v2437 = vld [vmem:[#allocation4 + $0x40] sm:$0xff]
    %v2438 = vld [vmem:[#allocation4 + $0x48] sm:$0xff]
    %v2439 = vld [vmem:[#allocation4 + $0x50] sm:$0xff]
    %v2440 = vld [vmem:[#allocation4 + $0x58] sm:$0xff]
    %v2441 = vld [vmem:[#allocation4 + $0x60] sm:$0xff]
    %v2442 = vld [vmem:[#allocation4 + $0x68] sm:$0xff]
    %v2443 = vld [vmem:[#allocation4 + $0x70] sm:$0xff]
    %v2444 = vld [vmem:[#allocation4 + $0x78] sm:$0xff]
    %v2445 = vld [vmem:[#allocation4 + $0x80] sm:$0xff]
    %v2446 = vld [vmem:[#allocation4 + $0x88] sm:$0xff]
    %v2447 = vld [vmem:[#allocation4 + $0x90] sm:$0xff]
    %v2448 = vld [vmem:[#allocation4 + $0x98] sm:$0xff]
    %v2449 = vld [vmem:[#allocation4 + $0xa0] sm:$0xff]
    %v2450 = vld [vmem:[#allocation4 + $0xa8] sm:$0xff]
    %v2451 = vld [vmem:[#allocation4 + $0xb0] sm:$0xff]
    %v2452 = vld [vmem:[#allocation4 + $0xb8] sm:$0xff]
    %v2453 = vld [vmem:[#allocation4 + $0xc0] sm:$0xff]
    %v2454 = vld [vmem:[#allocation4 + $0xc8] sm:$0xff]
    %v2455 = vld [vmem:[#allocation4 + $0xd0] sm:$0xff]
    %v2456 = vld [vmem:[#allocation4 + $0xd8] sm:$0xff]
    %v2457 = vld [vmem:[#allocation4 + $0xe0] sm:$0xff]
    %v2458 = vld [vmem:[#allocation4 + $0xe8] sm:$0xff]
    %v2459 = vld [vmem:[#allocation4 + $0xf0] sm:$0xff]
    %v2460 = vld [vmem:[#allocation4 + $0xf8] sm:$0xff]
    %v2461 = vld [vmem:[#allocation4 + $0x100] sm:$0xff]
    %v2462 = vld [vmem:[#allocation4 + $0x108] sm:$0xff]
    %v2463 = vld [vmem:[#allocation4 + $0x110] sm:$0xff]
    %v2464 = vld [vmem:[#allocation4 + $0x118] sm:$0xff]
    %v2465 = vld [vmem:[#allocation4 + $0x120] sm:$0xff]
    %v2466 = vld [vmem:[#allocation4 + $0x128] sm:$0xff]
    %v2467 = vld [vmem:[#allocation4 + $0x130] sm:$0xff]
    %v2468 = vld [vmem:[#allocation4 + $0x138] sm:$0xff]
    %v2469 = vld [vmem:[#allocation4 + $0x140] sm:$0xff]
    %v2470 = vld [vmem:[#allocation4 + $0x148] sm:$0xff]
    %v2471 = vld [vmem:[#allocation4 + $0x150] sm:$0xff]
    %v2472 = vld [vmem:[#allocation4 + $0x158] sm:$0xff]
    %v2473 = vld [vmem:[#allocation4 + $0x160] sm:$0xff]
    %v2474 = vld [vmem:[#allocation4 + $0x168] sm:$0xff]
    %v2475 = vld [vmem:[#allocation4 + $0x170] sm:$0xff]
    %v2476 = vld [vmem:[#allocation4 + $0x178] sm:$0xff]
    %v2477 = vld [vmem:[#allocation4 + $0x180] sm:$0xff]
    %v2478 = vld [vmem:[#allocation4 + $0x188] sm:$0xff]
    %v2479 = vld [vmem:[#allocation4 + $0x190] sm:$0xff]
    %v2480 = vld [vmem:[#allocation4 + $0x198] sm:$0xff]
    %v2481 = vld [vmem:[#allocation4 + $0x1a0] sm:$0xff]
    %v2482 = vld [vmem:[#allocation4 + $0x1a8] sm:$0xff]
    %v2483 = vld [vmem:[#allocation4 + $0x1b0] sm:$0xff]
    %v2484 = vld [vmem:[#allocation4 + $0x1b8] sm:$0xff]
    %v2485 = vld [vmem:[#allocation4 + $0x1c0] sm:$0xff]
    %v2486 = vld [vmem:[#allocation4 + $0x1c8] sm:$0xff]
    %v2487 = vld [vmem:[#allocation4 + $0x1d0] sm:$0xff]
    %v2488 = vld [vmem:[#allocation4 + $0x1d8] sm:$0xff]
    %v2489 = vld [vmem:[#allocation4 + $0x1e0] sm:$0xff]
    %v2490 = vld [vmem:[#allocation4 + $0x1e8] sm:$0xff]
    %v2491 = vld [vmem:[#allocation4 + $0x1f0] sm:$0xff]
    %v2492 = vld [vmem:[#allocation4 + $0x1f8] sm:$0xff]
    %v2493 = vld [vmem:[#allocation4 + $0x200] sm:$0xff]
    %v2494 = vld [vmem:[#allocation4 + $0x208] sm:$0xff]
    %v2495 = vld [vmem:[#allocation4 + $0x210] sm:$0xff]
    %v2496 = vld [vmem:[#allocation4 + $0x218] sm:$0xff]
    %v2497 = vld [vmem:[#allocation4 + $0x220] sm:$0xff]
    %v2498 = vld [vmem:[#allocation4 + $0x228] sm:$0xff]
    %v2499 = vld [vmem:[#allocation4 + $0x230] sm:$0xff]
    %v2500 = vld [vmem:[#allocation4 + $0x238] sm:$0xff]
    %v2501 = vld [vmem:[#allocation4 + $0x240] sm:$0xff]
    %v2502 = vld [vmem:[#allocation4 + $0x248] sm:$0xff]
    %v2503 = vld [vmem:[#allocation4 + $0x250] sm:$0xff]
    %v2504 = vld [vmem:[#allocation4 + $0x258] sm:$0xff]
    %v2505 = vld [vmem:[#allocation4 + $0x260] sm:$0xff]
    %v2506 = vld [vmem:[#allocation4 + $0x268] sm:$0xff]
    %v2507 = vld [vmem:[#allocation4 + $0x270] sm:$0xff]
    %v2508 = vld [vmem:[#allocation4 + $0x278] sm:$0xff]
    %v2509 = vld [vmem:[#allocation4 + $0x280] sm:$0xff]
    %v2510 = vld [vmem:[#allocation4 + $0x288] sm:$0xff]
    %v2511 = vld [vmem:[#allocation4 + $0x290] sm:$0xff]
    %v2512 = vld [vmem:[#allocation4 + $0x298] sm:$0xff]
    %v2513 = vld [vmem:[#allocation4 + $0x2a0] sm:$0xff]
    %v2514 = vld [vmem:[#allocation4 + $0x2a8] sm:$0xff]
    %v2515 = vld [vmem:[#allocation4 + $0x2b0] sm:$0xff]
    %v2516 = vld [vmem:[#allocation4 + $0x2b8] sm:$0xff]
    %v2517 = vld [vmem:[#allocation4 + $0x2c0] sm:$0xff]
    %v2518 = vld [vmem:[#allocation4 + $0x2c8] sm:$0xff]
    %v2519 = vld [vmem:[#allocation4 + $0x2d0] sm:$0xff]
    %v2520 = vld [vmem:[#allocation4 + $0x2d8] sm:$0xff]
    %v2521 = vld [vmem:[#allocation4 + $0x2e0] sm:$0xff]
    %v2522 = vld [vmem:[#allocation4 + $0x2e8] sm:$0xff]
    %v2523 = vld [vmem:[#allocation4 + $0x2f0] sm:$0xff]
    %v2524 = vld [vmem:[#allocation4 + $0x2f8] sm:$0xff]
    %2525 = vmatpush.msra.mxu0 %v2444
    %2526 = vmatpush.msra.mxu0 %v2443
    %2527 = vmatpush.msra.mxu0 %v2442
    %2528 = vmatpush.msra.mxu0 %v2441
    %2529 = vmatpush.msra.mxu0 %v2440
    %2530 = vmatpush.msra.mxu0 %v2439
    %2531 = vmatpush.msra.mxu0 %v2438
    %2532 = vmatpush.msra.mxu0 %v2437
    %2533 = vmatpush.msra.mxu0 %v2436
    %2534 = vmatpush.msra.mxu0 %v2435
    %2535 = vmatpush.msra.mxu0 %v2434
    %2536 = vmatpush.msra.mxu0 %v2433
    %2537 = vmatpush.msra.mxu0 %v2432
    %2538 = vmatpush.msra.mxu0 %v2431
    %2539 = vmatpush.msra.mxu0 %v2430
    %2540 = vmatpush.msra.mxu0 %v2429
    %2541 = vmatmul.f32.gmra.mxu0 %v2405
    %v2542 = vpop.f32.mrf.mxu0
    %v2543 = vadd.f32 %v2179, %v2542
    %2544 = vmatmul.f32.gmra.mxu0 %v2411
    %v2545 = vpop.f32.mrf.mxu0
    %v2546 = vadd.f32 %v2179, %v2545
    %2547 = vmatmul.f32.gmra.mxu0 %v2417
    %v2548 = vpop.f32.mrf.mxu0
    %v2549 = vadd.f32 %v2179, %v2548
    %2550 = vmatmul.f32.gmra.mxu0 %v2423
    %v2551 = vpop.f32.mrf.mxu0
    %v2552 = vadd.f32 %v2179, %v2551
    %2553 = vdwg.mxu0
    %2554 = vmatpush.msra.mxu0 %v2460
    %2555 = vmatpush.msra.mxu0 %v2459
    %2556 = vmatpush.msra.mxu0 %v2458
    %2557 = vmatpush.msra.mxu0 %v2457
    %2558 = vmatpush.msra.mxu0 %v2456
    %2559 = vmatpush.msra.mxu0 %v2455
    %2560 = vmatpush.msra.mxu0 %v2454
    %2561 = vmatpush.msra.mxu0 %v2453
    %2562 = vmatpush.msra.mxu0 %v2452
    %2563 = vmatpush.msra.mxu0 %v2451
    %2564 = vmatpush.msra.mxu0 %v2450
    %2565 = vmatpush.msra.mxu0 %v2449
    %2566 = vmatpush.msra.mxu0 %v2448
    %2567 = vmatpush.msra.mxu0 %v2447
    %2568 = vmatpush.msra.mxu0 %v2446
    %2569 = vmatpush.msra.mxu0 %v2445
    %2570 = vmatmul.f32.gmra.mxu0 %v2406
    %v2571 = vpop.f32.mrf.mxu0
    %v2572 = vadd.f32 %v2543, %v2571
    %2573 = vmatmul.f32.gmra.mxu0 %v2412
    %v2574 = vpop.f32.mrf.mxu0
    %v2575 = vadd.f32 %v2546, %v2574
    %2576 = vmatmul.f32.gmra.mxu0 %v2418
    %v2577 = vpop.f32.mrf.mxu0
    %v2578 = vadd.f32 %v2549, %v2577
    %2579 = vmatmul.f32.gmra.mxu0 %v2424
    %v2580 = vpop.f32.mrf.mxu0
    %v2581 = vadd.f32 %v2552, %v2580
    %2582 = vdwg.mxu0
    %2583 = vmatpush.msra.mxu0 %v2476
    %2584 = vmatpush.msra.mxu0 %v2475
    %2585 = vmatpush.msra.mxu0 %v2474
    %2586 = vmatpush.msra.mxu0 %v2473
    %2587 = vmatpush.msra.mxu0 %v2472
    %2588 = vmatpush.msra.mxu0 %v2471
    %2589 = vmatpush.msra.mxu0 %v2470
    %2590 = vmatpush.msra.mxu0 %v2469
    %2591 = vmatpush.msra.mxu0 %v2468
    %2592 = vmatpush.msra.mxu0 %v2467
    %2593 = vmatpush.msra.mxu0 %v2466
    %2594 = vmatpush.msra.mxu0 %v2465
    %2595 = vmatpush.msra.mxu0 %v2464
    %2596 = vmatpush.msra.mxu0 %v2463
    %2597 = vmatpush.msra.mxu0 %v2462
    %2598 = vmatpush.msra.mxu0 %v2461
    %2599 = vmatmul.f32.gmra.mxu0 %v2407
    %v2600 = vpop.f32.mrf.mxu0
    %v2601 = vadd.f32 %v2572, %v2600
    %2602 = vmatmul.f32.gmra.mxu0 %v2413
    %v2603 = vpop.f32.mrf.mxu0
    %v2604 = vadd.f32 %v2575, %v2603
    %2605 = vmatmul.f32.gmra.mxu0 %v2419
    %v2606 = vpop.f32.mrf.mxu0
    %v2607 = vadd.f32 %v2578, %v2606
    %2608 = vmatmul.f32.gmra.mxu0 %v2425
    %v2609 = vpop.f32.mrf.mxu0
    %v2610 = vadd.f32 %v2581, %v2609
    %2611 = vdwg.mxu0
    %2612 = vmatpush.msra.mxu0 %v2492
    %2613 = vmatpush.msra.mxu0 %v2491
    %2614 = vmatpush.msra.mxu0 %v2490
    %2615 = vmatpush.msra.mxu0 %v2489
    %2616 = vmatpush.msra.mxu0 %v2488
    %2617 = vmatpush.msra.mxu0 %v2487
    %2618 = vmatpush.msra.mxu0 %v2486
    %2619 = vmatpush.msra.mxu0 %v2485
    %2620 = vmatpush.msra.mxu0 %v2484
    %2621 = vmatpush.msra.mxu0 %v2483
    %2622 = vmatpush.msra.mxu0 %v2482
    %2623 = vmatpush.msra.mxu0 %v2481
    %2624 = vmatpush.msra.mxu0 %v2480
    %2625 = vmatpush.msra.mxu0 %v2479
    %2626 = vmatpush.msra.mxu0 %v2478
    %2627 = vmatpush.msra.mxu0 %v2477
    %2628 = vmatmul.f32.gmra.mxu0 %v2408
    %v2629 = vpop.f32.mrf.mxu0
    %v2630 = vadd.f32 %v2601, %v2629
    %2631 = vmatmul.f32.gmra.mxu0 %v2414
    %v2632 = vpop.f32.mrf.mxu0
    %v2633 = vadd.f32 %v2604, %v2632
    %2634 = vmatmul.f32.gmra.mxu0 %v2420
    %v2635 = vpop.f32.mrf.mxu0
    %v2636 = vadd.f32 %v2607, %v2635
    %2637 = vmatmul.f32.gmra.mxu0 %v2426
    %v2638 = vpop.f32.mrf.mxu0
    %v2639 = vadd.f32 %v2610, %v2638
    %2640 = vdwg.mxu0
    %2641 = vmatpush.msra.mxu0 %v2508
    %2642 = vmatpush.msra.mxu0 %v2507
    %2643 = vmatpush.msra.mxu0 %v2506
    %2644 = vmatpush.msra.mxu0 %v2505
    %2645 = vmatpush.msra.mxu0 %v2504
    %2646 = vmatpush.msra.mxu0 %v2503
    %2647 = vmatpush.msra.mxu0 %v2502
    %2648 = vmatpush.msra.mxu0 %v2501
    %2649 = vmatpush.msra.mxu0 %v2500
    %2650 = vmatpush.msra.mxu0 %v2499
    %2651 = vmatpush.msra.mxu0 %v2498
    %2652 = vmatpush.msra.mxu0 %v2497
    %2653 = vmatpush.msra.mxu0 %v2496
    %2654 = vmatpush.msra.mxu0 %v2495
    %2655 = vmatpush.msra.mxu0 %v2494
    %2656 = vmatpush.msra.mxu0 %v2493
    %2657 = vmatmul.f32.gmra.mxu0 %v2409
    %v2658 = vpop.f32.mrf.mxu0
    %v2659 = vadd.f32 %v2630, %v2658
    %2660 = vmatmul.f32.gmra.mxu0 %v2415
    %v2661 = vpop.f32.mrf.mxu0
    %v2662 = vadd.f32 %v2633, %v2661
    %2663 = vmatmul.f32.gmra.mxu0 %v2421
    %v2664 = vpop.f32.mrf.mxu0
    %v2665 = vadd.f32 %v2636, %v2664
    %2666 = vmatmul.f32.gmra.mxu0 %v2427
    %v2667 = vpop.f32.mrf.mxu0
    %v2668 = vadd.f32 %v2639, %v2667
    %2669 = vdwg.mxu0
    %2670 = vmatpush.msra.mxu0 %v2524
    %2671 = vmatpush.msra.mxu0 %v2523
    %2672 = vmatpush.msra.mxu0 %v2522
    %2673 = vmatpush.msra.mxu0 %v2521
    %2674 = vmatpush.msra.mxu0 %v2520
    %2675 = vmatpush.msra.mxu0 %v2519
    %2676 = vmatpush.msra.mxu0 %v2518
    %2677 = vmatpush.msra.mxu0 %v2517
    %2678 = vmatpush.msra.mxu0 %v2516
    %2679 = vmatpush.msra.mxu0 %v2515
    %2680 = vmatpush.msra.mxu0 %v2514
    %2681 = vmatpush.msra.mxu0 %v2513
    %2682 = vmatpush.msra.mxu0 %v2512
    %2683 = vmatpush.msra.mxu0 %v2511
    %2684 = vmatpush.msra.mxu0 %v2510
    %2685 = vmatpush.msra.mxu0 %v2509
    %2686 = vmatmul.f32.gmra.mxu0 %v2410
    %v2687 = vpop.f32.mrf.mxu0
    %v2688 = vadd.f32 %v2659, %v2687
    %2689 = vmatmul.f32.gmra.mxu0 %v2416
    %v2690 = vpop.f32.mrf.mxu0
    %v2691 = vadd.f32 %v2662, %v2690
    %2692 = vmatmul.f32.gmra.mxu0 %v2422
    %v2693 = vpop.f32.mrf.mxu0
    %v2694 = vadd.f32 %v2665, %v2693
    %2695 = vmatmul.f32.gmra.mxu0 %v2428
    %v2696 = vpop.f32.mrf.mxu0
    %v2697 = vadd.f32 %v2668, %v2696
    %2698 = vdwg.mxu0
    %vm2699 = vcmp.gt.f32.partialorder %v2688, 0.0
    %vm2700 = vcmp.gt.f32.partialorder %v2691, 0.0
    %vm2701 = vcmp.gt.f32.partialorder %v2694, 0.0
    %vm2702 = vcmp.gt.f32.partialorder %v2697, 0.0
    %v2703 = vmin.f32 %v2688, 0.0
    %v2704 = vmin.f32 %v2691, 0.0
    %v2705 = vmin.f32 %v2694, 0.0
    %v2706 = vmin.f32 %v2697, 0.0
    %v2707 = vmul.f32 %v2703, 1.442695
    %v2708 = vpow.pop %v2707
    %v2709 = vmul.f32 %v2704, 1.442695
    %v2710 = vpow.pop %v2709
    %v2711 = vmul.f32 %v2705, 1.442695
    %v2712 = vpow.pop %v2711
    %v2713 = vmul.f32 %v2706, 1.442695
    %v2714 = vpow.pop %v2713
    %v2715 = vsub.f32 %v2708, 1.0
    %v2716 = vsub.f32 %v2710, 1.0
    %v2717 = vsub.f32 %v2712, 1.0
    %v2718 = vsub.f32 %v2714, 1.0
    %v2719 = vsel %vm2699, %v2688, %v2715
    %v2720 = vsel %vm2700, %v2691, %v2716
    %v2721 = vsel %vm2701, %v2694, %v2717
    %v2722 = vsel %vm2702, %v2697, %v2718
    %2723 = vst [vmem:[#allocation3 + $0x8] sm:$0xff] %v2719
    %2724 = vst [vmem:[#allocation3 + $0x28] sm:$0xff] %v2720
    %2725 = vst [vmem:[#allocation3 + $0x48] sm:$0xff] %v2721
    %2726 = vst [vmem:[#allocation3 + $0x68] sm:$0xff] %v2722
    %v2727 = vld [vmem:[#allocation2 + $0x30] sm:$0xff]
    %v2728 = vld [vmem:[#allocation2 + $0x38] sm:$0xff]
    %v2729 = vld [vmem:[#allocation2 + $0x40] sm:$0xff]
    %v2730 = vld [vmem:[#allocation2 + $0x48] sm:$0xff]
    %v2731 = vld [vmem:[#allocation2 + $0x50] sm:$0xff]
    %v2732 = vld [vmem:[#allocation2 + $0x58] sm:$0xff]
    %v2733 = vld [vmem:[#allocation2 + $0xb0] sm:$0xff]
    %v2734 = vld [vmem:[#allocation2 + $0xb8] sm:$0xff]
    %v2735 = vld [vmem:[#allocation2 + $0xc0] sm:$0xff]
    %v2736 = vld [vmem:[#allocation2 + $0xc8] sm:$0xff]
    %v2737 = vld [vmem:[#allocation2 + $0xd0] sm:$0xff]
    %v2738 = vld [vmem:[#allocation2 + $0xd8] sm:$0xff]
    %v2739 = vld [vmem:[#allocation2 + $0x130] sm:$0xff]
    %v2740 = vld [vmem:[#allocation2 + $0x138] sm:$0xff]
    %v2741 = vld [vmem:[#allocation2 + $0x140] sm:$0xff]
    %v2742 = vld [vmem:[#allocation2 + $0x148] sm:$0xff]
    %v2743 = vld [vmem:[#allocation2 + $0x150] sm:$0xff]
    %v2744 = vld [vmem:[#allocation2 + $0x158] sm:$0xff]
    %v2745 = vld [vmem:[#allocation2 + $0x1b0] sm:$0xff]
    %v2746 = vld [vmem:[#allocation2 + $0x1b8] sm:$0xff]
    %v2747 = vld [vmem:[#allocation2 + $0x1c0] sm:$0xff]
    %v2748 = vld [vmem:[#allocation2 + $0x1c8] sm:$0xff]
    %v2749 = vld [vmem:[#allocation2 + $0x1d0] sm:$0xff]
    %v2750 = vld [vmem:[#allocation2 + $0x1d8] sm:$0xff]
    %v2751 = vld [vmem:[#allocation4] sm:$0xff]
    %v2752 = vld [vmem:[#allocation4 + $0x8] sm:$0xff]
    %v2753 = vld [vmem:[#allocation4 + $0x10] sm:$0xff]
    %v2754 = vld [vmem:[#allocation4 + $0x18] sm:$0xff]
    %v2755 = vld [vmem:[#allocation4 + $0x20] sm:$0xff]
    %v2756 = vld [vmem:[#allocation4 + $0x28] sm:$0xff]
    %v2757 = vld [vmem:[#allocation4 + $0x30] sm:$0xff]
    %v2758 = vld [vmem:[#allocation4 + $0x38] sm:$0xff]
    %v2759 = vld [vmem:[#allocation4 + $0x40] sm:$0xff]
    %v2760 = vld [vmem:[#allocation4 + $0x48] sm:$0xff]
    %v2761 = vld [vmem:[#allocation4 + $0x50] sm:$0xff]
    %v2762 = vld [vmem:[#allocation4 + $0x58] sm:$0xff]
    %v2763 = vld [vmem:[#allocation4 + $0x60] sm:$0xff]
    %v2764 = vld [vmem:[#allocation4 + $0x68] sm:$0xff]
    %v2765 = vld [vmem:[#allocation4 + $0x70] sm:$0xff]
    %v2766 = vld [vmem:[#allocation4 + $0x78] sm:$0xff]
    %v2767 = vld [vmem:[#allocation4 + $0x80] sm:$0xff]
    %v2768 = vld [vmem:[#allocation4 + $0x88] sm:$0xff]
    %v2769 = vld [vmem:[#allocation4 + $0x90] sm:$0xff]
    %v2770 = vld [vmem:[#allocation4 + $0x98] sm:$0xff]
    %v2771 = vld [vmem:[#allocation4 + $0xa0] sm:$0xff]
    %v2772 = vld [vmem:[#allocation4 + $0xa8] sm:$0xff]
    %v2773 = vld [vmem:[#allocation4 + $0xb0] sm:$0xff]
    %v2774 = vld [vmem:[#allocation4 + $0xb8] sm:$0xff]
    %v2775 = vld [vmem:[#allocation4 + $0xc0] sm:$0xff]
    %v2776 = vld [vmem:[#allocation4 + $0xc8] sm:$0xff]
    %v2777 = vld [vmem:[#allocation4 + $0xd0] sm:$0xff]
    %v2778 = vld [vmem:[#allocation4 + $0xd8] sm:$0xff]
    %v2779 = vld [vmem:[#allocation4 + $0xe0] sm:$0xff]
    %v2780 = vld [vmem:[#allocation4 + $0xe8] sm:$0xff]
    %v2781 = vld [vmem:[#allocation4 + $0xf0] sm:$0xff]
    %v2782 = vld [vmem:[#allocation4 + $0xf8] sm:$0xff]
    %v2783 = vld [vmem:[#allocation4 + $0x100] sm:$0xff]
    %v2784 = vld [vmem:[#allocation4 + $0x108] sm:$0xff]
    %v2785 = vld [vmem:[#allocation4 + $0x110] sm:$0xff]
    %v2786 = vld [vmem:[#allocation4 + $0x118] sm:$0xff]
    %v2787 = vld [vmem:[#allocation4 + $0x120] sm:$0xff]
    %v2788 = vld [vmem:[#allocation4 + $0x128] sm:$0xff]
    %v2789 = vld [vmem:[#allocation4 + $0x130] sm:$0xff]
    %v2790 = vld [vmem:[#allocation4 + $0x138] sm:$0xff]
    %v2791 = vld [vmem:[#allocation4 + $0x140] sm:$0xff]
    %v2792 = vld [vmem:[#allocation4 + $0x148] sm:$0xff]
    %v2793 = vld [vmem:[#allocation4 + $0x150] sm:$0xff]
    %v2794 = vld [vmem:[#allocation4 + $0x158] sm:$0xff]
    %v2795 = vld [vmem:[#allocation4 + $0x160] sm:$0xff]
    %v2796 = vld [vmem:[#allocation4 + $0x168] sm:$0xff]
    %v2797 = vld [vmem:[#allocation4 + $0x170] sm:$0xff]
    %v2798 = vld [vmem:[#allocation4 + $0x178] sm:$0xff]
    %v2799 = vld [vmem:[#allocation4 + $0x180] sm:$0xff]
    %v2800 = vld [vmem:[#allocation4 + $0x188] sm:$0xff]
    %v2801 = vld [vmem:[#allocation4 + $0x190] sm:$0xff]
    %v2802 = vld [vmem:[#allocation4 + $0x198] sm:$0xff]
    %v2803 = vld [vmem:[#allocation4 + $0x1a0] sm:$0xff]
    %v2804 = vld [vmem:[#allocation4 + $0x1a8] sm:$0xff]
    %v2805 = vld [vmem:[#allocation4 + $0x1b0] sm:$0xff]
    %v2806 = vld [vmem:[#allocation4 + $0x1b8] sm:$0xff]
    %v2807 = vld [vmem:[#allocation4 + $0x1c0] sm:$0xff]
    %v2808 = vld [vmem:[#allocation4 + $0x1c8] sm:$0xff]
    %v2809 = vld [vmem:[#allocation4 + $0x1d0] sm:$0xff]
    %v2810 = vld [vmem:[#allocation4 + $0x1d8] sm:$0xff]
    %v2811 = vld [vmem:[#allocation4 + $0x1e0] sm:$0xff]
    %v2812 = vld [vmem:[#allocation4 + $0x1e8] sm:$0xff]
    %v2813 = vld [vmem:[#allocation4 + $0x1f0] sm:$0xff]
    %v2814 = vld [vmem:[#allocation4 + $0x1f8] sm:$0xff]
    %v2815 = vld [vmem:[#allocation4 + $0x200] sm:$0xff]
    %v2816 = vld [vmem:[#allocation4 + $0x208] sm:$0xff]
    %v2817 = vld [vmem:[#allocation4 + $0x210] sm:$0xff]
    %v2818 = vld [vmem:[#allocation4 + $0x218] sm:$0xff]
    %v2819 = vld [vmem:[#allocation4 + $0x220] sm:$0xff]
    %v2820 = vld [vmem:[#allocation4 + $0x228] sm:$0xff]
    %v2821 = vld [vmem:[#allocation4 + $0x230] sm:$0xff]
    %v2822 = vld [vmem:[#allocation4 + $0x238] sm:$0xff]
    %v2823 = vld [vmem:[#allocation4 + $0x240] sm:$0xff]
    %v2824 = vld [vmem:[#allocation4 + $0x248] sm:$0xff]
    %v2825 = vld [vmem:[#allocation4 + $0x250] sm:$0xff]
    %v2826 = vld [vmem:[#allocation4 + $0x258] sm:$0xff]
    %v2827 = vld [vmem:[#allocation4 + $0x260] sm:$0xff]
    %v2828 = vld [vmem:[#allocation4 + $0x268] sm:$0xff]
    %v2829 = vld [vmem:[#allocation4 + $0x270] sm:$0xff]
    %v2830 = vld [vmem:[#allocation4 + $0x278] sm:$0xff]
    %v2831 = vld [vmem:[#allocation4 + $0x280] sm:$0xff]
    %v2832 = vld [vmem:[#allocation4 + $0x288] sm:$0xff]
    %v2833 = vld [vmem:[#allocation4 + $0x290] sm:$0xff]
    %v2834 = vld [vmem:[#allocation4 + $0x298] sm:$0xff]
    %v2835 = vld [vmem:[#allocation4 + $0x2a0] sm:$0xff]
    %v2836 = vld [vmem:[#allocation4 + $0x2a8] sm:$0xff]
    %v2837 = vld [vmem:[#allocation4 + $0x2b0] sm:$0xff]
    %v2838 = vld [vmem:[#allocation4 + $0x2b8] sm:$0xff]
    %v2839 = vld [vmem:[#allocation4 + $0x2c0] sm:$0xff]
    %v2840 = vld [vmem:[#allocation4 + $0x2c8] sm:$0xff]
    %v2841 = vld [vmem:[#allocation4 + $0x2d0] sm:$0xff]
    %v2842 = vld [vmem:[#allocation4 + $0x2d8] sm:$0xff]
    %v2843 = vld [vmem:[#allocation4 + $0x2e0] sm:$0xff]
    %v2844 = vld [vmem:[#allocation4 + $0x2e8] sm:$0xff]
    %v2845 = vld [vmem:[#allocation4 + $0x2f0] sm:$0xff]
    %v2846 = vld [vmem:[#allocation4 + $0x2f8] sm:$0xff]
    %2847 = vmatpush.msra.mxu0 %v2766
    %2848 = vmatpush.msra.mxu0 %v2765
    %2849 = vmatpush.msra.mxu0 %v2764
    %2850 = vmatpush.msra.mxu0 %v2763
    %2851 = vmatpush.msra.mxu0 %v2762
    %2852 = vmatpush.msra.mxu0 %v2761
    %2853 = vmatpush.msra.mxu0 %v2760
    %2854 = vmatpush.msra.mxu0 %v2759
    %2855 = vmatpush.msra.mxu0 %v2758
    %2856 = vmatpush.msra.mxu0 %v2757
    %2857 = vmatpush.msra.mxu0 %v2756
    %2858 = vmatpush.msra.mxu0 %v2755
    %2859 = vmatpush.msra.mxu0 %v2754
    %2860 = vmatpush.msra.mxu0 %v2753
    %2861 = vmatpush.msra.mxu0 %v2752
    %2862 = vmatpush.msra.mxu0 %v2751
    %2863 = vmatmul.f32.gmra.mxu0 %v2727
    %v2864 = vpop.f32.mrf.mxu0
    %v2865 = vadd.f32 %v2179, %v2864
    %2866 = vmatmul.f32.gmra.mxu0 %v2733
    %v2867 = vpop.f32.mrf.mxu0
    %v2868 = vadd.f32 %v2179, %v2867
    %2869 = vmatmul.f32.gmra.mxu0 %v2739
    %v2870 = vpop.f32.mrf.mxu0
    %v2871 = vadd.f32 %v2179, %v2870
    %2872 = vmatmul.f32.gmra.mxu0 %v2745
    %v2873 = vpop.f32.mrf.mxu0
    %v2874 = vadd.f32 %v2179, %v2873
    %2875 = vdwg.mxu0
    %2876 = vmatpush.msra.mxu0 %v2782
    %2877 = vmatpush.msra.mxu0 %v2781
    %2878 = vmatpush.msra.mxu0 %v2780
    %2879 = vmatpush.msra.mxu0 %v2779
    %2880 = vmatpush.msra.mxu0 %v2778
    %2881 = vmatpush.msra.mxu0 %v2777
    %2882 = vmatpush.msra.mxu0 %v2776
    %2883 = vmatpush.msra.mxu0 %v2775
    %2884 = vmatpush.msra.mxu0 %v2774
    %2885 = vmatpush.msra.mxu0 %v2773
    %2886 = vmatpush.msra.mxu0 %v2772
    %2887 = vmatpush.msra.mxu0 %v2771
    %2888 = vmatpush.msra.mxu0 %v2770
    %2889 = vmatpush.msra.mxu0 %v2769
    %2890 = vmatpush.msra.mxu0 %v2768
    %2891 = vmatpush.msra.mxu0 %v2767
    %2892 = vmatmul.f32.gmra.mxu0 %v2728
    %v2893 = vpop.f32.mrf.mxu0
    %v2894 = vadd.f32 %v2865, %v2893
    %2895 = vmatmul.f32.gmra.mxu0 %v2734
    %v2896 = vpop.f32.mrf.mxu0
    %v2897 = vadd.f32 %v2868, %v2896
    %2898 = vmatmul.f32.gmra.mxu0 %v2740
    %v2899 = vpop.f32.mrf.mxu0
    %v2900 = vadd.f32 %v2871, %v2899
    %2901 = vmatmul.f32.gmra.mxu0 %v2746
    %v2902 = vpop.f32.mrf.mxu0
    %v2903 = vadd.f32 %v2874, %v2902
    %2904 = vdwg.mxu0
    %2905 = vmatpush.msra.mxu0 %v2798
    %2906 = vmatpush.msra.mxu0 %v2797
    %2907 = vmatpush.msra.mxu0 %v2796
    %2908 = vmatpush.msra.mxu0 %v2795
    %2909 = vmatpush.msra.mxu0 %v2794
    %2910 = vmatpush.msra.mxu0 %v2793
    %2911 = vmatpush.msra.mxu0 %v2792
    %2912 = vmatpush.msra.mxu0 %v2791
    %2913 = vmatpush.msra.mxu0 %v2790
    %2914 = vmatpush.msra.mxu0 %v2789
    %2915 = vmatpush.msra.mxu0 %v2788
    %2916 = vmatpush.msra.mxu0 %v2787
    %2917 = vmatpush.msra.mxu0 %v2786
    %2918 = vmatpush.msra.mxu0 %v2785
    %2919 = vmatpush.msra.mxu0 %v2784
    %2920 = vmatpush.msra.mxu0 %v2783
    %2921 = vmatmul.f32.gmra.mxu0 %v2729
    %v2922 = vpop.f32.mrf.mxu0
    %v2923 = vadd.f32 %v2894, %v2922
    %2924 = vmatmul.f32.gmra.mxu0 %v2735
    %v2925 = vpop.f32.mrf.mxu0
    %v2926 = vadd.f32 %v2897, %v2925
    %2927 = vmatmul.f32.gmra.mxu0 %v2741
    %v2928 = vpop.f32.mrf.mxu0
    %v2929 = vadd.f32 %v2900, %v2928
    %2930 = vmatmul.f32.gmra.mxu0 %v2747
    %v2931 = vpop.f32.mrf.mxu0
    %v2932 = vadd.f32 %v2903, %v2931
    %2933 = vdwg.mxu0
    %2934 = vmatpush.msra.mxu0 %v2814
    %2935 = vmatpush.msra.mxu0 %v2813
    %2936 = vmatpush.msra.mxu0 %v2812
    %2937 = vmatpush.msra.mxu0 %v2811
    %2938 = vmatpush.msra.mxu0 %v2810
    %2939 = vmatpush.msra.mxu0 %v2809
    %2940 = vmatpush.msra.mxu0 %v2808
    %2941 = vmatpush.msra.mxu0 %v2807
    %2942 = vmatpush.msra.mxu0 %v2806
    %2943 = vmatpush.msra.mxu0 %v2805
    %2944 = vmatpush.msra.mxu0 %v2804
    %2945 = vmatpush.msra.mxu0 %v2803
    %2946 = vmatpush.msra.mxu0 %v2802
    %2947 = vmatpush.msra.mxu0 %v2801
    %2948 = vmatpush.msra.mxu0 %v2800
    %2949 = vmatpush.msra.mxu0 %v2799
    %2950 = vmatmul.f32.gmra.mxu0 %v2730
    %v2951 = vpop.f32.mrf.mxu0
    %v2952 = vadd.f32 %v2923, %v2951
    %2953 = vmatmul.f32.gmra.mxu0 %v2736
    %v2954 = vpop.f32.mrf.mxu0
    %v2955 = vadd.f32 %v2926, %v2954
    %2956 = vmatmul.f32.gmra.mxu0 %v2742
    %v2957 = vpop.f32.mrf.mxu0
    %v2958 = vadd.f32 %v2929, %v2957
    %2959 = vmatmul.f32.gmra.mxu0 %v2748
    %v2960 = vpop.f32.mrf.mxu0
    %v2961 = vadd.f32 %v2932, %v2960
    %2962 = vdwg.mxu0
    %2963 = vmatpush.msra.mxu0 %v2830
    %2964 = vmatpush.msra.mxu0 %v2829
    %2965 = vmatpush.msra.mxu0 %v2828
    %2966 = vmatpush.msra.mxu0 %v2827
    %2967 = vmatpush.msra.mxu0 %v2826
    %2968 = vmatpush.msra.mxu0 %v2825
    %2969 = vmatpush.msra.mxu0 %v2824
    %2970 = vmatpush.msra.mxu0 %v2823
    %2971 = vmatpush.msra.mxu0 %v2822
    %2972 = vmatpush.msra.mxu0 %v2821
    %2973 = vmatpush.msra.mxu0 %v2820
    %2974 = vmatpush.msra.mxu0 %v2819
    %2975 = vmatpush.msra.mxu0 %v2818
    %2976 = vmatpush.msra.mxu0 %v2817
    %2977 = vmatpush.msra.mxu0 %v2816
    %2978 = vmatpush.msra.mxu0 %v2815
    %2979 = vmatmul.f32.gmra.mxu0 %v2731
    %v2980 = vpop.f32.mrf.mxu0
    %v2981 = vadd.f32 %v2952, %v2980
    %2982 = vmatmul.f32.gmra.mxu0 %v2737
    %v2983 = vpop.f32.mrf.mxu0
    %v2984 = vadd.f32 %v2955, %v2983
    %2985 = vmatmul.f32.gmra.mxu0 %v2743
    %v2986 = vpop.f32.mrf.mxu0
    %v2987 = vadd.f32 %v2958, %v2986
    %2988 = vmatmul.f32.gmra.mxu0 %v2749
    %v2989 = vpop.f32.mrf.mxu0
    %v2990 = vadd.f32 %v2961, %v2989
    %2991 = vdwg.mxu0
    %2992 = vmatpush.msra.mxu0 %v2846
    %2993 = vmatpush.msra.mxu0 %v2845
    %2994 = vmatpush.msra.mxu0 %v2844
    %2995 = vmatpush.msra.mxu0 %v2843
    %2996 = vmatpush.msra.mxu0 %v2842
    %2997 = vmatpush.msra.mxu0 %v2841
    %2998 = vmatpush.msra.mxu0 %v2840
    %2999 = vmatpush.msra.mxu0 %v2839
    %3000 = vmatpush.msra.mxu0 %v2838
    %3001 = vmatpush.msra.mxu0 %v2837
    %3002 = vmatpush.msra.mxu0 %v2836
    %3003 = vmatpush.msra.mxu0 %v2835
    %3004 = vmatpush.msra.mxu0 %v2834
    %3005 = vmatpush.msra.mxu0 %v2833
    %3006 = vmatpush.msra.mxu0 %v2832
    %3007 = vmatpush.msra.mxu0 %v2831
    %3008 = vmatmul.f32.gmra.mxu0 %v2732
    %v3009 = vpop.f32.mrf.mxu0
    %v3010 = vadd.f32 %v2981, %v3009
    %3011 = vmatmul.f32.gmra.mxu0 %v2738
    %v3012 = vpop.f32.mrf.mxu0
    %v3013 = vadd.f32 %v2984, %v3012
    %3014 = vmatmul.f32.gmra.mxu0 %v2744
    %v3015 = vpop.f32.mrf.mxu0
    %v3016 = vadd.f32 %v2987, %v3015
    %3017 = vmatmul.f32.gmra.mxu0 %v2750
    %v3018 = vpop.f32.mrf.mxu0
    %v3019 = vadd.f32 %v2990, %v3018
    %3020 = vdwg.mxu0
    %vm3021 = vcmp.gt.f32.partialorder %v3010, 0.0
    %vm3022 = vcmp.gt.f32.partialorder %v3013, 0.0
    %vm3023 = vcmp.gt.f32.partialorder %v3016, 0.0
    %vm3024 = vcmp.gt.f32.partialorder %v3019, 0.0
    %v3025 = vmin.f32 %v3010, 0.0
    %v3026 = vmin.f32 %v3013, 0.0
    %v3027 = vmin.f32 %v3016, 0.0
    %v3028 = vmin.f32 %v3019, 0.0
    %v3029 = vmul.f32 %v3025, 1.442695
    %v3030 = vpow.pop %v3029
    %v3031 = vmul.f32 %v3026, 1.442695
    %v3032 = vpow.pop %v3031
    %v3033 = vmul.f32 %v3027, 1.442695
    %v3034 = vpow.pop %v3033
    %v3035 = vmul.f32 %v3028, 1.442695
    %v3036 = vpow.pop %v3035
    %v3037 = vsub.f32 %v3030, 1.0
    %v3038 = vsub.f32 %v3032, 1.0
    %v3039 = vsub.f32 %v3034, 1.0
    %v3040 = vsub.f32 %v3036, 1.0
    %v3041 = vsel %vm3021, %v3010, %v3037
    %v3042 = vsel %vm3022, %v3013, %v3038
    %v3043 = vsel %vm3023, %v3016, %v3039
    %v3044 = vsel %vm3024, %v3019, %v3040
    %3045 = vst [vmem:[#allocation3 + $0x10] sm:$0xff] %v3041
    %3046 = vst [vmem:[#allocation3 + $0x30] sm:$0xff] %v3042
    %3047 = vst [vmem:[#allocation3 + $0x50] sm:$0xff] %v3043
    %3048 = vst [vmem:[#allocation3 + $0x70] sm:$0xff] %v3044
    %v3049 = vld [vmem:[#allocation2 + $0x50] sm:$0xff]
    %v3050 = vld [vmem:[#allocation2 + $0x58] sm:$0xff]
    %v3051 = vld [vmem:[#allocation2 + $0x60] sm:$0xff]
    %v3052 = vld [vmem:[#allocation2 + $0x68] sm:$0xff]
    %v3053 = vld [vmem:[#allocation2 + $0x70] sm:$0xff]
    %v3054 = vld [vmem:[#allocation2 + $0x78] sm:$0xff]
    %v3055 = vld [vmem:[#allocation2 + $0xd0] sm:$0xff]
    %v3056 = vld [vmem:[#allocation2 + $0xd8] sm:$0xff]
    %v3057 = vld [vmem:[#allocation2 + $0xe0] sm:$0xff]
    %v3058 = vld [vmem:[#allocation2 + $0xe8] sm:$0xff]
    %v3059 = vld [vmem:[#allocation2 + $0xf0] sm:$0xff]
    %v3060 = vld [vmem:[#allocation2 + $0xf8] sm:$0xff]
    %v3061 = vld [vmem:[#allocation2 + $0x150] sm:$0xff]
    %v3062 = vld [vmem:[#allocation2 + $0x158] sm:$0xff]
    %v3063 = vld [vmem:[#allocation2 + $0x160] sm:$0xff]
    %v3064 = vld [vmem:[#allocation2 + $0x168] sm:$0xff]
    %v3065 = vld [vmem:[#allocation2 + $0x170] sm:$0xff]
    %v3066 = vld [vmem:[#allocation2 + $0x178] sm:$0xff]
    %v3067 = vld [vmem:[#allocation2 + $0x1d0] sm:$0xff]
    %v3068 = vld [vmem:[#allocation2 + $0x1d8] sm:$0xff]
    %v3069 = vld [vmem:[#allocation2 + $0x1e0] sm:$0xff]
    %v3070 = vld [vmem:[#allocation2 + $0x1e8] sm:$0xff]
    %v3071 = vld [vmem:[#allocation2 + $0x1f0] sm:$0xff]
    %v3072 = vld [vmem:[#allocation2 + $0x1f8] sm:$0xff]
    %v3073 = vld [vmem:[#allocation4] sm:$0xff]
    %v3074 = vld [vmem:[#allocation4 + $0x8] sm:$0xff]
    %v3075 = vld [vmem:[#allocation4 + $0x10] sm:$0xff]
    %v3076 = vld [vmem:[#allocation4 + $0x18] sm:$0xff]
    %v3077 = vld [vmem:[#allocation4 + $0x20] sm:$0xff]
    %v3078 = vld [vmem:[#allocation4 + $0x28] sm:$0xff]
    %v3079 = vld [vmem:[#allocation4 + $0x30] sm:$0xff]
    %v3080 = vld [vmem:[#allocation4 + $0x38] sm:$0xff]
    %v3081 = vld [vmem:[#allocation4 + $0x40] sm:$0xff]
    %v3082 = vld [vmem:[#allocation4 + $0x48] sm:$0xff]
    %v3083 = vld [vmem:[#allocation4 + $0x50] sm:$0xff]
    %v3084 = vld [vmem:[#allocation4 + $0x58] sm:$0xff]
    %v3085 = vld [vmem:[#allocation4 + $0x60] sm:$0xff]
    %v3086 = vld [vmem:[#allocation4 + $0x68] sm:$0xff]
    %v3087 = vld [vmem:[#allocation4 + $0x70] sm:$0xff]
    %v3088 = vld [vmem:[#allocation4 + $0x78] sm:$0xff]
    %v3089 = vld [vmem:[#allocation4 + $0x80] sm:$0xff]
    %v3090 = vld [vmem:[#allocation4 + $0x88] sm:$0xff]
    %v3091 = vld [vmem:[#allocation4 + $0x90] sm:$0xff]
    %v3092 = vld [vmem:[#allocation4 + $0x98] sm:$0xff]
    %v3093 = vld [vmem:[#allocation4 + $0xa0] sm:$0xff]
    %v3094 = vld [vmem:[#allocation4 + $0xa8] sm:$0xff]
    %v3095 = vld [vmem:[#allocation4 + $0xb0] sm:$0xff]
    %v3096 = vld [vmem:[#allocation4 + $0xb8] sm:$0xff]
    %v3097 = vld [vmem:[#allocation4 + $0xc0] sm:$0xff]
    %v3098 = vld [vmem:[#allocation4 + $0xc8] sm:$0xff]
    %v3099 = vld [vmem:[#allocation4 + $0xd0] sm:$0xff]
    %v3100 = vld [vmem:[#allocation4 + $0xd8] sm:$0xff]
    %v3101 = vld [vmem:[#allocation4 + $0xe0] sm:$0xff]
    %v3102 = vld [vmem:[#allocation4 + $0xe8] sm:$0xff]
    %v3103 = vld [vmem:[#allocation4 + $0xf0] sm:$0xff]
    %v3104 = vld [vmem:[#allocation4 + $0xf8] sm:$0xff]
    %v3105 = vld [vmem:[#allocation4 + $0x100] sm:$0xff]
    %v3106 = vld [vmem:[#allocation4 + $0x108] sm:$0xff]
    %v3107 = vld [vmem:[#allocation4 + $0x110] sm:$0xff]
    %v3108 = vld [vmem:[#allocation4 + $0x118] sm:$0xff]
    %v3109 = vld [vmem:[#allocation4 + $0x120] sm:$0xff]
    %v3110 = vld [vmem:[#allocation4 + $0x128] sm:$0xff]
    %v3111 = vld [vmem:[#allocation4 + $0x130] sm:$0xff]
    %v3112 = vld [vmem:[#allocation4 + $0x138] sm:$0xff]
    %v3113 = vld [vmem:[#allocation4 + $0x140] sm:$0xff]
    %v3114 = vld [vmem:[#allocation4 + $0x148] sm:$0xff]
    %v3115 = vld [vmem:[#allocation4 + $0x150] sm:$0xff]
    %v3116 = vld [vmem:[#allocation4 + $0x158] sm:$0xff]
    %v3117 = vld [vmem:[#allocation4 + $0x160] sm:$0xff]
    %v3118 = vld [vmem:[#allocation4 + $0x168] sm:$0xff]
    %v3119 = vld [vmem:[#allocation4 + $0x170] sm:$0xff]
    %v3120 = vld [vmem:[#allocation4 + $0x178] sm:$0xff]
    %v3121 = vld [vmem:[#allocation4 + $0x180] sm:$0xff]
    %v3122 = vld [vmem:[#allocation4 + $0x188] sm:$0xff]
    %v3123 = vld [vmem:[#allocation4 + $0x190] sm:$0xff]
    %v3124 = vld [vmem:[#allocation4 + $0x198] sm:$0xff]
    %v3125 = vld [vmem:[#allocation4 + $0x1a0] sm:$0xff]
    %v3126 = vld [vmem:[#allocation4 + $0x1a8] sm:$0xff]
    %v3127 = vld [vmem:[#allocation4 + $0x1b0] sm:$0xff]
    %v3128 = vld [vmem:[#allocation4 + $0x1b8] sm:$0xff]
    %v3129 = vld [vmem:[#allocation4 + $0x1c0] sm:$0xff]
    %v3130 = vld [vmem:[#allocation4 + $0x1c8] sm:$0xff]
    %v3131 = vld [vmem:[#allocation4 + $0x1d0] sm:$0xff]
    %v3132 = vld [vmem:[#allocation4 + $0x1d8] sm:$0xff]
    %v3133 = vld [vmem:[#allocation4 + $0x1e0] sm:$0xff]
    %v3134 = vld [vmem:[#allocation4 + $0x1e8] sm:$0xff]
    %v3135 = vld [vmem:[#allocation4 + $0x1f0] sm:$0xff]
    %v3136 = vld [vmem:[#allocation4 + $0x1f8] sm:$0xff]
    %v3137 = vld [vmem:[#allocation4 + $0x200] sm:$0xff]
    %v3138 = vld [vmem:[#allocation4 + $0x208] sm:$0xff]
    %v3139 = vld [vmem:[#allocation4 + $0x210] sm:$0xff]
    %v3140 = vld [vmem:[#allocation4 + $0x218] sm:$0xff]
    %v3141 = vld [vmem:[#allocation4 + $0x220] sm:$0xff]
    %v3142 = vld [vmem:[#allocation4 + $0x228] sm:$0xff]
    %v3143 = vld [vmem:[#allocation4 + $0x230] sm:$0xff]
    %v3144 = vld [vmem:[#allocation4 + $0x238] sm:$0xff]
    %v3145 = vld [vmem:[#allocation4 + $0x240] sm:$0xff]
    %v3146 = vld [vmem:[#allocation4 + $0x248] sm:$0xff]
    %v3147 = vld [vmem:[#allocation4 + $0x250] sm:$0xff]
    %v3148 = vld [vmem:[#allocation4 + $0x258] sm:$0xff]
    %v3149 = vld [vmem:[#allocation4 + $0x260] sm:$0xff]
    %v3150 = vld [vmem:[#allocation4 + $0x268] sm:$0xff]
    %v3151 = vld [vmem:[#allocation4 + $0x270] sm:$0xff]
    %v3152 = vld [vmem:[#allocation4 + $0x278] sm:$0xff]
    %v3153 = vld [vmem:[#allocation4 + $0x280] sm:$0xff]
    %v3154 = vld [vmem:[#allocation4 + $0x288] sm:$0xff]
    %v3155 = vld [vmem:[#allocation4 + $0x290] sm:$0xff]
    %v3156 = vld [vmem:[#allocation4 + $0x298] sm:$0xff]
    %v3157 = vld [vmem:[#allocation4 + $0x2a0] sm:$0xff]
    %v3158 = vld [vmem:[#allocation4 + $0x2a8] sm:$0xff]
    %v3159 = vld [vmem:[#allocation4 + $0x2b0] sm:$0xff]
    %v3160 = vld [vmem:[#allocation4 + $0x2b8] sm:$0xff]
    %v3161 = vld [vmem:[#allocation4 + $0x2c0] sm:$0xff]
    %v3162 = vld [vmem:[#allocation4 + $0x2c8] sm:$0xff]
    %v3163 = vld [vmem:[#allocation4 + $0x2d0] sm:$0xff]
    %v3164 = vld [vmem:[#allocation4 + $0x2d8] sm:$0xff]
    %v3165 = vld [vmem:[#allocation4 + $0x2e0] sm:$0xff]
    %v3166 = vld [vmem:[#allocation4 + $0x2e8] sm:$0xff]
    %v3167 = vld [vmem:[#allocation4 + $0x2f0] sm:$0xff]
    %v3168 = vld [vmem:[#allocation4 + $0x2f8] sm:$0xff]
    %3169 = vmatpush.msra.mxu0 %v3088
    %3170 = vmatpush.msra.mxu0 %v3087
    %3171 = vmatpush.msra.mxu0 %v3086
    %3172 = vmatpush.msra.mxu0 %v3085
    %3173 = vmatpush.msra.mxu0 %v3084
    %3174 = vmatpush.msra.mxu0 %v3083
    %3175 = vmatpush.msra.mxu0 %v3082
    %3176 = vmatpush.msra.mxu0 %v3081
    %3177 = vmatpush.msra.mxu0 %v3080
    %3178 = vmatpush.msra.mxu0 %v3079
    %3179 = vmatpush.msra.mxu0 %v3078
    %3180 = vmatpush.msra.mxu0 %v3077
    %3181 = vmatpush.msra.mxu0 %v3076
    %3182 = vmatpush.msra.mxu0 %v3075
    %3183 = vmatpush.msra.mxu0 %v3074
    %3184 = vmatpush.msra.mxu0 %v3073
    %3185 = vmatmul.f32.gmra.mxu0 %v3049
    %v3186 = vpop.f32.mrf.mxu0
    %v3187 = vadd.f32 %v2179, %v3186
    %3188 = vmatmul.f32.gmra.mxu0 %v3055
    %v3189 = vpop.f32.mrf.mxu0
    %v3190 = vadd.f32 %v2179, %v3189
    %3191 = vmatmul.f32.gmra.mxu0 %v3061
    %v3192 = vpop.f32.mrf.mxu0
    %v3193 = vadd.f32 %v2179, %v3192
    %3194 = vmatmul.f32.gmra.mxu0 %v3067
    %v3195 = vpop.f32.mrf.mxu0
    %v3196 = vadd.f32 %v2179, %v3195
    %3197 = vdwg.mxu0
    %3198 = vmatpush.msra.mxu0 %v3104
    %3199 = vmatpush.msra.mxu0 %v3103
    %3200 = vmatpush.msra.mxu0 %v3102
    %3201 = vmatpush.msra.mxu0 %v3101
    %3202 = vmatpush.msra.mxu0 %v3100
    %3203 = vmatpush.msra.mxu0 %v3099
    %3204 = vmatpush.msra.mxu0 %v3098
    %3205 = vmatpush.msra.mxu0 %v3097
    %3206 = vmatpush.msra.mxu0 %v3096
    %3207 = vmatpush.msra.mxu0 %v3095
    %3208 = vmatpush.msra.mxu0 %v3094
    %3209 = vmatpush.msra.mxu0 %v3093
    %3210 = vmatpush.msra.mxu0 %v3092
    %3211 = vmatpush.msra.mxu0 %v3091
    %3212 = vmatpush.msra.mxu0 %v3090
    %3213 = vmatpush.msra.mxu0 %v3089
    %3214 = vmatmul.f32.gmra.mxu0 %v3050
    %v3215 = vpop.f32.mrf.mxu0
    %v3216 = vadd.f32 %v3187, %v3215
    %3217 = vmatmul.f32.gmra.mxu0 %v3056
    %v3218 = vpop.f32.mrf.mxu0
    %v3219 = vadd.f32 %v3190, %v3218
    %3220 = vmatmul.f32.gmra.mxu0 %v3062
    %v3221 = vpop.f32.mrf.mxu0
    %v3222 = vadd.f32 %v3193, %v3221
    %3223 = vmatmul.f32.gmra.mxu0 %v3068
    %v3224 = vpop.f32.mrf.mxu0
    %v3225 = vadd.f32 %v3196, %v3224
    %3226 = vdwg.mxu0
    %3227 = vmatpush.msra.mxu0 %v3120
    %3228 = vmatpush.msra.mxu0 %v3119
    %3229 = vmatpush.msra.mxu0 %v3118
    %3230 = vmatpush.msra.mxu0 %v3117
    %3231 = vmatpush.msra.mxu0 %v3116
    %3232 = vmatpush.msra.mxu0 %v3115
    %3233 = vmatpush.msra.mxu0 %v3114
    %3234 = vmatpush.msra.mxu0 %v3113
    %3235 = vmatpush.msra.mxu0 %v3112
    %3236 = vmatpush.msra.mxu0 %v3111
    %3237 = vmatpush.msra.mxu0 %v3110
    %3238 = vmatpush.msra.mxu0 %v3109
    %3239 = vmatpush.msra.mxu0 %v3108
    %3240 = vmatpush.msra.mxu0 %v3107
    %3241 = vmatpush.msra.mxu0 %v3106
    %3242 = vmatpush.msra.mxu0 %v3105
    %3243 = vmatmul.f32.gmra.mxu0 %v3051
    %v3244 = vpop.f32.mrf.mxu0
    %v3245 = vadd.f32 %v3216, %v3244
    %3246 = vmatmul.f32.gmra.mxu0 %v3057
    %v3247 = vpop.f32.mrf.mxu0
    %v3248 = vadd.f32 %v3219, %v3247
    %3249 = vmatmul.f32.gmra.mxu0 %v3063
    %v3250 = vpop.f32.mrf.mxu0
    %v3251 = vadd.f32 %v3222, %v3250
    %3252 = vmatmul.f32.gmra.mxu0 %v3069
    %v3253 = vpop.f32.mrf.mxu0
    %v3254 = vadd.f32 %v3225, %v3253
    %3255 = vdwg.mxu0
    %3256 = vmatpush.msra.mxu0 %v3136
    %3257 = vmatpush.msra.mxu0 %v3135
    %3258 = vmatpush.msra.mxu0 %v3134
    %3259 = vmatpush.msra.mxu0 %v3133
    %3260 = vmatpush.msra.mxu0 %v3132
    %3261 = vmatpush.msra.mxu0 %v3131
    %3262 = vmatpush.msra.mxu0 %v3130
    %3263 = vmatpush.msra.mxu0 %v3129
    %3264 = vmatpush.msra.mxu0 %v3128
    %3265 = vmatpush.msra.mxu0 %v3127
    %3266 = vmatpush.msra.mxu0 %v3126
    %3267 = vmatpush.msra.mxu0 %v3125
    %3268 = vmatpush.msra.mxu0 %v3124
    %3269 = vmatpush.msra.mxu0 %v3123
    %3270 = vmatpush.msra.mxu0 %v3122
    %3271 = vmatpush.msra.mxu0 %v3121
    %3272 = vmatmul.f32.gmra.mxu0 %v3052
    %v3273 = vpop.f32.mrf.mxu0
    %v3274 = vadd.f32 %v3245, %v3273
    %3275 = vmatmul.f32.gmra.mxu0 %v3058
    %v3276 = vpop.f32.mrf.mxu0
    %v3277 = vadd.f32 %v3248, %v3276
    %3278 = vmatmul.f32.gmra.mxu0 %v3064
    %v3279 = vpop.f32.mrf.mxu0
    %v3280 = vadd.f32 %v3251, %v3279
    %3281 = vmatmul.f32.gmra.mxu0 %v3070
    %v3282 = vpop.f32.mrf.mxu0
    %v3283 = vadd.f32 %v3254, %v3282
    %3284 = vdwg.mxu0
    %3285 = vmatpush.msra.mxu0 %v3152
    %3286 = vmatpush.msra.mxu0 %v3151
    %3287 = vmatpush.msra.mxu0 %v3150
    %3288 = vmatpush.msra.mxu0 %v3149
    %3289 = vmatpush.msra.mxu0 %v3148
    %3290 = vmatpush.msra.mxu0 %v3147
    %3291 = vmatpush.msra.mxu0 %v3146
    %3292 = vmatpush.msra.mxu0 %v3145
    %3293 = vmatpush.msra.mxu0 %v3144
    %3294 = vmatpush.msra.mxu0 %v3143
    %3295 = vmatpush.msra.mxu0 %v3142
    %3296 = vmatpush.msra.mxu0 %v3141
    %3297 = vmatpush.msra.mxu0 %v3140
    %3298 = vmatpush.msra.mxu0 %v3139
    %3299 = vmatpush.msra.mxu0 %v3138
    %3300 = vmatpush.msra.mxu0 %v3137
    %3301 = vmatmul.f32.gmra.mxu0 %v3053
    %v3302 = vpop.f32.mrf.mxu0
    %v3303 = vadd.f32 %v3274, %v3302
    %3304 = vmatmul.f32.gmra.mxu0 %v3059
    %v3305 = vpop.f32.mrf.mxu0
    %v3306 = vadd.f32 %v3277, %v3305
    %3307 = vmatmul.f32.gmra.mxu0 %v3065
    %v3308 = vpop.f32.mrf.mxu0
    %v3309 = vadd.f32 %v3280, %v3308
    %3310 = vmatmul.f32.gmra.mxu0 %v3071
    %v3311 = vpop.f32.mrf.mxu0
    %v3312 = vadd.f32 %v3283, %v3311
    %3313 = vdwg.mxu0
    %3314 = vmatpush.msra.mxu0 %v3168
    %3315 = vmatpush.msra.mxu0 %v3167
    %3316 = vmatpush.msra.mxu0 %v3166
    %3317 = vmatpush.msra.mxu0 %v3165
    %3318 = vmatpush.msra.mxu0 %v3164
    %3319 = vmatpush.msra.mxu0 %v3163
    %3320 = vmatpush.msra.mxu0 %v3162
    %3321 = vmatpush.msra.mxu0 %v3161
    %3322 = vmatpush.msra.mxu0 %v3160
    %3323 = vmatpush.msra.mxu0 %v3159
    %3324 = vmatpush.msra.mxu0 %v3158
    %3325 = vmatpush.msra.mxu0 %v3157
    %3326 = vmatpush.msra.mxu0 %v3156
    %3327 = vmatpush.msra.mxu0 %v3155
    %3328 = vmatpush.msra.mxu0 %v3154
    %3329 = vmatpush.msra.mxu0 %v3153
    %3330 = vmatmul.f32.gmra.mxu0 %v3054
    %v3331 = vpop.f32.mrf.mxu0
    %v3332 = vadd.f32 %v3303, %v3331
    %3333 = vmatmul.f32.gmra.mxu0 %v3060
    %v3334 = vpop.f32.mrf.mxu0
    %v3335 = vadd.f32 %v3306, %v3334
    %3336 = vmatmul.f32.gmra.mxu0 %v3066
    %v3337 = vpop.f32.mrf.mxu0
    %v3338 = vadd.f32 %v3309, %v3337
    %3339 = vmatmul.f32.gmra.mxu0 %v3072
    %v3340 = vpop.f32.mrf.mxu0
    %v3341 = vadd.f32 %v3312, %v3340
    %3342 = vdwg.mxu0
    %vm3343 = vcmp.gt.f32.partialorder %v3332, 0.0
    %vm3344 = vcmp.gt.f32.partialorder %v3335, 0.0
    %vm3345 = vcmp.gt.f32.partialorder %v3338, 0.0
    %vm3346 = vcmp.gt.f32.partialorder %v3341, 0.0
    %v3347 = vmin.f32 %v3332, 0.0
    %v3348 = vmin.f32 %v3335, 0.0
    %v3349 = vmin.f32 %v3338, 0.0
    %v3350 = vmin.f32 %v3341, 0.0
    %v3351 = vmul.f32 %v3347, 1.442695
    %v3352 = vpow.pop %v3351
    %v3353 = vmul.f32 %v3348, 1.442695
    %v3354 = vpow.pop %v3353
    %v3355 = vmul.f32 %v3349, 1.442695
    %v3356 = vpow.pop %v3355
    %v3357 = vmul.f32 %v3350, 1.442695
    %v3358 = vpow.pop %v3357
    %v3359 = vsub.f32 %v3352, 1.0
    %v3360 = vsub.f32 %v3354, 1.0
    %v3361 = vsub.f32 %v3356, 1.0
    %v3362 = vsub.f32 %v3358, 1.0
    %v3363 = vsel %vm3343, %v3332, %v3359
    %v3364 = vsel %vm3344, %v3335, %v3360
    %v3365 = vsel %vm3345, %v3338, %v3361
    %v3366 = vsel %vm3346, %v3341, %v3362
    %3367 = vst [vmem:[#allocation3 + $0x18] sm:$0xff] %v3363
    %3368 = vst [vmem:[#allocation3 + $0x38] sm:$0xff] %v3364
    %3369 = vst [vmem:[#allocation3 + $0x58] sm:$0xff] %v3365
    %3370 = vst [vmem:[#allocation3 + $0x78] sm:$0xff] %v3366
    %v3371 = vld [vmem:[%s6] sm:$0xf]
    %v3373 = vperm.slane %v3371, 0
    %v3374 = vperm.slane %v3371, 1
    %v3375 = vperm.slane %v3371, 2
    %v3376 = vperm.slane %v3371, 3
    %v3381 = vld [vmem:[#allocation3] sm:$0xff]
    %v3382 = vld [vmem:[#allocation3 + $0x8] sm:$0xff]
    %v3383 = vld [vmem:[#allocation3 + $0x10] sm:$0xff]
    %v3384 = vld [vmem:[#allocation3 + $0x18] sm:$0xff]
    %v3385 = vld [vmem:[#allocation3 + $0x20] sm:$0xff]
    %v3386 = vld [vmem:[#allocation3 + $0x28] sm:$0xff]
    %v3387 = vld [vmem:[#allocation3 + $0x30] sm:$0xff]
    %v3388 = vld [vmem:[#allocation3 + $0x38] sm:$0xff]
    %v3389 = vld [vmem:[#allocation3 + $0x40] sm:$0xff]
    %v3390 = vld [vmem:[#allocation3 + $0x48] sm:$0xff]
    %v3391 = vld [vmem:[#allocation3 + $0x50] sm:$0xff]
    %v3392 = vld [vmem:[#allocation3 + $0x58] sm:$0xff]
    %v3393 = vld [vmem:[#allocation3 + $0x60] sm:$0xff]
    %v3394 = vld [vmem:[#allocation3 + $0x68] sm:$0xff]
    %v3395 = vld [vmem:[#allocation3 + $0x70] sm:$0xff]
    %v3396 = vld [vmem:[#allocation3 + $0x78] sm:$0xff]
    %v3397 = vld [vmem:[#allocation6] sm:$0xff]
    %v3398 = vld [vmem:[#allocation6 + $0x8] sm:$0xff]
    %v3399 = vld [vmem:[#allocation6 + $0x10] sm:$0xff]
    %v3400 = vld [vmem:[#allocation6 + $0x18] sm:$0xff]
    %v3401 = vld [vmem:[#allocation6 + $0x20] sm:$0xff]
    %v3402 = vld [vmem:[#allocation6 + $0x28] sm:$0xff]
    %v3403 = vld [vmem:[#allocation6 + $0x30] sm:$0xff]
    %v3404 = vld [vmem:[#allocation6 + $0x38] sm:$0xff]
    %v3405 = vld [vmem:[#allocation6 + $0x40] sm:$0xff]
    %v3406 = vld [vmem:[#allocation6 + $0x48] sm:$0xff]
    %v3407 = vld [vmem:[#allocation6 + $0x50] sm:$0xff]
    %v3408 = vld [vmem:[#allocation6 + $0x58] sm:$0xff]
    %v3409 = vld [vmem:[#allocation6 + $0x60] sm:$0xff]
    %v3410 = vld [vmem:[#allocation6 + $0x68] sm:$0xff]
    %v3411 = vld [vmem:[#allocation6 + $0x70] sm:$0xff]
    %v3412 = vld [vmem:[#allocation6 + $0x78] sm:$0xff]
    %v3413 = vld [vmem:[#allocation6 + $0x80] sm:$0xff]
    %v3414 = vld [vmem:[#allocation6 + $0x88] sm:$0xff]
    %v3415 = vld [vmem:[#allocation6 + $0x90] sm:$0xff]
    %v3416 = vld [vmem:[#allocation6 + $0x98] sm:$0xff]
    %v3417 = vld [vmem:[#allocation6 + $0xa0] sm:$0xff]
    %v3418 = vld [vmem:[#allocation6 + $0xa8] sm:$0xff]
    %v3419 = vld [vmem:[#allocation6 + $0xb0] sm:$0xff]
    %v3420 = vld [vmem:[#allocation6 + $0xb8] sm:$0xff]
    %v3421 = vld [vmem:[#allocation6 + $0xc0] sm:$0xff]
    %v3422 = vld [vmem:[#allocation6 + $0xc8] sm:$0xff]
    %v3423 = vld [vmem:[#allocation6 + $0xd0] sm:$0xff]
    %v3424 = vld [vmem:[#allocation6 + $0xd8] sm:$0xff]
    %v3425 = vld [vmem:[#allocation6 + $0xe0] sm:$0xff]
    %v3426 = vld [vmem:[#allocation6 + $0xe8] sm:$0xff]
    %v3427 = vld [vmem:[#allocation6 + $0xf0] sm:$0xff]
    %v3428 = vld [vmem:[#allocation6 + $0xf8] sm:$0xff]
    %v3429 = vld [vmem:[#allocation6 + $0x100] sm:$0xff]
    %v3430 = vld [vmem:[#allocation6 + $0x108] sm:$0xff]
    %v3431 = vld [vmem:[#allocation6 + $0x110] sm:$0xff]
    %v3432 = vld [vmem:[#allocation6 + $0x118] sm:$0xff]
    %v3433 = vld [vmem:[#allocation6 + $0x120] sm:$0xff]
    %v3434 = vld [vmem:[#allocation6 + $0x128] sm:$0xff]
    %v3435 = vld [vmem:[#allocation6 + $0x130] sm:$0xff]
    %v3436 = vld [vmem:[#allocation6 + $0x138] sm:$0xff]
    %v3437 = vld [vmem:[#allocation6 + $0x140] sm:$0xff]
    %v3438 = vld [vmem:[#allocation6 + $0x148] sm:$0xff]
    %v3439 = vld [vmem:[#allocation6 + $0x150] sm:$0xff]
    %v3440 = vld [vmem:[#allocation6 + $0x158] sm:$0xff]
    %v3441 = vld [vmem:[#allocation6 + $0x160] sm:$0xff]
    %v3442 = vld [vmem:[#allocation6 + $0x168] sm:$0xff]
    %v3443 = vld [vmem:[#allocation6 + $0x170] sm:$0xff]
    %v3444 = vld [vmem:[#allocation6 + $0x178] sm:$0xff]
    %v3445 = vld [vmem:[#allocation6 + $0x180] sm:$0xff]
    %v3446 = vld [vmem:[#allocation6 + $0x188] sm:$0xff]
    %v3447 = vld [vmem:[#allocation6 + $0x190] sm:$0xff]
    %v3448 = vld [vmem:[#allocation6 + $0x198] sm:$0xff]
    %v3449 = vld [vmem:[#allocation6 + $0x1a0] sm:$0xff]
    %v3450 = vld [vmem:[#allocation6 + $0x1a8] sm:$0xff]
    %v3451 = vld [vmem:[#allocation6 + $0x1b0] sm:$0xff]
    %v3452 = vld [vmem:[#allocation6 + $0x1b8] sm:$0xff]
    %v3453 = vld [vmem:[#allocation6 + $0x1c0] sm:$0xff]
    %v3454 = vld [vmem:[#allocation6 + $0x1c8] sm:$0xff]
    %v3455 = vld [vmem:[#allocation6 + $0x1d0] sm:$0xff]
    %v3456 = vld [vmem:[#allocation6 + $0x1d8] sm:$0xff]
    %v3457 = vld [vmem:[#allocation6 + $0x1e0] sm:$0xff]
    %v3458 = vld [vmem:[#allocation6 + $0x1e8] sm:$0xff]
    %v3459 = vld [vmem:[#allocation6 + $0x1f0] sm:$0xff]
    %v3460 = vld [vmem:[#allocation6 + $0x1f8] sm:$0xff]
    %v3461 = vld [vmem:[#allocation6 + $0x200] sm:$0xff]
    %v3462 = vld [vmem:[#allocation6 + $0x208] sm:$0xff]
    %v3463 = vld [vmem:[#allocation6 + $0x210] sm:$0xff]
    %v3464 = vld [vmem:[#allocation6 + $0x218] sm:$0xff]
    %v3465 = vld [vmem:[#allocation6 + $0x220] sm:$0xff]
    %v3466 = vld [vmem:[#allocation6 + $0x228] sm:$0xff]
    %v3467 = vld [vmem:[#allocation6 + $0x230] sm:$0xff]
    %v3468 = vld [vmem:[#allocation6 + $0x238] sm:$0xff]
    %v3469 = vld [vmem:[#allocation6 + $0x240] sm:$0xff]
    %v3470 = vld [vmem:[#allocation6 + $0x248] sm:$0xff]
    %v3471 = vld [vmem:[#allocation6 + $0x250] sm:$0xff]
    %v3472 = vld [vmem:[#allocation6 + $0x258] sm:$0xff]
    %v3473 = vld [vmem:[#allocation6 + $0x260] sm:$0xff]
    %v3474 = vld [vmem:[#allocation6 + $0x268] sm:$0xff]
    %v3475 = vld [vmem:[#allocation6 + $0x270] sm:$0xff]
    %v3476 = vld [vmem:[#allocation6 + $0x278] sm:$0xff]
    %v3477 = vld [vmem:[#allocation6 + $0x280] sm:$0xff]
    %v3478 = vld [vmem:[#allocation6 + $0x288] sm:$0xff]
    %v3479 = vld [vmem:[#allocation6 + $0x290] sm:$0xff]
    %v3480 = vld [vmem:[#allocation6 + $0x298] sm:$0xff]
    %v3481 = vld [vmem:[#allocation6 + $0x2a0] sm:$0xff]
    %v3482 = vld [vmem:[#allocation6 + $0x2a8] sm:$0xff]
    %v3483 = vld [vmem:[#allocation6 + $0x2b0] sm:$0xff]
    %v3484 = vld [vmem:[#allocation6 + $0x2b8] sm:$0xff]
    %v3485 = vld [vmem:[#allocation6 + $0x2c0] sm:$0xff]
    %v3486 = vld [vmem:[#allocation6 + $0x2c8] sm:$0xff]
    %v3487 = vld [vmem:[#allocation6 + $0x2d0] sm:$0xff]
    %v3488 = vld [vmem:[#allocation6 + $0x2d8] sm:$0xff]
    %v3489 = vld [vmem:[#allocation6 + $0x2e0] sm:$0xff]
    %v3490 = vld [vmem:[#allocation6 + $0x2e8] sm:$0xff]
    %v3491 = vld [vmem:[#allocation6 + $0x2f0] sm:$0xff]
    %v3492 = vld [vmem:[#allocation6 + $0x2f8] sm:$0xff]
    %v3493 = vld [vmem:[#allocation6 + $0x300] sm:$0xff]
    %v3494 = vld [vmem:[#allocation6 + $0x308] sm:$0xff]
    %v3495 = vld [vmem:[#allocation6 + $0x310] sm:$0xff]
    %v3496 = vld [vmem:[#allocation6 + $0x318] sm:$0xff]
    %v3497 = vld [vmem:[#allocation6 + $0x320] sm:$0xff]
    %v3498 = vld [vmem:[#allocation6 + $0x328] sm:$0xff]
    %v3499 = vld [vmem:[#allocation6 + $0x330] sm:$0xff]
    %v3500 = vld [vmem:[#allocation6 + $0x338] sm:$0xff]
    %v3501 = vld [vmem:[#allocation6 + $0x340] sm:$0xff]
    %v3502 = vld [vmem:[#allocation6 + $0x348] sm:$0xff]
    %v3503 = vld [vmem:[#allocation6 + $0x350] sm:$0xff]
    %v3504 = vld [vmem:[#allocation6 + $0x358] sm:$0xff]
    %v3505 = vld [vmem:[#allocation6 + $0x360] sm:$0xff]
    %v3506 = vld [vmem:[#allocation6 + $0x368] sm:$0xff]
    %v3507 = vld [vmem:[#allocation6 + $0x370] sm:$0xff]
    %v3508 = vld [vmem:[#allocation6 + $0x378] sm:$0xff]
    %v3509 = vld [vmem:[#allocation6 + $0x380] sm:$0xff]
    %v3510 = vld [vmem:[#allocation6 + $0x388] sm:$0xff]
    %v3511 = vld [vmem:[#allocation6 + $0x390] sm:$0xff]
    %v3512 = vld [vmem:[#allocation6 + $0x398] sm:$0xff]
    %v3513 = vld [vmem:[#allocation6 + $0x3a0] sm:$0xff]
    %v3514 = vld [vmem:[#allocation6 + $0x3a8] sm:$0xff]
    %v3515 = vld [vmem:[#allocation6 + $0x3b0] sm:$0xff]
    %v3516 = vld [vmem:[#allocation6 + $0x3b8] sm:$0xff]
    %v3517 = vld [vmem:[#allocation6 + $0x3c0] sm:$0xff]
    %v3518 = vld [vmem:[#allocation6 + $0x3c8] sm:$0xff]
    %v3519 = vld [vmem:[#allocation6 + $0x3d0] sm:$0xff]
    %v3520 = vld [vmem:[#allocation6 + $0x3d8] sm:$0xff]
    %v3521 = vld [vmem:[#allocation6 + $0x3e0] sm:$0xff]
    %v3522 = vld [vmem:[#allocation6 + $0x3e8] sm:$0xff]
    %v3523 = vld [vmem:[#allocation6 + $0x3f0] sm:$0xff]
    %v3524 = vld [vmem:[#allocation6 + $0x3f8] sm:$0xff]
    %v3525 = vld [vmem:[#allocation6 + $0x400] sm:$0xff]
    %v3526 = vld [vmem:[#allocation6 + $0x408] sm:$0xff]
    %v3527 = vld [vmem:[#allocation6 + $0x410] sm:$0xff]
    %v3528 = vld [vmem:[#allocation6 + $0x418] sm:$0xff]
    %v3529 = vld [vmem:[#allocation6 + $0x420] sm:$0xff]
    %v3530 = vld [vmem:[#allocation6 + $0x428] sm:$0xff]
    %v3531 = vld [vmem:[#allocation6 + $0x430] sm:$0xff]
    %v3532 = vld [vmem:[#allocation6 + $0x438] sm:$0xff]
    %v3533 = vld [vmem:[#allocation6 + $0x440] sm:$0xff]
    %v3534 = vld [vmem:[#allocation6 + $0x448] sm:$0xff]
    %v3535 = vld [vmem:[#allocation6 + $0x450] sm:$0xff]
    %v3536 = vld [vmem:[#allocation6 + $0x458] sm:$0xff]
    %v3537 = vld [vmem:[#allocation6 + $0x460] sm:$0xff]
    %v3538 = vld [vmem:[#allocation6 + $0x468] sm:$0xff]
    %v3539 = vld [vmem:[#allocation6 + $0x470] sm:$0xff]
    %v3540 = vld [vmem:[#allocation6 + $0x478] sm:$0xff]
    %v3541 = vld [vmem:[#allocation6 + $0x480] sm:$0xff]
    %v3542 = vld [vmem:[#allocation6 + $0x488] sm:$0xff]
    %v3543 = vld [vmem:[#allocation6 + $0x490] sm:$0xff]
    %v3544 = vld [vmem:[#allocation6 + $0x498] sm:$0xff]
    %v3545 = vld [vmem:[#allocation6 + $0x4a0] sm:$0xff]
    %v3546 = vld [vmem:[#allocation6 + $0x4a8] sm:$0xff]
    %v3547 = vld [vmem:[#allocation6 + $0x4b0] sm:$0xff]
    %v3548 = vld [vmem:[#allocation6 + $0x4b8] sm:$0xff]
    %v3549 = vld [vmem:[#allocation6 + $0x4c0] sm:$0xff]
    %v3550 = vld [vmem:[#allocation6 + $0x4c8] sm:$0xff]
    %v3551 = vld [vmem:[#allocation6 + $0x4d0] sm:$0xff]
    %v3552 = vld [vmem:[#allocation6 + $0x4d8] sm:$0xff]
    %v3553 = vld [vmem:[#allocation6 + $0x4e0] sm:$0xff]
    %v3554 = vld [vmem:[#allocation6 + $0x4e8] sm:$0xff]
    %v3555 = vld [vmem:[#allocation6 + $0x4f0] sm:$0xff]
    %v3556 = vld [vmem:[#allocation6 + $0x4f8] sm:$0xff]
    %v3557 = vld [vmem:[#allocation6 + $0x500] sm:$0xff]
    %v3558 = vld [vmem:[#allocation6 + $0x508] sm:$0xff]
    %v3559 = vld [vmem:[#allocation6 + $0x510] sm:$0xff]
    %v3560 = vld [vmem:[#allocation6 + $0x518] sm:$0xff]
    %v3561 = vld [vmem:[#allocation6 + $0x520] sm:$0xff]
    %v3562 = vld [vmem:[#allocation6 + $0x528] sm:$0xff]
    %v3563 = vld [vmem:[#allocation6 + $0x530] sm:$0xff]
    %v3564 = vld [vmem:[#allocation6 + $0x538] sm:$0xff]
    %v3565 = vld [vmem:[#allocation6 + $0x540] sm:$0xff]
    %v3566 = vld [vmem:[#allocation6 + $0x548] sm:$0xff]
    %v3567 = vld [vmem:[#allocation6 + $0x550] sm:$0xff]
    %v3568 = vld [vmem:[#allocation6 + $0x558] sm:$0xff]
    %v3569 = vld [vmem:[#allocation6 + $0x560] sm:$0xff]
    %v3570 = vld [vmem:[#allocation6 + $0x568] sm:$0xff]
    %v3571 = vld [vmem:[#allocation6 + $0x570] sm:$0xff]
    %v3572 = vld [vmem:[#allocation6 + $0x578] sm:$0xff]
    %v3573 = vld [vmem:[#allocation6 + $0x580] sm:$0xff]
    %v3574 = vld [vmem:[#allocation6 + $0x588] sm:$0xff]
    %v3575 = vld [vmem:[#allocation6 + $0x590] sm:$0xff]
    %v3576 = vld [vmem:[#allocation6 + $0x598] sm:$0xff]
    %v3577 = vld [vmem:[#allocation6 + $0x5a0] sm:$0xff]
    %v3578 = vld [vmem:[#allocation6 + $0x5a8] sm:$0xff]
    %v3579 = vld [vmem:[#allocation6 + $0x5b0] sm:$0xff]
    %v3580 = vld [vmem:[#allocation6 + $0x5b8] sm:$0xff]
    %v3581 = vld [vmem:[#allocation6 + $0x5c0] sm:$0xff]
    %v3582 = vld [vmem:[#allocation6 + $0x5c8] sm:$0xff]
    %v3583 = vld [vmem:[#allocation6 + $0x5d0] sm:$0xff]
    %v3584 = vld [vmem:[#allocation6 + $0x5d8] sm:$0xff]
    %v3585 = vld [vmem:[#allocation6 + $0x5e0] sm:$0xff]
    %v3586 = vld [vmem:[#allocation6 + $0x5e8] sm:$0xff]
    %v3587 = vld [vmem:[#allocation6 + $0x5f0] sm:$0xff]
    %v3588 = vld [vmem:[#allocation6 + $0x5f8] sm:$0xff]
    %v3589 = vld [vmem:[#allocation6 + $0x600] sm:$0xff]
    %v3590 = vld [vmem:[#allocation6 + $0x608] sm:$0xff]
    %v3591 = vld [vmem:[#allocation6 + $0x610] sm:$0xff]
    %v3592 = vld [vmem:[#allocation6 + $0x618] sm:$0xff]
    %v3593 = vld [vmem:[#allocation6 + $0x620] sm:$0xff]
    %v3594 = vld [vmem:[#allocation6 + $0x628] sm:$0xff]
    %v3595 = vld [vmem:[#allocation6 + $0x630] sm:$0xff]
    %v3596 = vld [vmem:[#allocation6 + $0x638] sm:$0xff]
    %v3597 = vld [vmem:[#allocation6 + $0x640] sm:$0xff]
    %v3598 = vld [vmem:[#allocation6 + $0x648] sm:$0xff]
    %v3599 = vld [vmem:[#allocation6 + $0x650] sm:$0xff]
    %v3600 = vld [vmem:[#allocation6 + $0x658] sm:$0xff]
    %v3601 = vld [vmem:[#allocation6 + $0x660] sm:$0xff]
    %v3602 = vld [vmem:[#allocation6 + $0x668] sm:$0xff]
    %v3603 = vld [vmem:[#allocation6 + $0x670] sm:$0xff]
    %v3604 = vld [vmem:[#allocation6 + $0x678] sm:$0xff]
    %v3605 = vld [vmem:[#allocation6 + $0x680] sm:$0xff]
    %v3606 = vld [vmem:[#allocation6 + $0x688] sm:$0xff]
    %v3607 = vld [vmem:[#allocation6 + $0x690] sm:$0xff]
    %v3608 = vld [vmem:[#allocation6 + $0x698] sm:$0xff]
    %v3609 = vld [vmem:[#allocation6 + $0x6a0] sm:$0xff]
    %v3610 = vld [vmem:[#allocation6 + $0x6a8] sm:$0xff]
    %v3611 = vld [vmem:[#allocation6 + $0x6b0] sm:$0xff]
    %v3612 = vld [vmem:[#allocation6 + $0x6b8] sm:$0xff]
    %v3613 = vld [vmem:[#allocation6 + $0x6c0] sm:$0xff]
    %v3614 = vld [vmem:[#allocation6 + $0x6c8] sm:$0xff]
    %v3615 = vld [vmem:[#allocation6 + $0x6d0] sm:$0xff]
    %v3616 = vld [vmem:[#allocation6 + $0x6d8] sm:$0xff]
    %v3617 = vld [vmem:[#allocation6 + $0x6e0] sm:$0xff]
    %v3618 = vld [vmem:[#allocation6 + $0x6e8] sm:$0xff]
    %v3619 = vld [vmem:[#allocation6 + $0x6f0] sm:$0xff]
    %v3620 = vld [vmem:[#allocation6 + $0x6f8] sm:$0xff]
    %v3621 = vld [vmem:[#allocation6 + $0x700] sm:$0xff]
    %v3622 = vld [vmem:[#allocation6 + $0x708] sm:$0xff]
    %v3623 = vld [vmem:[#allocation6 + $0x710] sm:$0xff]
    %v3624 = vld [vmem:[#allocation6 + $0x718] sm:$0xff]
    %v3625 = vld [vmem:[#allocation6 + $0x720] sm:$0xff]
    %v3626 = vld [vmem:[#allocation6 + $0x728] sm:$0xff]
    %v3627 = vld [vmem:[#allocation6 + $0x730] sm:$0xff]
    %v3628 = vld [vmem:[#allocation6 + $0x738] sm:$0xff]
    %v3629 = vld [vmem:[#allocation6 + $0x740] sm:$0xff]
    %v3630 = vld [vmem:[#allocation6 + $0x748] sm:$0xff]
    %v3631 = vld [vmem:[#allocation6 + $0x750] sm:$0xff]
    %v3632 = vld [vmem:[#allocation6 + $0x758] sm:$0xff]
    %v3633 = vld [vmem:[#allocation6 + $0x760] sm:$0xff]
    %v3634 = vld [vmem:[#allocation6 + $0x768] sm:$0xff]
    %v3635 = vld [vmem:[#allocation6 + $0x770] sm:$0xff]
    %v3636 = vld [vmem:[#allocation6 + $0x778] sm:$0xff]
    %v3637 = vld [vmem:[#allocation6 + $0x780] sm:$0xff]
    %v3638 = vld [vmem:[#allocation6 + $0x788] sm:$0xff]
    %v3639 = vld [vmem:[#allocation6 + $0x790] sm:$0xff]
    %v3640 = vld [vmem:[#allocation6 + $0x798] sm:$0xff]
    %v3641 = vld [vmem:[#allocation6 + $0x7a0] sm:$0xff]
    %v3642 = vld [vmem:[#allocation6 + $0x7a8] sm:$0xff]
    %v3643 = vld [vmem:[#allocation6 + $0x7b0] sm:$0xff]
    %v3644 = vld [vmem:[#allocation6 + $0x7b8] sm:$0xff]
    %v3645 = vld [vmem:[#allocation6 + $0x7c0] sm:$0xff]
    %v3646 = vld [vmem:[#allocation6 + $0x7c8] sm:$0xff]
    %v3647 = vld [vmem:[#allocation6 + $0x7d0] sm:$0xff]
    %v3648 = vld [vmem:[#allocation6 + $0x7d8] sm:$0xff]
    %v3649 = vld [vmem:[#allocation6 + $0x7e0] sm:$0xff]
    %v3650 = vld [vmem:[#allocation6 + $0x7e8] sm:$0xff]
    %v3651 = vld [vmem:[#allocation6 + $0x7f0] sm:$0xff]
    %v3652 = vld [vmem:[#allocation6 + $0x7f8] sm:$0xff]
    %3653 = vmatpush.msra.mxu0 %v3457
    %3654 = vmatpush.msra.mxu0 %v3453
    %3655 = vmatpush.msra.mxu0 %v3449
    %3656 = vmatpush.msra.mxu0 %v3445
    %3657 = vmatpush.msra.mxu0 %v3441
    %3658 = vmatpush.msra.mxu0 %v3437
    %3659 = vmatpush.msra.mxu0 %v3433
    %3660 = vmatpush.msra.mxu0 %v3429
    %3661 = vmatpush.msra.mxu0 %v3425
    %3662 = vmatpush.msra.mxu0 %v3421
    %3663 = vmatpush.msra.mxu0 %v3417
    %3664 = vmatpush.msra.mxu0 %v3413
    %3665 = vmatpush.msra.mxu0 %v3409
    %3666 = vmatpush.msra.mxu0 %v3405
    %3667 = vmatpush.msra.mxu0 %v3401
    %3668 = vmatpush.msra.mxu0 %v3397
    %3669 = vmatmul.f32.gmra.mxu0 %v3381
    %v3670 = vpop.f32.mrf.mxu0
    %v3671 = vadd.f32 %v3373, %v3670
    %3672 = vmatmul.f32.gmra.mxu0 %v3385
    %v3673 = vpop.f32.mrf.mxu0
    %v3674 = vadd.f32 %v3373, %v3673
    %3675 = vmatmul.f32.gmra.mxu0 %v3389
    %v3676 = vpop.f32.mrf.mxu0
    %v3677 = vadd.f32 %v3373, %v3676
    %3678 = vmatmul.f32.gmra.mxu0 %v3393
    %v3679 = vpop.f32.mrf.mxu0
    %v3680 = vadd.f32 %v3373, %v3679
    %3681 = vdwg.mxu0
    %3682 = vmatpush.msra.mxu0 %v3521
    %3683 = vmatpush.msra.mxu0 %v3517
    %3684 = vmatpush.msra.mxu0 %v3513
    %3685 = vmatpush.msra.mxu0 %v3509
    %3686 = vmatpush.msra.mxu0 %v3505
    %3687 = vmatpush.msra.mxu0 %v3501
    %3688 = vmatpush.msra.mxu0 %v3497
    %3689 = vmatpush.msra.mxu0 %v3493
    %3690 = vmatpush.msra.mxu0 %v3489
    %3691 = vmatpush.msra.mxu0 %v3485
    %3692 = vmatpush.msra.mxu0 %v3481
    %3693 = vmatpush.msra.mxu0 %v3477
    %3694 = vmatpush.msra.mxu0 %v3473
    %3695 = vmatpush.msra.mxu0 %v3469
    %3696 = vmatpush.msra.mxu0 %v3465
    %3697 = vmatpush.msra.mxu0 %v3461
    %3698 = vmatmul.f32.gmra.mxu0 %v3382
    %v3699 = vpop.f32.mrf.mxu0
    %v3700 = vadd.f32 %v3671, %v3699
    %3701 = vmatmul.f32.gmra.mxu0 %v3386
    %v3702 = vpop.f32.mrf.mxu0
    %v3703 = vadd.f32 %v3674, %v3702
    %3704 = vmatmul.f32.gmra.mxu0 %v3390
    %v3705 = vpop.f32.mrf.mxu0
    %v3706 = vadd.f32 %v3677, %v3705
    %3707 = vmatmul.f32.gmra.mxu0 %v3394
    %v3708 = vpop.f32.mrf.mxu0
    %v3709 = vadd.f32 %v3680, %v3708
    %3710 = vdwg.mxu0
    %3711 = vmatpush.msra.mxu0 %v3585
    %3712 = vmatpush.msra.mxu0 %v3581
    %3713 = vmatpush.msra.mxu0 %v3577
    %3714 = vmatpush.msra.mxu0 %v3573
    %3715 = vmatpush.msra.mxu0 %v3569
    %3716 = vmatpush.msra.mxu0 %v3565
    %3717 = vmatpush.msra.mxu0 %v3561
    %3718 = vmatpush.msra.mxu0 %v3557
    %3719 = vmatpush.msra.mxu0 %v3553
    %3720 = vmatpush.msra.mxu0 %v3549
    %3721 = vmatpush.msra.mxu0 %v3545
    %3722 = vmatpush.msra.mxu0 %v3541
    %3723 = vmatpush.msra.mxu0 %v3537
    %3724 = vmatpush.msra.mxu0 %v3533
    %3725 = vmatpush.msra.mxu0 %v3529
    %3726 = vmatpush.msra.mxu0 %v3525
    %3727 = vmatmul.f32.gmra.mxu0 %v3383
    %v3728 = vpop.f32.mrf.mxu0
    %v3729 = vadd.f32 %v3700, %v3728
    %3730 = vmatmul.f32.gmra.mxu0 %v3387
    %v3731 = vpop.f32.mrf.mxu0
    %v3732 = vadd.f32 %v3703, %v3731
    %3733 = vmatmul.f32.gmra.mxu0 %v3391
    %v3734 = vpop.f32.mrf.mxu0
    %v3735 = vadd.f32 %v3706, %v3734
    %3736 = vmatmul.f32.gmra.mxu0 %v3395
    %v3737 = vpop.f32.mrf.mxu0
    %v3738 = vadd.f32 %v3709, %v3737
    %3739 = vdwg.mxu0
    %3740 = vmatpush.msra.mxu0 %v3649
    %3741 = vmatpush.msra.mxu0 %v3645
    %3742 = vmatpush.msra.mxu0 %v3641
    %3743 = vmatpush.msra.mxu0 %v3637
    %3744 = vmatpush.msra.mxu0 %v3633
    %3745 = vmatpush.msra.mxu0 %v3629
    %3746 = vmatpush.msra.mxu0 %v3625
    %3747 = vmatpush.msra.mxu0 %v3621
    %3748 = vmatpush.msra.mxu0 %v3617
    %3749 = vmatpush.msra.mxu0 %v3613
    %3750 = vmatpush.msra.mxu0 %v3609
    %3751 = vmatpush.msra.mxu0 %v3605
    %3752 = vmatpush.msra.mxu0 %v3601
    %3753 = vmatpush.msra.mxu0 %v3597
    %3754 = vmatpush.msra.mxu0 %v3593
    %3755 = vmatpush.msra.mxu0 %v3589
    %3756 = vmatmul.f32.gmra.mxu0 %v3384
    %v3757 = vpop.f32.mrf.mxu0
    %v3758 = vadd.f32 %v3729, %v3757
    %3759 = vmatmul.f32.gmra.mxu0 %v3388
    %v3760 = vpop.f32.mrf.mxu0
    %v3761 = vadd.f32 %v3732, %v3760
    %3762 = vmatmul.f32.gmra.mxu0 %v3392
    %v3763 = vpop.f32.mrf.mxu0
    %v3764 = vadd.f32 %v3735, %v3763
    %3765 = vmatmul.f32.gmra.mxu0 %v3396
    %v3766 = vpop.f32.mrf.mxu0
    %v3767 = vadd.f32 %v3738, %v3766
    %3768 = vdwg.mxu0
    %3769 = vmatpush.msra.mxu0 %v3458
    %3770 = vmatpush.msra.mxu0 %v3454
    %3771 = vmatpush.msra.mxu0 %v3450
    %3772 = vmatpush.msra.mxu0 %v3446
    %3773 = vmatpush.msra.mxu0 %v3442
    %3774 = vmatpush.msra.mxu0 %v3438
    %3775 = vmatpush.msra.mxu0 %v3434
    %3776 = vmatpush.msra.mxu0 %v3430
    %3777 = vmatpush.msra.mxu0 %v3426
    %3778 = vmatpush.msra.mxu0 %v3422
    %3779 = vmatpush.msra.mxu0 %v3418
    %3780 = vmatpush.msra.mxu0 %v3414
    %3781 = vmatpush.msra.mxu0 %v3410
    %3782 = vmatpush.msra.mxu0 %v3406
    %3783 = vmatpush.msra.mxu0 %v3402
    %3784 = vmatpush.msra.mxu0 %v3398
    %3785 = vmatmul.f32.gmra.mxu0 %v3381
    %v3786 = vpop.f32.mrf.mxu0
    %v3787 = vadd.f32 %v3374, %v3786
    %3788 = vmatmul.f32.gmra.mxu0 %v3385
    %v3789 = vpop.f32.mrf.mxu0
    %v3790 = vadd.f32 %v3374, %v3789
    %3791 = vmatmul.f32.gmra.mxu0 %v3389
    %v3792 = vpop.f32.mrf.mxu0
    %v3793 = vadd.f32 %v3374, %v3792
    %3794 = vmatmul.f32.gmra.mxu0 %v3393
    %v3795 = vpop.f32.mrf.mxu0
    %v3796 = vadd.f32 %v3374, %v3795
    %3797 = vdwg.mxu0
    %3798 = vmatpush.msra.mxu0 %v3522
    %3799 = vmatpush.msra.mxu0 %v3518
    %3800 = vmatpush.msra.mxu0 %v3514
    %3801 = vmatpush.msra.mxu0 %v3510
    %3802 = vmatpush.msra.mxu0 %v3506
    %3803 = vmatpush.msra.mxu0 %v3502
    %3804 = vmatpush.msra.mxu0 %v3498
    %3805 = vmatpush.msra.mxu0 %v3494
    %3806 = vmatpush.msra.mxu0 %v3490
    %3807 = vmatpush.msra.mxu0 %v3486
    %3808 = vmatpush.msra.mxu0 %v3482
    %3809 = vmatpush.msra.mxu0 %v3478
    %3810 = vmatpush.msra.mxu0 %v3474
    %3811 = vmatpush.msra.mxu0 %v3470
    %3812 = vmatpush.msra.mxu0 %v3466
    %3813 = vmatpush.msra.mxu0 %v3462
    %3814 = vmatmul.f32.gmra.mxu0 %v3382
    %v3815 = vpop.f32.mrf.mxu0
    %v3816 = vadd.f32 %v3787, %v3815
    %3817 = vmatmul.f32.gmra.mxu0 %v3386
    %v3818 = vpop.f32.mrf.mxu0
    %v3819 = vadd.f32 %v3790, %v3818
    %3820 = vmatmul.f32.gmra.mxu0 %v3390
    %v3821 = vpop.f32.mrf.mxu0
    %v3822 = vadd.f32 %v3793, %v3821
    %3823 = vmatmul.f32.gmra.mxu0 %v3394
    %v3824 = vpop.f32.mrf.mxu0
    %v3825 = vadd.f32 %v3796, %v3824
    %3826 = vdwg.mxu0
    %3827 = vmatpush.msra.mxu0 %v3586
    %3828 = vmatpush.msra.mxu0 %v3582
    %3829 = vmatpush.msra.mxu0 %v3578
    %3830 = vmatpush.msra.mxu0 %v3574
    %3831 = vmatpush.msra.mxu0 %v3570
    %3832 = vmatpush.msra.mxu0 %v3566
    %3833 = vmatpush.msra.mxu0 %v3562
    %3834 = vmatpush.msra.mxu0 %v3558
    %3835 = vmatpush.msra.mxu0 %v3554
    %3836 = vmatpush.msra.mxu0 %v3550
    %3837 = vmatpush.msra.mxu0 %v3546
    %3838 = vmatpush.msra.mxu0 %v3542
    %3839 = vmatpush.msra.mxu0 %v3538
    %3840 = vmatpush.msra.mxu0 %v3534
    %3841 = vmatpush.msra.mxu0 %v3530
    %3842 = vmatpush.msra.mxu0 %v3526
    %3843 = vmatmul.f32.gmra.mxu0 %v3383
    %v3844 = vpop.f32.mrf.mxu0
    %v3845 = vadd.f32 %v3816, %v3844
    %3846 = vmatmul.f32.gmra.mxu0 %v3387
    %v3847 = vpop.f32.mrf.mxu0
    %v3848 = vadd.f32 %v3819, %v3847
    %3849 = vmatmul.f32.gmra.mxu0 %v3391
    %v3850 = vpop.f32.mrf.mxu0
    %v3851 = vadd.f32 %v3822, %v3850
    %3852 = vmatmul.f32.gmra.mxu0 %v3395
    %v3853 = vpop.f32.mrf.mxu0
    %v3854 = vadd.f32 %v3825, %v3853
    %3855 = vdwg.mxu0
    %3856 = vmatpush.msra.mxu0 %v3650
    %3857 = vmatpush.msra.mxu0 %v3646
    %3858 = vmatpush.msra.mxu0 %v3642
    %3859 = vmatpush.msra.mxu0 %v3638
    %3860 = vmatpush.msra.mxu0 %v3634
    %3861 = vmatpush.msra.mxu0 %v3630
    %3862 = vmatpush.msra.mxu0 %v3626
    %3863 = vmatpush.msra.mxu0 %v3622
    %3864 = vmatpush.msra.mxu0 %v3618
    %3865 = vmatpush.msra.mxu0 %v3614
    %3866 = vmatpush.msra.mxu0 %v3610
    %3867 = vmatpush.msra.mxu0 %v3606
    %3868 = vmatpush.msra.mxu0 %v3602
    %3869 = vmatpush.msra.mxu0 %v3598
    %3870 = vmatpush.msra.mxu0 %v3594
    %3871 = vmatpush.msra.mxu0 %v3590
    %3872 = vmatmul.f32.gmra.mxu0 %v3384
    %v3873 = vpop.f32.mrf.mxu0
    %v3874 = vadd.f32 %v3845, %v3873
    %3875 = vmatmul.f32.gmra.mxu0 %v3388
    %v3876 = vpop.f32.mrf.mxu0
    %v3877 = vadd.f32 %v3848, %v3876
    %3878 = vmatmul.f32.gmra.mxu0 %v3392
    %v3879 = vpop.f32.mrf.mxu0
    %v3880 = vadd.f32 %v3851, %v3879
    %3881 = vmatmul.f32.gmra.mxu0 %v3396
    %v3882 = vpop.f32.mrf.mxu0
    %v3883 = vadd.f32 %v3854, %v3882
    %3884 = vdwg.mxu0
    %3885 = vmatpush.msra.mxu0 %v3459
    %3886 = vmatpush.msra.mxu0 %v3455
    %3887 = vmatpush.msra.mxu0 %v3451
    %3888 = vmatpush.msra.mxu0 %v3447
    %3889 = vmatpush.msra.mxu0 %v3443
    %3890 = vmatpush.msra.mxu0 %v3439
    %3891 = vmatpush.msra.mxu0 %v3435
    %3892 = vmatpush.msra.mxu0 %v3431
    %3893 = vmatpush.msra.mxu0 %v3427
    %3894 = vmatpush.msra.mxu0 %v3423
    %3895 = vmatpush.msra.mxu0 %v3419
    %3896 = vmatpush.msra.mxu0 %v3415
    %3897 = vmatpush.msra.mxu0 %v3411
    %3898 = vmatpush.msra.mxu0 %v3407
    %3899 = vmatpush.msra.mxu0 %v3403
    %3900 = vmatpush.msra.mxu0 %v3399
    %3901 = vmatmul.f32.gmra.mxu0 %v3381
    %v3902 = vpop.f32.mrf.mxu0
    %v3903 = vadd.f32 %v3375, %v3902
    %3904 = vmatmul.f32.gmra.mxu0 %v3385
    %v3905 = vpop.f32.mrf.mxu0
    %v3906 = vadd.f32 %v3375, %v3905
    %3907 = vmatmul.f32.gmra.mxu0 %v3389
    %v3908 = vpop.f32.mrf.mxu0
    %v3909 = vadd.f32 %v3375, %v3908
    %3910 = vmatmul.f32.gmra.mxu0 %v3393
    %v3911 = vpop.f32.mrf.mxu0
    %v3912 = vadd.f32 %v3375, %v3911
    %3913 = vdwg.mxu0
    %3914 = vmatpush.msra.mxu0 %v3523
    %3915 = vmatpush.msra.mxu0 %v3519
    %3916 = vmatpush.msra.mxu0 %v3515
    %3917 = vmatpush.msra.mxu0 %v3511
    %3918 = vmatpush.msra.mxu0 %v3507
    %3919 = vmatpush.msra.mxu0 %v3503
    %3920 = vmatpush.msra.mxu0 %v3499
    %3921 = vmatpush.msra.mxu0 %v3495
    %3922 = vmatpush.msra.mxu0 %v3491
    %3923 = vmatpush.msra.mxu0 %v3487
    %3924 = vmatpush.msra.mxu0 %v3483
    %3925 = vmatpush.msra.mxu0 %v3479
    %3926 = vmatpush.msra.mxu0 %v3475
    %3927 = vmatpush.msra.mxu0 %v3471
    %3928 = vmatpush.msra.mxu0 %v3467
    %3929 = vmatpush.msra.mxu0 %v3463
    %3930 = vmatmul.f32.gmra.mxu0 %v3382
    %v3931 = vpop.f32.mrf.mxu0
    %v3932 = vadd.f32 %v3903, %v3931
    %3933 = vmatmul.f32.gmra.mxu0 %v3386
    %v3934 = vpop.f32.mrf.mxu0
    %v3935 = vadd.f32 %v3906, %v3934
    %3936 = vmatmul.f32.gmra.mxu0 %v3390
    %v3937 = vpop.f32.mrf.mxu0
    %v3938 = vadd.f32 %v3909, %v3937
    %3939 = vmatmul.f32.gmra.mxu0 %v3394
    %v3940 = vpop.f32.mrf.mxu0
    %v3941 = vadd.f32 %v3912, %v3940
    %3942 = vdwg.mxu0
    %3943 = vmatpush.msra.mxu0 %v3587
    %3944 = vmatpush.msra.mxu0 %v3583
    %3945 = vmatpush.msra.mxu0 %v3579
    %3946 = vmatpush.msra.mxu0 %v3575
    %3947 = vmatpush.msra.mxu0 %v3571
    %3948 = vmatpush.msra.mxu0 %v3567
    %3949 = vmatpush.msra.mxu0 %v3563
    %3950 = vmatpush.msra.mxu0 %v3559
    %3951 = vmatpush.msra.mxu0 %v3555
    %3952 = vmatpush.msra.mxu0 %v3551
    %3953 = vmatpush.msra.mxu0 %v3547
    %3954 = vmatpush.msra.mxu0 %v3543
    %3955 = vmatpush.msra.mxu0 %v3539
    %3956 = vmatpush.msra.mxu0 %v3535
    %3957 = vmatpush.msra.mxu0 %v3531
    %3958 = vmatpush.msra.mxu0 %v3527
    %3959 = vmatmul.f32.gmra.mxu0 %v3383
    %v3960 = vpop.f32.mrf.mxu0
    %v3961 = vadd.f32 %v3932, %v3960
    %3962 = vmatmul.f32.gmra.mxu0 %v3387
    %v3963 = vpop.f32.mrf.mxu0
    %v3964 = vadd.f32 %v3935, %v3963
    %3965 = vmatmul.f32.gmra.mxu0 %v3391
    %v3966 = vpop.f32.mrf.mxu0
    %v3967 = vadd.f32 %v3938, %v3966
    %3968 = vmatmul.f32.gmra.mxu0 %v3395
    %v3969 = vpop.f32.mrf.mxu0
    %v3970 = vadd.f32 %v3941, %v3969
    %3971 = vdwg.mxu0
    %3972 = vmatpush.msra.mxu0 %v3651
    %3973 = vmatpush.msra.mxu0 %v3647
    %3974 = vmatpush.msra.mxu0 %v3643
    %3975 = vmatpush.msra.mxu0 %v3639
    %3976 = vmatpush.msra.mxu0 %v3635
    %3977 = vmatpush.msra.mxu0 %v3631
    %3978 = vmatpush.msra.mxu0 %v3627
    %3979 = vmatpush.msra.mxu0 %v3623
    %3980 = vmatpush.msra.mxu0 %v3619
    %3981 = vmatpush.msra.mxu0 %v3615
    %3982 = vmatpush.msra.mxu0 %v3611
    %3983 = vmatpush.msra.mxu0 %v3607
    %3984 = vmatpush.msra.mxu0 %v3603
    %3985 = vmatpush.msra.mxu0 %v3599
    %3986 = vmatpush.msra.mxu0 %v3595
    %3987 = vmatpush.msra.mxu0 %v3591
    %3988 = vmatmul.f32.gmra.mxu0 %v3384
    %v3989 = vpop.f32.mrf.mxu0
    %v3990 = vadd.f32 %v3961, %v3989
    %3991 = vmatmul.f32.gmra.mxu0 %v3388
    %v3992 = vpop.f32.mrf.mxu0
    %v3993 = vadd.f32 %v3964, %v3992
    %3994 = vmatmul.f32.gmra.mxu0 %v3392
    %v3995 = vpop.f32.mrf.mxu0
    %v3996 = vadd.f32 %v3967, %v3995
    %3997 = vmatmul.f32.gmra.mxu0 %v3396
    %v3998 = vpop.f32.mrf.mxu0
    %v3999 = vadd.f32 %v3970, %v3998
    %4000 = vdwg.mxu0
    %4001 = vmatpush.msra.mxu0 %v3460
    %4002 = vmatpush.msra.mxu0 %v3456
    %4003 = vmatpush.msra.mxu0 %v3452
    %4004 = vmatpush.msra.mxu0 %v3448
    %4005 = vmatpush.msra.mxu0 %v3444
    %4006 = vmatpush.msra.mxu0 %v3440
    %4007 = vmatpush.msra.mxu0 %v3436
    %4008 = vmatpush.msra.mxu0 %v3432
    %4009 = vmatpush.msra.mxu0 %v3428
    %4010 = vmatpush.msra.mxu0 %v3424
    %4011 = vmatpush.msra.mxu0 %v3420
    %4012 = vmatpush.msra.mxu0 %v3416
    %4013 = vmatpush.msra.mxu0 %v3412
    %4014 = vmatpush.msra.mxu0 %v3408
    %4015 = vmatpush.msra.mxu0 %v3404
    %4016 = vmatpush.msra.mxu0 %v3400
    %4017 = vmatmul.f32.gmra.mxu0 %v3381
    %v4018 = vpop.f32.mrf.mxu0
    %v4019 = vadd.f32 %v3376, %v4018
    %4020 = vmatmul.f32.gmra.mxu0 %v3385
    %v4021 = vpop.f32.mrf.mxu0
    %v4022 = vadd.f32 %v3376, %v4021
    %4023 = vmatmul.f32.gmra.mxu0 %v3389
    %v4024 = vpop.f32.mrf.mxu0
    %v4025 = vadd.f32 %v3376, %v4024
    %4026 = vmatmul.f32.gmra.mxu0 %v3393
    %v4027 = vpop.f32.mrf.mxu0
    %v4028 = vadd.f32 %v3376, %v4027
    %4029 = vdwg.mxu0
    %4030 = vmatpush.msra.mxu0 %v3524
    %4031 = vmatpush.msra.mxu0 %v3520
    %4032 = vmatpush.msra.mxu0 %v3516
    %4033 = vmatpush.msra.mxu0 %v3512
    %4034 = vmatpush.msra.mxu0 %v3508
    %4035 = vmatpush.msra.mxu0 %v3504
    %4036 = vmatpush.msra.mxu0 %v3500
    %4037 = vmatpush.msra.mxu0 %v3496
    %4038 = vmatpush.msra.mxu0 %v3492
    %4039 = vmatpush.msra.mxu0 %v3488
    %4040 = vmatpush.msra.mxu0 %v3484
    %4041 = vmatpush.msra.mxu0 %v3480
    %4042 = vmatpush.msra.mxu0 %v3476
    %4043 = vmatpush.msra.mxu0 %v3472
    %4044 = vmatpush.msra.mxu0 %v3468
    %4045 = vmatpush.msra.mxu0 %v3464
    %4046 = vmatmul.f32.gmra.mxu0 %v3382
    %v4047 = vpop.f32.mrf.mxu0
    %v4048 = vadd.f32 %v4019, %v4047
    %4049 = vmatmul.f32.gmra.mxu0 %v3386
    %v4050 = vpop.f32.mrf.mxu0
    %v4051 = vadd.f32 %v4022, %v4050
    %4052 = vmatmul.f32.gmra.mxu0 %v3390
    %v4053 = vpop.f32.mrf.mxu0
    %v4054 = vadd.f32 %v4025, %v4053
    %4055 = vmatmul.f32.gmra.mxu0 %v3394
    %v4056 = vpop.f32.mrf.mxu0
    %v4057 = vadd.f32 %v4028, %v4056
    %4058 = vdwg.mxu0
    %4059 = vmatpush.msra.mxu0 %v3588
    %4060 = vmatpush.msra.mxu0 %v3584
    %4061 = vmatpush.msra.mxu0 %v3580
    %4062 = vmatpush.msra.mxu0 %v3576
    %4063 = vmatpush.msra.mxu0 %v3572
    %4064 = vmatpush.msra.mxu0 %v3568
    %4065 = vmatpush.msra.mxu0 %v3564
    %4066 = vmatpush.msra.mxu0 %v3560
    %4067 = vmatpush.msra.mxu0 %v3556
    %4068 = vmatpush.msra.mxu0 %v3552
    %4069 = vmatpush.msra.mxu0 %v3548
    %4070 = vmatpush.msra.mxu0 %v3544
    %4071 = vmatpush.msra.mxu0 %v3540
    %4072 = vmatpush.msra.mxu0 %v3536
    %4073 = vmatpush.msra.mxu0 %v3532
    %4074 = vmatpush.msra.mxu0 %v3528
    %4075 = vmatmul.f32.gmra.mxu0 %v3383
    %v4076 = vpop.f32.mrf.mxu0
    %v4077 = vadd.f32 %v4048, %v4076
    %4078 = vmatmul.f32.gmra.mxu0 %v3387
    %v4079 = vpop.f32.mrf.mxu0
    %v4080 = vadd.f32 %v4051, %v4079
    %4081 = vmatmul.f32.gmra.mxu0 %v3391
    %v4082 = vpop.f32.mrf.mxu0
    %v4083 = vadd.f32 %v4054, %v4082
    %4084 = vmatmul.f32.gmra.mxu0 %v3395
    %v4085 = vpop.f32.mrf.mxu0
    %v4086 = vadd.f32 %v4057, %v4085
    %4087 = vdwg.mxu0
    %4088 = vmatpush.msra.mxu0 %v3652
    %4089 = vmatpush.msra.mxu0 %v3648
    %4090 = vmatpush.msra.mxu0 %v3644
    %4091 = vmatpush.msra.mxu0 %v3640
    %4092 = vmatpush.msra.mxu0 %v3636
    %4093 = vmatpush.msra.mxu0 %v3632
    %4094 = vmatpush.msra.mxu0 %v3628
    %4095 = vmatpush.msra.mxu0 %v3624
    %4096 = vmatpush.msra.mxu0 %v3620
    %4097 = vmatpush.msra.mxu0 %v3616
    %4098 = vmatpush.msra.mxu0 %v3612
    %4099 = vmatpush.msra.mxu0 %v3608
    %4100 = vmatpush.msra.mxu0 %v3604
    %4101 = vmatpush.msra.mxu0 %v3600
    %4102 = vmatpush.msra.mxu0 %v3596
    %4103 = vmatpush.msra.mxu0 %v3592
    %4104 = vmatmul.f32.gmra.mxu0 %v3384
    %v4105 = vpop.f32.mrf.mxu0
    %v4106 = vadd.f32 %v4077, %v4105
    %4107 = vmatmul.f32.gmra.mxu0 %v3388
    %v4108 = vpop.f32.mrf.mxu0
    %v4109 = vadd.f32 %v4080, %v4108
    %4110 = vmatmul.f32.gmra.mxu0 %v3392
    %v4111 = vpop.f32.mrf.mxu0
    %v4112 = vadd.f32 %v4083, %v4111
    %4113 = vmatmul.f32.gmra.mxu0 %v3396
    %v4114 = vpop.f32.mrf.mxu0
    %v4115 = vadd.f32 %v4086, %v4114
    %4116 = vdwg.mxu0
    %vm4117 = vcmp.gt.f32.partialorder %v3758, 0.0
    %vm4118 = vcmp.gt.f32.partialorder %v3874, 0.0
    %vm4119 = vcmp.gt.f32.partialorder %v3990, 0.0
    %vm4120 = vcmp.gt.f32.partialorder %v4106, 0.0
    %vm4121 = vcmp.gt.f32.partialorder %v3761, 0.0
    %vm4122 = vcmp.gt.f32.partialorder %v3877, 0.0
    %vm4123 = vcmp.gt.f32.partialorder %v3993, 0.0
    %vm4124 = vcmp.gt.f32.partialorder %v4109, 0.0
    %vm4125 = vcmp.gt.f32.partialorder %v3764, 0.0
    %vm4126 = vcmp.gt.f32.partialorder %v3880, 0.0
    %vm4127 = vcmp.gt.f32.partialorder %v3996, 0.0
    %vm4128 = vcmp.gt.f32.partialorder %v4112, 0.0
    %vm4129 = vcmp.gt.f32.partialorder %v3767, 0.0
    %vm4130 = vcmp.gt.f32.partialorder %v3883, 0.0
    %vm4131 = vcmp.gt.f32.partialorder %v3999, 0.0
    %vm4132 = vcmp.gt.f32.partialorder %v4115, 0.0
    %v4133 = vmin.f32 %v3758, 0.0
    %v4134 = vmin.f32 %v3874, 0.0
    %v4135 = vmin.f32 %v3990, 0.0
    %v4136 = vmin.f32 %v4106, 0.0
    %v4137 = vmin.f32 %v3761, 0.0
    %v4138 = vmin.f32 %v3877, 0.0
    %v4139 = vmin.f32 %v3993, 0.0
    %v4140 = vmin.f32 %v4109, 0.0
    %v4141 = vmin.f32 %v3764, 0.0
    %v4142 = vmin.f32 %v3880, 0.0
    %v4143 = vmin.f32 %v3996, 0.0
    %v4144 = vmin.f32 %v4112, 0.0
    %v4145 = vmin.f32 %v3767, 0.0
    %v4146 = vmin.f32 %v3883, 0.0
    %v4147 = vmin.f32 %v3999, 0.0
    %v4148 = vmin.f32 %v4115, 0.0
    %v4149 = vmul.f32 %v4133, 1.442695
    %v4150 = vpow.pop %v4149
    %v4151 = vmul.f32 %v4134, 1.442695
    %v4152 = vpow.pop %v4151
    %v4153 = vmul.f32 %v4135, 1.442695
    %v4154 = vpow.pop %v4153
    %v4155 = vmul.f32 %v4136, 1.442695
    %v4156 = vpow.pop %v4155
    %v4157 = vmul.f32 %v4137, 1.442695
    %v4158 = vpow.pop %v4157
    %v4159 = vmul.f32 %v4138, 1.442695
    %v4160 = vpow.pop %v4159
    %v4161 = vmul.f32 %v4139, 1.442695
    %v4162 = vpow.pop %v4161
    %v4163 = vmul.f32 %v4140, 1.442695
    %v4164 = vpow.pop %v4163
    %v4165 = vmul.f32 %v4141, 1.442695
    %v4166 = vpow.pop %v4165
    %v4167 = vmul.f32 %v4142, 1.442695
    %v4168 = vpow.pop %v4167
    %v4169 = vmul.f32 %v4143, 1.442695
    %v4170 = vpow.pop %v4169
    %v4171 = vmul.f32 %v4144, 1.442695
    %v4172 = vpow.pop %v4171
    %v4173 = vmul.f32 %v4145, 1.442695
    %v4174 = vpow.pop %v4173
    %v4175 = vmul.f32 %v4146, 1.442695
    %v4176 = vpow.pop %v4175
    %v4177 = vmul.f32 %v4147, 1.442695
    %v4178 = vpow.pop %v4177
    %v4179 = vmul.f32 %v4148, 1.442695
    %v4180 = vpow.pop %v4179
    %v4181 = vsub.f32 %v4150, 1.0
    %v4182 = vsub.f32 %v4152, 1.0
    %v4183 = vsub.f32 %v4154, 1.0
    %v4184 = vsub.f32 %v4156, 1.0
    %v4185 = vsub.f32 %v4158, 1.0
    %v4186 = vsub.f32 %v4160, 1.0
    %v4187 = vsub.f32 %v4162, 1.0
    %v4188 = vsub.f32 %v4164, 1.0
    %v4189 = vsub.f32 %v4166, 1.0
    %v4190 = vsub.f32 %v4168, 1.0
    %v4191 = vsub.f32 %v4170, 1.0
    %v4192 = vsub.f32 %v4172, 1.0
    %v4193 = vsub.f32 %v4174, 1.0
    %v4194 = vsub.f32 %v4176, 1.0
    %v4195 = vsub.f32 %v4178, 1.0
    %v4196 = vsub.f32 %v4180, 1.0
    %v4197 = vsel %vm4117, %v3758, %v4181
    %v4198 = vsel %vm4118, %v3874, %v4182
    %v4199 = vsel %vm4119, %v3990, %v4183
    %v4200 = vsel %vm4120, %v4106, %v4184
    %v4201 = vsel %vm4121, %v3761, %v4185
    %v4202 = vsel %vm4122, %v3877, %v4186
    %v4203 = vsel %vm4123, %v3993, %v4187
    %v4204 = vsel %vm4124, %v4109, %v4188
    %v4205 = vsel %vm4125, %v3764, %v4189
    %v4206 = vsel %vm4126, %v3880, %v4190
    %v4207 = vsel %vm4127, %v3996, %v4191
    %v4208 = vsel %vm4128, %v4112, %v4192
    %v4209 = vsel %vm4129, %v3767, %v4193
    %v4210 = vsel %vm4130, %v3883, %v4194
    %v4211 = vsel %vm4131, %v3999, %v4195
    %v4212 = vsel %vm4132, %v4115, %v4196
    %4213 = vst [vmem:[%s7] sm:$0xff] %v4197
    %4214 = vst [vmem:[%s7 + $0x8] sm:$0xff] %v4198
    %4215 = vst [vmem:[%s7 + $0x10] sm:$0xff] %v4199
    %4216 = vst [vmem:[%s7 + $0x18] sm:$0xff] %v4200
    %4217 = vst [vmem:[%s7 + $0x20] sm:$0xff] %v4201
    %4218 = vst [vmem:[%s7 + $0x28] sm:$0xff] %v4202
    %4219 = vst [vmem:[%s7 + $0x30] sm:$0xff] %v4203
    %4220 = vst [vmem:[%s7 + $0x38] sm:$0xff] %v4204
    %4221 = vst [vmem:[%s7 + $0x40] sm:$0xff] %v4205
    %4222 = vst [vmem:[%s7 + $0x48] sm:$0xff] %v4206
    %4223 = vst [vmem:[%s7 + $0x50] sm:$0xff] %v4207
    %4224 = vst [vmem:[%s7 + $0x58] sm:$0xff] %v4208
    %4225 = vst [vmem:[%s7 + $0x60] sm:$0xff] %v4209
    %4226 = vst [vmem:[%s7 + $0x68] sm:$0xff] %v4210
    %4227 = vst [vmem:[%s7 + $0x70] sm:$0xff] %v4211
    %4228 = vst [vmem:[%s7 + $0x78] sm:$0xff] %v4212
    // Predicated region
    $region38: #{state_embedding_forward.1} parent=1 // pred_check
      _
    $region39: #{state_embedding_forward.1} parent=1 // pred_check_branch
      %4230 = sbr.rel (0) target = $region41
    $region40: #{state_embedding_forward.1} parent=1 // pred_region
      _
    $region41: #{state_embedding_forward.1} parent=1 // pred_fallthru
      _
    // Predicated region
    $region42: #{state_embedding_forward.1} parent=1 // pred_check
      _
    $region43: #{state_embedding_forward.1} parent=1 // pred_check_branch
      %4232 = sbr.rel (0) target = $region45
    $region44: #{state_embedding_forward.1} parent=1 // pred_region
      _
    $region45: #{state_embedding_forward.1} parent=1 // pred_fallthru
      _
    %4233 = vsyncpa [#allocation5], 1
    %4234 = vsyncpa [#allocation7], 1

</llo_original>
